<compile_context>
chip_gen: v6e
topology: v6e:2x2x1
jax: 0.10.0
libtpu: 0.0.40
codegen_flags: <defaults>
</compile_context>

<pallas_src>
import functools

import jax
import jax.numpy as jnp
from jax.experimental import pallas as pl
from jax.experimental.pallas import tpu as pltpu


def _softplus(x):
    # numerically stable softplus = log(1 + exp(x)), computed in f32
    return jnp.maximum(x, 0.0) + jnp.log1p(jnp.exp(-jnp.abs(x)))


def vae_kernel(
    x_ref, eps_ref,
    enc_w1_ref, enc_b1_ref,
    enc_ws_ref, enc_bs_ref,      # fused [mean | logvar] projection
    dec_w1_ref, dec_b1_ref,
    dec_w2_ref, dec_b2_ref,
    recon_ref, mean_ref, logvar_ref,
    *, z_dim,
):
    x = x_ref[...]                                   # (TB, input_dim) bf16
    eps = eps_ref[...].astype(jnp.float32)           # (TB, z_dim)     f32

    # ----- Encoder -----
    h_enc = _softplus(
        jnp.dot(x, enc_w1_ref[...], preferred_element_type=jnp.float32)
        + enc_b1_ref[...]
    )                                                # (TB, hidden) f32

    # single lane-dense matmul for [mean | logvar]
    stats = (
        jnp.dot(h_enc.astype(jnp.bfloat16), enc_ws_ref[...],
                preferred_element_type=jnp.float32)
        + enc_bs_ref[...]
    )                                                # (TB, 2*z) f32
    mean = stats[:, :z_dim]                          # tile-aligned split (z % 128 == 0)
    logvar = stats[:, z_dim:]

    # ----- Reparameterize: z = mean + eps * exp(0.5 * logvar) -----
    z = mean + eps * jnp.exp(0.5 * logvar)           # (TB, z) f32

    # ----- Decoder -----
    h_dec = _softplus(
        jnp.dot(z.astype(jnp.bfloat16), dec_w1_ref[...],
                preferred_element_type=jnp.float32)
        + dec_b1_ref[...]
    )                                                # (TB, hidden) f32
    logits = (
        jnp.dot(h_dec.astype(jnp.bfloat16), dec_w2_ref[...],
                preferred_element_type=jnp.float32)
        + dec_b2_ref[...]
    )                                                # (TB, input_dim) f32
    # exact sigmoid (safe if recon feeds a BCE loss)
    recon = 1.0 / (1.0 + jnp.exp(-logits))

    recon_ref[...] = recon.astype(recon_ref.dtype)   # bf16 store
    mean_ref[...] = mean
    logvar_ref[...] = logvar


def init_vae_params(key, input_dim, hidden_dim, z_dim):
    """Deterministic PyTorch-style init. Weights stored (in, out), bf16;
    biases (1, out), f32. The mean/logvar projections are concatenated."""
    ks = jax.random.split(key, 10)

    def lin(kw, kb, fan_in, fan_out):
        bound = 1.0 / jnp.sqrt(jnp.float32(fan_in))
        w = jax.random.uniform(kw, (fan_in, fan_out), jnp.float32, -bound, bound)
        b = jax.random.uniform(kb, (1, fan_out), jnp.float32, -bound, bound)
        return w, b

    enc_w1, enc_b1 = lin(ks[0], ks[1], input_dim, hidden_dim)
    enc_wm, enc_bm = lin(ks[2], ks[3], hidden_dim, z_dim)
    enc_wl, enc_bl = lin(ks[4], ks[5], hidden_dim, z_dim)
    dec_w1, dec_b1 = lin(ks[6], ks[7], z_dim, hidden_dim)
    dec_w2, dec_b2 = lin(ks[8], ks[9], hidden_dim, input_dim)

    # fuse the two z-projections into one lane-dense matmul
    enc_ws = jnp.concatenate([enc_wm, enc_wl], axis=1)   # (hidden, 2*z)
    enc_bs = jnp.concatenate([enc_bm, enc_bl], axis=1)   # (1, 2*z)

    bf16 = jnp.bfloat16
    return (
        enc_w1.astype(bf16), enc_b1,
        enc_ws.astype(bf16), enc_bs,
        dec_w1.astype(bf16), dec_b1,
        dec_w2.astype(bf16), dec_b2,
    )


def vae_forward(x, eps, params, *, block_b=128):
    B, input_dim = x.shape
    z_dim = eps.shape[1]
    (enc_w1, enc_b1, enc_ws, enc_bs, dec_w1, dec_b1, dec_w2, dec_b2) = params
    hidden_dim = enc_w1.shape[1]

    # tile-aligned in-kernel split of [mean | logvar] and lane-dense outputs
    assert z_dim % 128 == 0, "z_dim must be a multiple of 128"
    assert input_dim % 128 == 0 and hidden_dim % 128 == 0

    tb = min(block_b, B)
    assert B % tb == 0, "batch must be divisible by the batch tile"
    n_tiles = B // tb

    # stream activations in bf16 (cuts DMA bytes on a bandwidth-bound kernel)
    x_bf = x.astype(jnp.bfloat16)
    eps_bf = eps.astype(jnp.bfloat16)

    batch_map = lambda i: (i, 0)   # tiles move with the grid
    const_map = lambda i: (0, 0)   # weights stay VMEM-resident

    in_specs = [
        pl.BlockSpec((tb, input_dim), batch_map),           # x (bf16)
        pl.BlockSpec((tb, z_dim), batch_map),               # eps (bf16)
        pl.BlockSpec((input_dim, hidden_dim), const_map),   # enc_w1
        pl.BlockSpec((1, hidden_dim), const_map),           # enc_b1
        pl.BlockSpec((hidden_dim, 2 * z_dim), const_map),   # enc_ws
        pl.BlockSpec((1, 2 * z_dim), const_map),            # enc_bs
        pl.BlockSpec((z_dim, hidden_dim), const_map),       # dec_w1
        pl.BlockSpec((1, hidden_dim), const_map),           # dec_b1
        pl.BlockSpec((hidden_dim, input_dim), const_map),   # dec_w2
        pl.BlockSpec((1, input_dim), const_map),            # dec_b2
    ]
    out_specs = (
        pl.BlockSpec((tb, input_dim), batch_map),           # reconstruction (bf16)
        pl.BlockSpec((tb, z_dim), batch_map),               # mean (f32)
        pl.BlockSpec((tb, z_dim), batch_map),               # logvar (f32)
    )
    out_shape = (
        jax.ShapeDtypeStruct((B, input_dim), jnp.bfloat16),
        jax.ShapeDtypeStruct((B, z_dim), jnp.float32),
        jax.ShapeDtypeStruct((B, z_dim), jnp.float32),
    )

    # advisory cost estimate for the XLA scheduler
    flops = 2 * B * (input_dim * hidden_dim + hidden_dim * 2 * z_dim
                     + z_dim * hidden_dim + hidden_dim * input_dim)
    transcendentals = B * (4 * hidden_dim + z_dim + input_dim)
    bytes_accessed = (
        x_bf.size * 2 + eps_bf.size * 2
        + sum(int(p.size) * p.dtype.itemsize for p in params)
        + B * input_dim * 2          # recon bf16
        + 2 * B * z_dim * 4          # mean + logvar f32
    )

    recon, mean, logvar = pl.pallas_call(
        functools.partial(vae_kernel, z_dim=z_dim),
        grid=(n_tiles,),
        in_specs=in_specs,
        out_specs=out_specs,
        out_shape=out_shape,
        compiler_params=pltpu.CompilerParams(
            dimension_semantics=("parallel",),     # shard batch tiles across TCs
            vmem_limit_bytes=32 << 20,             # plenty of headroom, fits v7x
        ),
        cost_estimate=pl.CostEstimate(
            flops=flops,
            transcendentals=transcendentals,
            bytes_accessed=bytes_accessed,
        ),
    )(x_bf, eps_bf, enc_w1, enc_b1, enc_ws, enc_bs, dec_w1, dec_b1, dec_w2, dec_b2)

    return recon, mean, logvar


def vae_forward_ref(x, eps, params):
    """Pure-JAX reference mirroring the kernel's bf16 streams / f32 accumulate."""
    (enc_w1, enc_b1, enc_ws, enc_bs, dec_w1, dec_b1, dec_w2, dec_b2) = params

    def mm(a, w, b):
        return jnp.dot(a.astype(jnp.bfloat16), w,
                       preferred_element_type=jnp.float32) + b

    z_dim = eps.shape[1]
    x_bf = x.astype(jnp.bfloat16)
    eps_f = eps.astype(jnp.bfloat16).astype(jnp.float32)
    h = jax.nn.softplus(mm(x_bf, enc_w1, enc_b1))
    stats = mm(h, enc_ws, enc_bs)
    mean, logvar = stats[:, :z_dim], stats[:, z_dim:]
    z = mean + eps_f * jnp.exp(0.5 * logvar)
    hd = jax.nn.softplus(mm(z, dec_w1, dec_b1))
    recon = jax.nn.sigmoid(mm(hd, dec_w2, dec_b2))
    return recon, mean, logvar


if __name__ == "__main__":
    # Small but lane/MXU-friendly shapes consistent with the module's Linear
    # stack (input_dim -> hidden_dim -> z_dim -> hidden_dim -> input_dim).
    # block_b=128 gives 4 grid steps -> >=2 pipelined steps per TC on v7x.
    B, INPUT_DIM, HIDDEN_DIM, Z_DIM = 512, 256, 256, 128

    key = jax.random.PRNGKey(0)
    k_params, k_x, k_eps = jax.random.split(key, 3)

    params = init_vae_params(k_params, INPUT_DIM, HIDDEN_DIM, Z_DIM)
    x = jax.random.normal(k_x, (B, INPUT_DIM), dtype=jnp.float32)
    eps = jax.random.normal(k_eps, (B, Z_DIM), dtype=jnp.float32)

    recon, mean, logvar = vae_forward(x, eps, params, block_b=128)
    jax.block_until_ready((recon, mean, logvar))

    # sanity check against a pure-JAX reference mirroring the bf16 streams;
    # recon is stored in bf16, so allow its quantization step.
    r_ref, m_ref, lv_ref = vae_forward_ref(x, eps, params)
    assert jnp.allclose(mean, m_ref, atol=2e-3, rtol=2e-3)
    assert jnp.allclose(logvar, lv_ref, atol=2e-3, rtol=2e-3)
    assert jnp.allclose(recon.astype(jnp.float32), r_ref, atol=1e-2, rtol=1e-2)

    print("KERNEL_OK")
</pallas_src>

<mosaic_0001>
module attributes {stable_mosaic.version = 11 : i64} {
  func.func @vae_kernel(%arg0: i32, %arg1: memref<128x256xbf16, #tpu.memory_space<vmem>>, %arg2: memref<128x128xbf16, #tpu.memory_space<vmem>>, %arg3: memref<256x256xbf16, #tpu.memory_space<vmem>>, %arg4: memref<1x256xf32, #tpu.memory_space<vmem>>, %arg5: memref<256x256xbf16, #tpu.memory_space<vmem>>, %arg6: memref<1x256xf32, #tpu.memory_space<vmem>>, %arg7: memref<128x256xbf16, #tpu.memory_space<vmem>>, %arg8: memref<1x256xf32, #tpu.memory_space<vmem>>, %arg9: memref<256x256xbf16, #tpu.memory_space<vmem>>, %arg10: memref<1x256xf32, #tpu.memory_space<vmem>>, %arg11: memref<128x256xbf16, #tpu.memory_space<vmem>>, %arg12: memref<128x128xf32, #tpu.memory_space<vmem>>, %arg13: memref<128x128xf32, #tpu.memory_space<vmem>>) attributes {dimension_semantics = [#tpu.dimension_semantics<parallel>], iteration_bounds = array<i64: 4>, scalar_prefetch = 0 : i64, scratch_operands = 0 : i64, tpu.core_type = #tpu.core_type<tc>, window_params = [{transform_indices = @transform_0, window_bounds = array<i64: 128, 256>}, {transform_indices = @transform_1, window_bounds = array<i64: 128, 128>}, {pipeline_mode = #tpu.pipeline_mode<synchronous>, transform_indices = @transform_2, window_bounds = array<i64: 256, 256>}, {pipeline_mode = #tpu.pipeline_mode<synchronous>, transform_indices = @transform_3, window_bounds = array<i64: 1, 256>}, {pipeline_mode = #tpu.pipeline_mode<synchronous>, transform_indices = @transform_4, window_bounds = array<i64: 256, 256>}, {pipeline_mode = #tpu.pipeline_mode<synchronous>, transform_indices = @transform_5, window_bounds = array<i64: 1, 256>}, {pipeline_mode = #tpu.pipeline_mode<synchronous>, transform_indices = @transform_6, window_bounds = array<i64: 128, 256>}, {pipeline_mode = #tpu.pipeline_mode<synchronous>, transform_indices = @transform_7, window_bounds = array<i64: 1, 256>}, {pipeline_mode = #tpu.pipeline_mode<synchronous>, transform_indices = @transform_8, window_bounds = array<i64: 256, 256>}, {pipeline_mode = #tpu.pipeline_mode<synchronous>, transform_indices = @transform_9, window_bounds = array<i64: 1, 256>}, {transform_indices = @transform_10, window_bounds = array<i64: 128, 256>}, {transform_indices = @transform_11, window_bounds = array<i64: 128, 128>}, {transform_indices = @transform_12, window_bounds = array<i64: 128, 128>}]} {
    %c0 = arith.constant 0 : index
    %c0_0 = arith.constant 0 : index
    %0 = vector.load %arg1[%c0, %c0_0] : memref<128x256xbf16, #tpu.memory_space<vmem>>, vector<128x256xbf16>
    %c0_1 = arith.constant 0 : index
    %c0_2 = arith.constant 0 : index
    %1 = vector.load %arg2[%c0_1, %c0_2] : memref<128x128xbf16, #tpu.memory_space<vmem>>, vector<128x128xbf16>
    %2 = arith.extf %1 : vector<128x128xbf16> to vector<128x128xf32>
    %c0_3 = arith.constant 0 : index
    %c0_4 = arith.constant 0 : index
    %3 = vector.load %arg3[%c0_3, %c0_4] : memref<256x256xbf16, #tpu.memory_space<vmem>>, vector<256x256xbf16>
    %cst = arith.constant dense<0.000000e+00> : vector<128x256xf32>
    %4 = tpu.matmul %0, %3, %cst {dimension_numbers = #tpu.dot_dimension_numbers<[1], [0], [0], [1], [0, 0, 1, 1], [], []>} : vector<128x256xbf16>, vector<256x256xbf16>, vector<128x256xf32> -> vector<128x256xf32>
    %c0_5 = arith.constant 0 : index
    %c0_6 = arith.constant 0 : index
    %5 = vector.load %arg4[%c0_5, %c0_6] : memref<1x256xf32, #tpu.memory_space<vmem>>, vector<1x256xf32>
    %6 = vector.broadcast %5 : vector<1x256xf32> to vector<128x256xf32>
    %7 = arith.addf %4, %6 : vector<128x256xf32>
    %cst_7 = arith.constant 0.000000e+00 : f32
    %8 = vector.broadcast %cst_7 : f32 to vector<128x256xf32>
    %9 = arith.maximumf %7, %8 : vector<128x256xf32>
    %10 = math.absf %7 : vector<128x256xf32>
    %cst_8 = arith.constant 0.000000e+00 : f32
    %11 = vector.broadcast %cst_8 : f32 to vector<128x256xf32>
    %12 = arith.subf %11, %10 : vector<128x256xf32>
    %13 = math.exp %12 : vector<128x256xf32>
    %14 = math.log1p %13 : vector<128x256xf32>
    %15 = arith.addf %9, %14 : vector<128x256xf32>
    %16 = arith.truncf %15 : vector<128x256xf32> to vector<128x256xbf16>
    %c0_9 = arith.constant 0 : index
    %c0_10 = arith.constant 0 : index
    %17 = vector.load %arg5[%c0_9, %c0_10] : memref<256x256xbf16, #tpu.memory_space<vmem>>, vector<256x256xbf16>
    %cst_11 = arith.constant dense<0.000000e+00> : vector<128x256xf32>
    %18 = tpu.matmul %16, %17, %cst_11 {dimension_numbers = #tpu.dot_dimension_numbers<[1], [0], [0], [1], [0, 0, 1, 1], [], []>} : vector<128x256xbf16>, vector<256x256xbf16>, vector<128x256xf32> -> vector<128x256xf32>
    %c0_12 = arith.constant 0 : index
    %c0_13 = arith.constant 0 : index
    %19 = vector.load %arg6[%c0_12, %c0_13] : memref<1x256xf32, #tpu.memory_space<vmem>>, vector<1x256xf32>
    %20 = vector.broadcast %19 : vector<1x256xf32> to vector<128x256xf32>
    %21 = arith.addf %18, %20 : vector<128x256xf32>
    %22 = vector.extract_strided_slice %21 {offsets = [0, 0], sizes = [128, 128], strides = [1, 1]} : vector<128x256xf32> to vector<128x128xf32>
    %23 = vector.extract_strided_slice %21 {offsets = [0, 128], sizes = [128, 128], strides = [1, 1]} : vector<128x256xf32> to vector<128x128xf32>
    %cst_14 = arith.constant 5.000000e-01 : f32
    %24 = vector.broadcast %cst_14 : f32 to vector<128x128xf32>
    %25 = arith.mulf %24, %23 : vector<128x128xf32>
    %26 = math.exp %25 : vector<128x128xf32>
    %27 = arith.mulf %2, %26 : vector<128x128xf32>
    %28 = arith.addf %22, %27 : vector<128x128xf32>
    %29 = arith.truncf %28 : vector<128x128xf32> to vector<128x128xbf16>
    %c0_15 = arith.constant 0 : index
    %c0_16 = arith.constant 0 : index
    %30 = vector.load %arg7[%c0_15, %c0_16] : memref<128x256xbf16, #tpu.memory_space<vmem>>, vector<128x256xbf16>
    %cst_17 = arith.constant dense<0.000000e+00> : vector<128x256xf32>
    %31 = tpu.matmul %29, %30, %cst_17 {dimension_numbers = #tpu.dot_dimension_numbers<[1], [0], [0], [1], [0, 0, 1, 1], [], []>} : vector<128x128xbf16>, vector<128x256xbf16>, vector<128x256xf32> -> vector<128x256xf32>
    %c0_18 = arith.constant 0 : index
    %c0_19 = arith.constant 0 : index
    %32 = vector.load %arg8[%c0_18, %c0_19] : memref<1x256xf32, #tpu.memory_space<vmem>>, vector<1x256xf32>
    %33 = vector.broadcast %32 : vector<1x256xf32> to vector<128x256xf32>
    %34 = arith.addf %31, %33 : vector<128x256xf32>
    %cst_20 = arith.constant 0.000000e+00 : f32
    %35 = vector.broadcast %cst_20 : f32 to vector<128x256xf32>
    %36 = arith.maximumf %34, %35 : vector<128x256xf32>
    %37 = math.absf %34 : vector<128x256xf32>
    %cst_21 = arith.constant 0.000000e+00 : f32
    %38 = vector.broadcast %cst_21 : f32 to vector<128x256xf32>
    %39 = arith.subf %38, %37 : vector<128x256xf32>
    %40 = math.exp %39 : vector<128x256xf32>
    %41 = math.log1p %40 : vector<128x256xf32>
    %42 = arith.addf %36, %41 : vector<128x256xf32>
    %43 = arith.truncf %42 : vector<128x256xf32> to vector<128x256xbf16>
    %c0_22 = arith.constant 0 : index
    %c0_23 = arith.constant 0 : index
    %44 = vector.load %arg9[%c0_22, %c0_23] : memref<256x256xbf16, #tpu.memory_space<vmem>>, vector<256x256xbf16>
    %cst_24 = arith.constant dense<0.000000e+00> : vector<128x256xf32>
    %45 = tpu.matmul %43, %44, %cst_24 {dimension_numbers = #tpu.dot_dimension_numbers<[1], [0], [0], [1], [0, 0, 1, 1], [], []>} : vector<128x256xbf16>, vector<256x256xbf16>, vector<128x256xf32> -> vector<128x256xf32>
    %c0_25 = arith.constant 0 : index
    %c0_26 = arith.constant 0 : index
    %46 = vector.load %arg10[%c0_25, %c0_26] : memref<1x256xf32, #tpu.memory_space<vmem>>, vector<1x256xf32>
    %47 = vector.broadcast %46 : vector<1x256xf32> to vector<128x256xf32>
    %48 = arith.addf %45, %47 : vector<128x256xf32>
    %cst_27 = arith.constant 0.000000e+00 : f32
    %49 = vector.broadcast %cst_27 : f32 to vector<128x256xf32>
    %50 = arith.subf %49, %48 : vector<128x256xf32>
    %51 = math.exp %50 : vector<128x256xf32>
    %cst_28 = arith.constant 1.000000e+00 : f32
    %52 = vector.broadcast %cst_28 : f32 to vector<128x256xf32>
    %53 = arith.addf %52, %51 : vector<128x256xf32>
    %cst_29 = arith.constant 1.000000e+00 : f32
    %54 = vector.broadcast %cst_29 : f32 to vector<128x256xf32>
    %55 = arith.divf %54, %53 : vector<128x256xf32>
    %56 = arith.truncf %55 : vector<128x256xf32> to vector<128x256xbf16>
    %c0_30 = arith.constant 0 : index
    %c0_31 = arith.constant 0 : index
    %57 = vector.load %arg11[%c0_30, %c0_31] : memref<128x256xbf16, #tpu.memory_space<vmem>>, vector<128x256xbf16>
    tpu.vector_store %arg11[%c0_30, %c0_31], %56 {strides = array<i32>} : memref<128x256xbf16, #tpu.memory_space<vmem>>, vector<128x256xbf16>,
    %c0_32 = arith.constant 0 : index
    %c0_33 = arith.constant 0 : index
    %58 = vector.load %arg12[%c0_32, %c0_33] : memref<128x128xf32, #tpu.memory_space<vmem>>, vector<128x128xf32>
    tpu.vector_store %arg12[%c0_32, %c0_33], %22 {strides = array<i32>} : memref<128x128xf32, #tpu.memory_space<vmem>>, vector<128x128xf32>,
    %c0_34 = arith.constant 0 : index
    %c0_35 = arith.constant 0 : index
    %59 = vector.load %arg13[%c0_34, %c0_35] : memref<128x128xf32, #tpu.memory_space<vmem>>, vector<128x128xf32>
    tpu.vector_store %arg13[%c0_34, %c0_35], %23 {strides = array<i32>} : memref<128x128xf32, #tpu.memory_space<vmem>>, vector<128x128xf32>,
    return
  }
  func.func @transform_0(%arg0: i32) -> (i32, i32) {
    %c0_i32 = arith.constant 0 : i32
    %c0_i32_0 = arith.constant 0 : i32
    return %arg0, %c0_i32 : i32, i32
  }
  func.func @transform_1(%arg0: i32) -> (i32, i32) {
    %c0_i32 = arith.constant 0 : i32
    %c0_i32_0 = arith.constant 0 : i32
    return %arg0, %c0_i32 : i32, i32
  }
  func.func @transform_2(%arg0: i32) -> (i32, i32) {
    %c0_i32 = arith.constant 0 : i32
    %c0_i32_0 = arith.constant 0 : i32
    %c0_i32_1 = arith.constant 0 : i32
    return %c0_i32, %c0_i32_0 : i32, i32
  }
  func.func @transform_3(%arg0: i32) -> (i32, i32) {
    %c0_i32 = arith.constant 0 : i32
    %c0_i32_0 = arith.constant 0 : i32
    %c0_i32_1 = arith.constant 0 : i32
    return %c0_i32, %c0_i32_0 : i32, i32
  }
  func.func @transform_4(%arg0: i32) -> (i32, i32) {
    %c0_i32 = arith.constant 0 : i32
    %c0_i32_0 = arith.constant 0 : i32
    %c0_i32_1 = arith.constant 0 : i32
    return %c0_i32, %c0_i32_0 : i32, i32
  }
  func.func @transform_5(%arg0: i32) -> (i32, i32) {
    %c0_i32 = arith.constant 0 : i32
    %c0_i32_0 = arith.constant 0 : i32
    %c0_i32_1 = arith.constant 0 : i32
    return %c0_i32, %c0_i32_0 : i32, i32
  }
  func.func @transform_6(%arg0: i32) -> (i32, i32) {
    %c0_i32 = arith.constant 0 : i32
    %c0_i32_0 = arith.constant 0 : i32
    %c0_i32_1 = arith.constant 0 : i32
    return %c0_i32, %c0_i32_0 : i32, i32
  }
  func.func @transform_7(%arg0: i32) -> (i32, i32) {
    %c0_i32 = arith.constant 0 : i32
    %c0_i32_0 = arith.constant 0 : i32
    %c0_i32_1 = arith.constant 0 : i32
    return %c0_i32, %c0_i32_0 : i32, i32
  }
  func.func @transform_8(%arg0: i32) -> (i32, i32) {
    %c0_i32 = arith.constant 0 : i32
    %c0_i32_0 = arith.constant 0 : i32
    %c0_i32_1 = arith.constant 0 : i32
    return %c0_i32, %c0_i32_0 : i32, i32
  }
  func.func @transform_9(%arg0: i32) -> (i32, i32) {
    %c0_i32 = arith.constant 0 : i32
    %c0_i32_0 = arith.constant 0 : i32
    %c0_i32_1 = arith.constant 0 : i32
    return %c0_i32, %c0_i32_0 : i32, i32
  }
  func.func @transform_10(%arg0: i32) -> (i32, i32) {
    %c0_i32 = arith.constant 0 : i32
    %c0_i32_0 = arith.constant 0 : i32
    return %arg0, %c0_i32 : i32, i32
  }
  func.func @transform_11(%arg0: i32) -> (i32, i32) {
    %c0_i32 = arith.constant 0 : i32
    %c0_i32_0 = arith.constant 0 : i32
    return %arg0, %c0_i32 : i32, i32
  }
  func.func @transform_12(%arg0: i32) -> (i32, i32) {
    %c0_i32 = arith.constant 0 : i32
    %c0_i32_0 = arith.constant 0 : i32
    return %arg0, %c0_i32 : i32, i32
  }
}

</mosaic_0001>

<llo_original>
// kernel: tpu_custom_call.1
$region0: #{tpu_custom_call.1}
  #allocation0 [shape = 'u32[]', space=smem, size = 0x4, offset = 0x4, fixed_abs, tag = 'smem constant byte address 0x4 - core index']
  #allocation1 [shape = 'u32[144,128]{1,0:T(1,128)}', space=vmem, size = 0x12000, scoped, tag = 'internal scratch']
  %s0 = inlined_call_operand.hbm [shape: bf16[512,256], index: 0, kind: input, shape index: {}]
  %s1 = inlined_call_operand.hbm [shape: bf16[512,128], index: 1, kind: input, shape index: {}]
  %s2 = inlined_call_operand.hbm [shape: bf16[256,256], index: 2, kind: input, shape index: {}]
  %s3 = inlined_call_operand.vmem [shape: f32[1,256], index: 3, kind: input, shape index: {}]
  %s4 = inlined_call_operand.hbm [shape: bf16[256,256], index: 4, kind: input, shape index: {}]
  %s5 = inlined_call_operand.vmem [shape: f32[1,256], index: 5, kind: input, shape index: {}]
  %s6 = inlined_call_operand.hbm [shape: bf16[128,256], index: 6, kind: input, shape index: {}]
  %s7 = inlined_call_operand.vmem [shape: f32[1,256], index: 7, kind: input, shape index: {}]
  %s8 = inlined_call_operand.hbm [shape: bf16[256,256], index: 8, kind: input, shape index: {}]
  %s9 = inlined_call_operand.vmem [shape: f32[1,256], index: 9, kind: input, shape index: {}]
  %s10 = inlined_call_operand.hbm [shape: bf16[512,256], index: 10, kind: output, shape index: {0}]
  %s11 = inlined_call_operand.hbm [shape: f32[512,128], index: 11, kind: output, shape index: {1}]
  %s12 = inlined_call_operand.hbm [shape: f32[512,128], index: 12, kind: output, shape index: {2}]
  %13 = xla_tuple %s10, %s11, %s12
  %s14 = sld [smem:[#allocation0]]
  $region113: #{tpu_custom_call.1} parent=0
    _
  %s16 = ssub.s32 1, %s14
  %s17 = scalar_select 0, %s16, %s14
  $region1: #{tpu_custom_call.1} parent=0
    #allocation2 [shape = 'u8[131072]{0}', space=vmem, size = 0x20000, scoped, tag = 'input window, operand 0']
    #allocation3 [shape = 's32[2]{0}', space=sflag, size = 0x8, scoped, tag = 'scoped memory for tpu_custom_call.1']
    #allocation4 [shape = 's32[2]{0}', space=sflag, size = 0x8, scoped, tag = 'scoped memory for tpu_custom_call.1']
    #allocation5 [shape = 'u8[65536]{0}', space=vmem, size = 0x10000, scoped, tag = 'input window, operand 1']
    #allocation6 [shape = 's32[2]{0}', space=sflag, size = 0x8, scoped, tag = 'scoped memory for tpu_custom_call.1']
    #allocation7 [shape = 'u8[131072]{0}', space=vmem, size = 0x20000, scoped, tag = 'input window, operand 2, single buffered']
    #allocation8 [shape = 'u8[131072]{0}', space=vmem, size = 0x20000, scoped, tag = 'input window, operand 4, single buffered']
    #allocation9 [shape = 's32[1]{0}', space=sflag, size = 0x4, scoped, tag = 'scoped memory for tpu_custom_call.1']
    #allocation10 [shape = 'u8[65536]{0}', space=vmem, size = 0x10000, scoped, tag = 'input window, operand 6, single buffered']
    #allocation11 [shape = 'u8[131072]{0}', space=vmem, size = 0x20000, scoped, tag = 'input window, operand 8, single buffered']
    #allocation12 [shape = 's32[1]{0}', space=sflag, size = 0x4, scoped, tag = 'scoped memory for tpu_custom_call.1']
    #allocation13 [shape = 'u8[131072]{0}', space=vmem, size = 0x20000, scoped, tag = 'output window, operand 0']
    #allocation14 [shape = 'u8[131072]{0}', space=vmem, size = 0x20000, scoped, tag = 'output window, operand 1']
    #allocation15 [shape = 's32[2]{0}', space=sflag, size = 0x8, scoped, tag = 'scoped memory for tpu_custom_call.1']
    #allocation16 [shape = 'u8[131072]{0}', space=vmem, size = 0x20000, scoped, tag = 'output window, operand 2']
    %18 = vsyncpa [#allocation3], 0
    %s19 = scalar_lea.sflag [#allocation3], 1
    %20 = vsyncpa %s19, 0
    %21 = vsyncpa [#allocation6], 0
    %s22 = scalar_lea.sflag [#allocation6], 1
    %23 = vsyncpa %s22, 0
    %24 = vsyncpa [#allocation9], 0
    %25 = vsyncpa [#allocation12], 0
    %26 = vsyncpa [#allocation4], 0
    %s27 = scalar_lea.sflag [#allocation4], 1
    %28 = vsyncpa %s27, 0
    %29 = vsyncpa [#allocation15], 0
    %s30 = scalar_lea.sflag [#allocation15], 1
    %31 = vsyncpa %s30, 0
    loop: start=0, step=1, limit=6
    $region2: #{tpu_custom_call.1} parent=1 // loop_pre_header
      _
    $region3: #{tpu_custom_call.1} parent=1 // loop_header
      %s33 = sphi 0, %s37
      %p34 = scmp.ge.s32.totalorder %s33, 6
      %s43 = sphi 0, %s45
      %s46 = sphi 0, %s43
      %s47 = sphi 0, %s46
      %s63 = sphi 0, %s47
      %s69 = sphi 0, %s71
      %s72 = sphi 0, %s69
      %s73 = sphi 0, %s72
      %s89 = sphi 0, %s73
      %s93 = sphi 0, %s93
      %s95 = sphi 0, %s93
      %s96 = sphi 0, %s95
      %s110 = sphi 0, %s96
      %s114 = sphi 0, %s114
      %s116 = sphi 0, %s114
      %s117 = sphi 0, %s116
      %s131 = sphi 0, %s117
      %s135 = sphi 0, %s135
      %s137 = sphi 0, %s135
      %s138 = sphi 0, %s137
      %s152 = sphi 0, %s138
      %s156 = sphi 0, %s156
      %s158 = sphi 0, %s156
      %s159 = sphi 0, %s158
      %s173 = sphi 0, %s159
      %s177 = sphi 0, %s177
      %s179 = sphi 0, %s177
      %s180 = sphi 0, %s179
      %s194 = sphi 0, %s180
      %s198 = sphi 0, %s198
      %s200 = sphi 0, %s198
      %s201 = sphi 0, %s200
      %s215 = sphi 0, %s201
      %s219 = sphi 0, %s219
      %s221 = sphi 0, %s219
      %s222 = sphi 0, %s221
      %s236 = sphi 0, %s222
      %s240 = sphi 0, %s240
      %s242 = sphi 0, %s240
      %s243 = sphi 0, %s242
      %s257 = sphi 0, %s243
      %s263 = sphi 0, %s265
      %s266 = sphi 0, %s263
      %s267 = sphi 0, %s266
      %s283 = sphi 0, %s267
      %s289 = sphi 0, %s291
      %s292 = sphi 0, %s289
      %s293 = sphi 0, %s292
      %s309 = sphi 0, %s293
      %s315 = sphi 0, %s317
      %s318 = sphi 0, %s315
      %s319 = sphi 0, %s318
      %s335 = sphi 0, %s319
    $region4: #{tpu_custom_call.1} parent=1 // loop_header_branch
      %36 = sbr.rel (%p34) target = $region8
    $region5: #{tpu_custom_call.1} parent=1 // loop_body
      %s38 = ssub.s32 %s33, 1
      %s39 = ssub.s32 %s33, 2
      %s40 = sadd.s32 %s33, 1
      %s41 = ssub.s32 %s33, %s40
      %p42 = scmp.eq.s32.totalorder %s41, 0
      %s44 = sadd.s32 %s43, 1
      %s45 = scalar_select %p42, %s43, %s44
      %p48 = pneg %p42
      %p49 = scmp.eq.s32.totalorder %s33, 3
      %p50 = por %p48, %p49
      %p51 = scmp.ne.s32.totalorder %s43, %s46
      %p52 = scmp.eq.s32.totalorder %s33, 0
      %p53 = por %p51, %p52
      %p54 = scmp.ne.s32.totalorder %s43, %s46
      %p55 = scmp.eq.s32.totalorder %s38, 3
      %p56 = por %p54, %p55
      %p57 = scmp.ne.s32.totalorder %s46, %s47
      %p58 = scmp.eq.s32.totalorder %s38, 0
      %p59 = por %p57, %p58
      %p60 = scmp.ne.s32.totalorder %s46, %s47
      %p61 = scmp.eq.s32.totalorder %s39, 3
      %p62 = por %p60, %p61
      %p64 = scmp.ne.s32.totalorder %s47, %s63
      %p65 = scmp.eq.s32.totalorder %s39, 0
      %p66 = por %p64, %p65
      %s67 = ssub.s32 %s33, %s40
      %p68 = scmp.eq.s32.totalorder %s67, 0
      %s70 = sadd.s32 %s69, 1
      %s71 = scalar_select %p68, %s69, %s70
      %p74 = pneg %p68
      %p75 = scmp.eq.s32.totalorder %s33, 3
      %p76 = por %p74, %p75
      %p77 = scmp.ne.s32.totalorder %s69, %s72
      %p78 = scmp.eq.s32.totalorder %s33, 0
      %p79 = por %p77, %p78
      %p80 = scmp.ne.s32.totalorder %s69, %s72
      %p81 = scmp.eq.s32.totalorder %s38, 3
      %p82 = por %p80, %p81
      %p83 = scmp.ne.s32.totalorder %s72, %s73
      %p84 = scmp.eq.s32.totalorder %s38, 0
      %p85 = por %p83, %p84
      %p86 = scmp.ne.s32.totalorder %s72, %s73
      %p87 = scmp.eq.s32.totalorder %s39, 3
      %p88 = por %p86, %p87
      %p90 = scmp.ne.s32.totalorder %s73, %s89
      %p91 = scmp.eq.s32.totalorder %s39, 0
      %p92 = por %p90, %p91
      %s94 = sadd.s32 %s93, 1
      %p97 = scmp.eq.s32.totalorder %s33, 3
      %p98 = scmp.ne.s32.totalorder %s93, %s95
      %p99 = scmp.eq.s32.totalorder %s33, 0
      %p100 = por %p98, %p99
      %p101 = scmp.ne.s32.totalorder %s93, %s95
      %p102 = scmp.eq.s32.totalorder %s38, 3
      %p103 = por %p101, %p102
      %p104 = scmp.ne.s32.totalorder %s95, %s96
      %p105 = scmp.eq.s32.totalorder %s38, 0
      %p106 = por %p104, %p105
      %p107 = scmp.ne.s32.totalorder %s95, %s96
      %p108 = scmp.eq.s32.totalorder %s39, 3
      %p109 = por %p107, %p108
      %p111 = scmp.ne.s32.totalorder %s96, %s110
      %p112 = scmp.eq.s32.totalorder %s39, 0
      %p113 = por %p111, %p112
      %s115 = sadd.s32 %s114, 1
      %p118 = scmp.eq.s32.totalorder %s33, 3
      %p119 = scmp.ne.s32.totalorder %s114, %s116
      %p120 = scmp.eq.s32.totalorder %s33, 0
      %p121 = por %p119, %p120
      %p122 = scmp.ne.s32.totalorder %s114, %s116
      %p123 = scmp.eq.s32.totalorder %s38, 3
      %p124 = por %p122, %p123
      %p125 = scmp.ne.s32.totalorder %s116, %s117
      %p126 = scmp.eq.s32.totalorder %s38, 0
      %p127 = por %p125, %p126
      %p128 = scmp.ne.s32.totalorder %s116, %s117
      %p129 = scmp.eq.s32.totalorder %s39, 3
      %p130 = por %p128, %p129
      %p132 = scmp.ne.s32.totalorder %s117, %s131
      %p133 = scmp.eq.s32.totalorder %s39, 0
      %p134 = por %p132, %p133
      %s136 = sadd.s32 %s135, 1
      %p139 = scmp.eq.s32.totalorder %s33, 3
      %p140 = scmp.ne.s32.totalorder %s135, %s137
      %p141 = scmp.eq.s32.totalorder %s33, 0
      %p142 = por %p140, %p141
      %p143 = scmp.ne.s32.totalorder %s135, %s137
      %p144 = scmp.eq.s32.totalorder %s38, 3
      %p145 = por %p143, %p144
      %p146 = scmp.ne.s32.totalorder %s137, %s138
      %p147 = scmp.eq.s32.totalorder %s38, 0
      %p148 = por %p146, %p147
      %p149 = scmp.ne.s32.totalorder %s137, %s138
      %p150 = scmp.eq.s32.totalorder %s39, 3
      %p151 = por %p149, %p150
      %p153 = scmp.ne.s32.totalorder %s138, %s152
      %p154 = scmp.eq.s32.totalorder %s39, 0
      %p155 = por %p153, %p154
      %s157 = sadd.s32 %s156, 1
      %p160 = scmp.eq.s32.totalorder %s33, 3
      %p161 = scmp.ne.s32.totalorder %s156, %s158
      %p162 = scmp.eq.s32.totalorder %s33, 0
      %p163 = por %p161, %p162
      %p164 = scmp.ne.s32.totalorder %s156, %s158
      %p165 = scmp.eq.s32.totalorder %s38, 3
      %p166 = por %p164, %p165
      %p167 = scmp.ne.s32.totalorder %s158, %s159
      %p168 = scmp.eq.s32.totalorder %s38, 0
      %p169 = por %p167, %p168
      %p170 = scmp.ne.s32.totalorder %s158, %s159
      %p171 = scmp.eq.s32.totalorder %s39, 3
      %p172 = por %p170, %p171
      %p174 = scmp.ne.s32.totalorder %s159, %s173
      %p175 = scmp.eq.s32.totalorder %s39, 0
      %p176 = por %p174, %p175
      %s178 = sadd.s32 %s177, 1
      %p181 = scmp.eq.s32.totalorder %s33, 3
      %p182 = scmp.ne.s32.totalorder %s177, %s179
      %p183 = scmp.eq.s32.totalorder %s33, 0
      %p184 = por %p182, %p183
      %p185 = scmp.ne.s32.totalorder %s177, %s179
      %p186 = scmp.eq.s32.totalorder %s38, 3
      %p187 = por %p185, %p186
      %p188 = scmp.ne.s32.totalorder %s179, %s180
      %p189 = scmp.eq.s32.totalorder %s38, 0
      %p190 = por %p188, %p189
      %p191 = scmp.ne.s32.totalorder %s179, %s180
      %p192 = scmp.eq.s32.totalorder %s39, 3
      %p193 = por %p191, %p192
      %p195 = scmp.ne.s32.totalorder %s180, %s194
      %p196 = scmp.eq.s32.totalorder %s39, 0
      %p197 = por %p195, %p196
      %s199 = sadd.s32 %s198, 1
      %p202 = scmp.eq.s32.totalorder %s33, 3
      %p203 = scmp.ne.s32.totalorder %s198, %s200
      %p204 = scmp.eq.s32.totalorder %s33, 0
      %p205 = por %p203, %p204
      %p206 = scmp.ne.s32.totalorder %s198, %s200
      %p207 = scmp.eq.s32.totalorder %s38, 3
      %p208 = por %p206, %p207
      %p209 = scmp.ne.s32.totalorder %s200, %s201
      %p210 = scmp.eq.s32.totalorder %s38, 0
      %p211 = por %p209, %p210
      %p212 = scmp.ne.s32.totalorder %s200, %s201
      %p213 = scmp.eq.s32.totalorder %s39, 3
      %p214 = por %p212, %p213
      %p216 = scmp.ne.s32.totalorder %s201, %s215
      %p217 = scmp.eq.s32.totalorder %s39, 0
      %p218 = por %p216, %p217
      %s220 = sadd.s32 %s219, 1
      %p223 = scmp.eq.s32.totalorder %s33, 3
      %p224 = scmp.ne.s32.totalorder %s219, %s221
      %p225 = scmp.eq.s32.totalorder %s33, 0
      %p226 = por %p224, %p225
      %p227 = scmp.ne.s32.totalorder %s219, %s221
      %p228 = scmp.eq.s32.totalorder %s38, 3
      %p229 = por %p227, %p228
      %p230 = scmp.ne.s32.totalorder %s221, %s222
      %p231 = scmp.eq.s32.totalorder %s38, 0
      %p232 = por %p230, %p231
      %p233 = scmp.ne.s32.totalorder %s221, %s222
      %p234 = scmp.eq.s32.totalorder %s39, 3
      %p235 = por %p233, %p234
      %p237 = scmp.ne.s32.totalorder %s222, %s236
      %p238 = scmp.eq.s32.totalorder %s39, 0
      %p239 = por %p237, %p238
      %s241 = sadd.s32 %s240, 1
      %p244 = scmp.eq.s32.totalorder %s33, 3
      %p245 = scmp.ne.s32.totalorder %s240, %s242
      %p246 = scmp.eq.s32.totalorder %s33, 0
      %p247 = por %p245, %p246
      %p248 = scmp.ne.s32.totalorder %s240, %s242
      %p249 = scmp.eq.s32.totalorder %s38, 3
      %p250 = por %p248, %p249
      %p251 = scmp.ne.s32.totalorder %s242, %s243
      %p252 = scmp.eq.s32.totalorder %s38, 0
      %p253 = por %p251, %p252
      %p254 = scmp.ne.s32.totalorder %s242, %s243
      %p255 = scmp.eq.s32.totalorder %s39, 3
      %p256 = por %p254, %p255
      %p258 = scmp.ne.s32.totalorder %s243, %s257
      %p259 = scmp.eq.s32.totalorder %s39, 0
      %p260 = por %p258, %p259
      %s261 = ssub.s32 %s33, %s40
      %p262 = scmp.eq.s32.totalorder %s261, 0
      %s264 = sadd.s32 %s263, 1
      %s265 = scalar_select %p262, %s263, %s264
      %p268 = pneg %p262
      %p269 = scmp.eq.s32.totalorder %s33, 3
      %p270 = por %p268, %p269
      %p271 = scmp.ne.s32.totalorder %s263, %s266
      %p272 = scmp.eq.s32.totalorder %s33, 0
      %p273 = por %p271, %p272
      %p274 = scmp.ne.s32.totalorder %s263, %s266
      %p275 = scmp.eq.s32.totalorder %s38, 3
      %p276 = por %p274, %p275
      %p277 = scmp.ne.s32.totalorder %s266, %s267
      %p278 = scmp.eq.s32.totalorder %s38, 0
      %p279 = por %p277, %p278
      %p280 = scmp.ne.s32.totalorder %s266, %s267
      %p281 = scmp.eq.s32.totalorder %s39, 3
      %p282 = por %p280, %p281
      %p284 = scmp.ne.s32.totalorder %s267, %s283
      %p285 = scmp.eq.s32.totalorder %s39, 0
      %p286 = por %p284, %p285
      %s287 = ssub.s32 %s33, %s40
      %p288 = scmp.eq.s32.totalorder %s287, 0
      %s290 = sadd.s32 %s289, 1
      %s291 = scalar_select %p288, %s289, %s290
      %p294 = pneg %p288
      %p295 = scmp.eq.s32.totalorder %s33, 3
      %p296 = por %p294, %p295
      %p297 = scmp.ne.s32.totalorder %s289, %s292
      %p298 = scmp.eq.s32.totalorder %s33, 0
      %p299 = por %p297, %p298
      %p300 = scmp.ne.s32.totalorder %s289, %s292
      %p301 = scmp.eq.s32.totalorder %s38, 3
      %p302 = por %p300, %p301
      %p303 = scmp.ne.s32.totalorder %s292, %s293
      %p304 = scmp.eq.s32.totalorder %s38, 0
      %p305 = por %p303, %p304
      %p306 = scmp.ne.s32.totalorder %s292, %s293
      %p307 = scmp.eq.s32.totalorder %s39, 3
      %p308 = por %p306, %p307
      %p310 = scmp.ne.s32.totalorder %s293, %s309
      %p311 = scmp.eq.s32.totalorder %s39, 0
      %p312 = por %p310, %p311
      %s313 = ssub.s32 %s33, %s40
      %p314 = scmp.eq.s32.totalorder %s313, 0
      %s316 = sadd.s32 %s315, 1
      %s317 = scalar_select %p314, %s315, %s316
      %p320 = pneg %p314
      %p321 = scmp.eq.s32.totalorder %s33, 3
      %p322 = por %p320, %p321
      %p323 = scmp.ne.s32.totalorder %s315, %s318
      %p324 = scmp.eq.s32.totalorder %s33, 0
      %p325 = por %p323, %p324
      %p326 = scmp.ne.s32.totalorder %s315, %s318
      %p327 = scmp.eq.s32.totalorder %s38, 3
      %p328 = por %p326, %p327
      %p329 = scmp.ne.s32.totalorder %s318, %s319
      %p330 = scmp.eq.s32.totalorder %s38, 0
      %p331 = por %p329, %p330
      %p332 = scmp.ne.s32.totalorder %s318, %s319
      %p333 = scmp.eq.s32.totalorder %s39, 3
      %p334 = por %p332, %p333
      %p336 = scmp.ne.s32.totalorder %s319, %s335
      %p337 = scmp.eq.s32.totalorder %s39, 0
      %p338 = por %p336, %p337
      %p339 = scmp.le.s32.totalorder 1, %s33
      %p340 = scmp.lt.s32.totalorder %s33, 5
      %p341 = pnand %p339, %p340
      %p342 = pneg %p341
      // Predicated region
      $region9: #{tpu_custom_call.1} parent=5 // pred_check
        _
      $region10: #{tpu_custom_call.1} parent=5 // pred_check_branch
        %344 = sbr.rel (%p341) target = $region12
      $region11: #{tpu_custom_call.1} parent=5 // pred_region
        %s345 = ssub.s32 %s33, 1
        // Predicated region
        $region13: #{tpu_custom_call.1} parent=11 // pred_check
          %p346 = pneg %p106
        $region14: #{tpu_custom_call.1} parent=11 // pred_check_branch
          %348 = sbr.rel (%p346) target = $region16
        $region15: #{tpu_custom_call.1} parent=11 // pred_region
          %s350 = ssub.s32 4096, 4096
          %351 = vsyncadd [#allocation6], %s350
          %s352 = sshll.u32 [#allocation7], 4
          %s353 = int_to_ptr.vmem [resolvable:$true] %s352
          %358 = dma.hbm_to_vmem [thread:$0]  %s2, 4096, %s353, [#allocation6], 128, 128, 8
        $region16: #{tpu_custom_call.1} parent=11 // pred_fallthru
          _
        // Predicated region
        $region17: #{tpu_custom_call.1} parent=11 // pred_check
          %p359 = pneg %p127
        $region18: #{tpu_custom_call.1} parent=11 // pred_check_branch
          %361 = sbr.rel (%p359) target = $region20
        $region19: #{tpu_custom_call.1} parent=11 // pred_region
          _
        $region20: #{tpu_custom_call.1} parent=11 // pred_fallthru
          _
        // Predicated region
        $region21: #{tpu_custom_call.1} parent=11 // pred_check
          %p362 = pneg %p148
        $region22: #{tpu_custom_call.1} parent=11 // pred_check_branch
          %364 = sbr.rel (%p362) target = $region24
        $region23: #{tpu_custom_call.1} parent=11 // pred_region
          %s366 = ssub.s32 4096, 4096
          %367 = vsyncadd [#allocation9], %s366
          %s368 = sshll.u32 [#allocation8], 4
          %s369 = int_to_ptr.vmem [resolvable:$true] %s368
          %374 = dma.hbm_to_vmem [thread:$0]  %s4, 4096, %s369, [#allocation9], 128, 128, 8
        $region24: #{tpu_custom_call.1} parent=11 // pred_fallthru
          _
        // Predicated region
        $region25: #{tpu_custom_call.1} parent=11 // pred_check
          %p375 = pneg %p169
        $region26: #{tpu_custom_call.1} parent=11 // pred_check_branch
          %377 = sbr.rel (%p375) target = $region28
        $region27: #{tpu_custom_call.1} parent=11 // pred_region
          _
        $region28: #{tpu_custom_call.1} parent=11 // pred_fallthru
          _
        // Predicated region
        $region29: #{tpu_custom_call.1} parent=11 // pred_check
          %p378 = pneg %p190
        $region30: #{tpu_custom_call.1} parent=11 // pred_check_branch
          %380 = sbr.rel (%p378) target = $region32
        $region31: #{tpu_custom_call.1} parent=11 // pred_region
          %s382 = ssub.s32 2048, 2048
          %383 = vsyncadd [#allocation9], %s382
          %s384 = sshll.u32 [#allocation10], 4
          %s385 = int_to_ptr.vmem [resolvable:$true] %s384
          %390 = dma.hbm_to_vmem [thread:$0]  %s6, 2048, %s385, [#allocation9], 128, 128, 8
        $region32: #{tpu_custom_call.1} parent=11 // pred_fallthru
          _
        // Predicated region
        $region33: #{tpu_custom_call.1} parent=11 // pred_check
          %p391 = pneg %p211
        $region34: #{tpu_custom_call.1} parent=11 // pred_check_branch
          %393 = sbr.rel (%p391) target = $region36
        $region35: #{tpu_custom_call.1} parent=11 // pred_region
          _
        $region36: #{tpu_custom_call.1} parent=11 // pred_fallthru
          _
        // Predicated region
        $region37: #{tpu_custom_call.1} parent=11 // pred_check
          %p394 = pneg %p232
        $region38: #{tpu_custom_call.1} parent=11 // pred_check_branch
          %396 = sbr.rel (%p394) target = $region40
        $region39: #{tpu_custom_call.1} parent=11 // pred_region
          %s398 = ssub.s32 4096, 4096
          %399 = vsyncadd [#allocation12], %s398
          %s400 = sshll.u32 [#allocation11], 4
          %s401 = int_to_ptr.vmem [resolvable:$true] %s400
          %406 = dma.hbm_to_vmem [thread:$0]  %s8, 4096, %s401, [#allocation12], 128, 128, 8
        $region40: #{tpu_custom_call.1} parent=11 // pred_fallthru
          _
        // Predicated region
        $region41: #{tpu_custom_call.1} parent=11 // pred_check
          %p407 = pneg %p253
        $region42: #{tpu_custom_call.1} parent=11 // pred_check_branch
          %409 = sbr.rel (%p407) target = $region44
        $region43: #{tpu_custom_call.1} parent=11 // pred_region
          _
        $region44: #{tpu_custom_call.1} parent=11 // pred_fallthru
          _
      $region12: #{tpu_custom_call.1} parent=5 // pred_fallthru
        _
      %p410 = scmp.lt.s32.totalorder %s33, 4
      // Predicated region
      $region45: #{tpu_custom_call.1} parent=5 // pred_check
        %p411 = pneg %p410
      $region46: #{tpu_custom_call.1} parent=5 // pred_check_branch
        %413 = sbr.rel (%p411) target = $region48
      $region47: #{tpu_custom_call.1} parent=5 // pred_region
        // Predicated region
        $region49: #{tpu_custom_call.1} parent=47 // pred_check
          %p414 = pneg %p53
        $region50: #{tpu_custom_call.1} parent=47 // pred_check_branch
          %416 = sbr.rel (%p414) target = $region52
        $region51: #{tpu_custom_call.1} parent=47 // pred_region
          %s417 = sand.u32 %s43, 1
          %s418 = scalar_lea.sflag [#allocation3], %s417
          %s419 = sand.u32 %s43, 1
          %s420 = smul.addr %s419, 128
          %s421 = scalar_lea.vmem [#allocation2], %s420
          %s422 = smul.u32 16, %s33
          %s424 = ssub.s32 2048, 2048
          %425 = vsyncadd %s418, %s424
          %s426 = smul.addr %s422, 2
          %s427 = smul.addr %s426, 64
          %s428 = scalar_lea.hbm %s0, %s427
          %s429 = sshll.u32 %s421, 4
          %s430 = int_to_ptr.vmem [resolvable:$true] %s429
          %435 = dma.hbm_to_vmem [thread:$0]  %s428, 2048, %s430, %s418, 128, 128, 8
        $region52: #{tpu_custom_call.1} parent=47 // pred_fallthru
          _
        // Predicated region
        $region53: #{tpu_custom_call.1} parent=47 // pred_check
          %p436 = pneg %p79
        $region54: #{tpu_custom_call.1} parent=47 // pred_check_branch
          %438 = sbr.rel (%p436) target = $region56
        $region55: #{tpu_custom_call.1} parent=47 // pred_region
          %s439 = sand.u32 %s33, 1
          %s440 = scalar_lea.sflag [#allocation6], %s439
          %s441 = sand.u32 %s69, 1
          %s442 = smul.addr %s441, 64
          %s443 = scalar_lea.vmem [#allocation5], %s442
          %s444 = smul.u32 16, %s33
          %s446 = ssub.s32 1024, 1024
          %447 = vsyncadd %s440, %s446
          %s448 = smul.addr %s444, 64
          %s449 = scalar_lea.hbm %s1, %s448
          %s450 = sshll.u32 %s443, 4
          %s451 = int_to_ptr.vmem [resolvable:$true] %s450
          %456 = dma.hbm_to_vmem [thread:$0]  %s449, 1024, %s451, %s440, 64, 64, 4
        $region56: #{tpu_custom_call.1} parent=47 // pred_fallthru
          _
      $region48: #{tpu_custom_call.1} parent=5 // pred_fallthru
        _
      %p457 = scmp.le.s32.totalorder 1, %s33
      %p458 = scmp.lt.s32.totalorder %s33, 5
      %p459 = pnand %p457, %p458
      %p460 = pneg %p459
      // Predicated region
      $region57: #{tpu_custom_call.1} parent=5 // pred_check
        _
      $region58: #{tpu_custom_call.1} parent=5 // pred_check_branch
        %462 = sbr.rel (%p459) target = $region60
      $region59: #{tpu_custom_call.1} parent=5 // pred_region
        %s463 = ssub.s32 %s33, 1
        %s464 = sand.u32 %s46, 1
        %s465 = scalar_lea.sflag [#allocation3], %s464
        %s466 = sand.u32 %s46, 1
        %s467 = smul.addr %s466, 128
        %s468 = scalar_lea.vmem [#allocation2], %s467
        // Predicated region
        $region61: #{tpu_custom_call.1} parent=59 // pred_check
          %p469 = pneg %p59
        $region62: #{tpu_custom_call.1} parent=59 // pred_check_branch
          %471 = sbr.rel (%p469) target = $region64
        $region63: #{tpu_custom_call.1} parent=59 // pred_region
          %472 = dma.done %s465, 2048
        $region64: #{tpu_custom_call.1} parent=59 // pred_fallthru
          _
        %s473 = sand.u32 %s38, 1
        %s474 = scalar_lea.sflag [#allocation6], %s473
        %s475 = sand.u32 %s72, 1
        %s476 = smul.addr %s475, 64
        %s477 = scalar_lea.vmem [#allocation5], %s476
        // Predicated region
        $region65: #{tpu_custom_call.1} parent=59 // pred_check
          %p478 = pneg %p85
        $region66: #{tpu_custom_call.1} parent=59 // pred_check_branch
          %480 = sbr.rel (%p478) target = $region68
        $region67: #{tpu_custom_call.1} parent=59 // pred_region
          %481 = dma.done %s474, 1024
        $region68: #{tpu_custom_call.1} parent=59 // pred_fallthru
          _
        // Predicated region
        $region69: #{tpu_custom_call.1} parent=59 // pred_check
          %p482 = pneg %p106
        $region70: #{tpu_custom_call.1} parent=59 // pred_check_branch
          %484 = sbr.rel (%p482) target = $region72
        $region71: #{tpu_custom_call.1} parent=59 // pred_region
          %485 = dma.done [#allocation6], 4096
        $region72: #{tpu_custom_call.1} parent=59 // pred_fallthru
          _
        // Predicated region
        $region73: #{tpu_custom_call.1} parent=59 // pred_check
          %p486 = pneg %p148
        $region74: #{tpu_custom_call.1} parent=59 // pred_check_branch
          %488 = sbr.rel (%p486) target = $region76
        $region75: #{tpu_custom_call.1} parent=59 // pred_region
          %489 = dma.done [#allocation9], 4096
        $region76: #{tpu_custom_call.1} parent=59 // pred_fallthru
          _
        // Predicated region
        $region77: #{tpu_custom_call.1} parent=59 // pred_check
          %p490 = pneg %p190
        $region78: #{tpu_custom_call.1} parent=59 // pred_check_branch
          %492 = sbr.rel (%p490) target = $region80
        $region79: #{tpu_custom_call.1} parent=59 // pred_region
          %493 = dma.done [#allocation9], 2048
        $region80: #{tpu_custom_call.1} parent=59 // pred_fallthru
          _
        // Predicated region
        $region81: #{tpu_custom_call.1} parent=59 // pred_check
          %p494 = pneg %p232
        $region82: #{tpu_custom_call.1} parent=59 // pred_check_branch
          %496 = sbr.rel (%p494) target = $region84
        $region83: #{tpu_custom_call.1} parent=59 // pred_region
          %497 = dma.done [#allocation12], 4096
        $region84: #{tpu_custom_call.1} parent=59 // pred_fallthru
          _
        %s498 = sand.u32 %s46, 1
        %s499 = scalar_lea.sflag [#allocation3], %s498
        %s500 = sand.u32 %s46, 1
        %s501 = smul.addr %s500, 128
        %s502 = scalar_lea.vmem [#allocation2], %s501
        %p503 = pneg %p59
        %p504 = pneg %p56
        %s505 = sand.u32 %s38, 1
        %s506 = scalar_lea.sflag [#allocation6], %s505
        %s507 = sand.u32 %s72, 1
        %s508 = smul.addr %s507, 64
        %s509 = scalar_lea.vmem [#allocation5], %s508
        %p510 = pneg %p85
        %p511 = pneg %p82
        %p512 = pneg %p106
        %p513 = pneg %p103
        %p514 = pneg %p127
        %p515 = pneg %p124
        %p516 = pneg %p148
        %p517 = pneg %p145
        %p518 = pneg %p169
        %p519 = pneg %p166
        %p520 = pneg %p190
        %p521 = pneg %p187
        %p522 = pneg %p211
        %p523 = pneg %p208
        %p524 = pneg %p232
        %p525 = pneg %p229
        %p526 = pneg %p253
        %p527 = pneg %p250
        %p528 = pneg %p279
        %p529 = pneg %p276
        %s530 = sand.u32 %s266, 1
        %s531 = scalar_lea.sflag [#allocation4], %s530
        %s532 = sand.u32 %s266, 1
        %s533 = smul.addr %s532, 128
        %s534 = scalar_lea.vmem [#allocation13], %s533
        %p535 = pneg %p305
        %p536 = pneg %p302
        %s537 = sand.u32 %s38, 1
        %s538 = scalar_lea.sflag [#allocation15], %s537
        %s539 = sand.u32 %s292, 1
        %s540 = smul.addr %s539, 128
        %s541 = scalar_lea.vmem [#allocation14], %s540
        %p542 = pneg %p331
        %p543 = pneg %p328
        %s544 = sand.u32 %s38, 1
        %s545 = scalar_lea.sflag [#allocation15], %s544
        %s546 = sand.u32 %s318, 1
        %s547 = smul.addr %s546, 128
        %s548 = scalar_lea.vmem [#allocation16], %s547
        %s549 = smul.u32 16, %s38
        %s550 = smul.u32 16, %s38
        %s551 = smul.u32 16, %s38
        %s552 = smul.u32 16, %s38
        %s553 = smul.u32 16, %s38
        %v555 = vld [vmem:[%s468] sm:$0xff]
        %v556 = vld [vmem:[%s468 + $0x8] sm:$0xff]
        %v557 = vld [vmem:[%s468 + $0x10] sm:$0xff]
        %v558 = vld [vmem:[%s468 + $0x18] sm:$0xff]
        %v559 = vld [vmem:[%s468 + $0x20] sm:$0xff]
        %v560 = vld [vmem:[%s468 + $0x28] sm:$0xff]
        %v561 = vld [vmem:[%s468 + $0x30] sm:$0xff]
        %v562 = vld [vmem:[%s468 + $0x38] sm:$0xff]
        %v563 = vld [vmem:[%s468 + $0x40] sm:$0xff]
        %v564 = vld [vmem:[%s468 + $0x48] sm:$0xff]
        %v565 = vld [vmem:[%s468 + $0x50] sm:$0xff]
        %v566 = vld [vmem:[%s468 + $0x58] sm:$0xff]
        %v567 = vld [vmem:[%s468 + $0x60] sm:$0xff]
        %v568 = vld [vmem:[%s468 + $0x68] sm:$0xff]
        %v569 = vld [vmem:[%s468 + $0x70] sm:$0xff]
        %v570 = vld [vmem:[%s468 + $0x78] sm:$0xff]
        %v571 = vld [vmem:[%s477] sm:$0xf]
        %v572 = vld [vmem:[%s477 + $0x4] sm:$0xf]
        %v573 = vld [vmem:[%s477 + $0x8] sm:$0xf]
        %v574 = vld [vmem:[%s477 + $0xc] sm:$0xf]
        %v575 = vld [vmem:[%s477 + $0x10] sm:$0xf]
        %v576 = vld [vmem:[%s477 + $0x14] sm:$0xf]
        %v577 = vld [vmem:[%s477 + $0x18] sm:$0xf]
        %v578 = vld [vmem:[%s477 + $0x1c] sm:$0xf]
        %v579 = vld [vmem:[%s477 + $0x20] sm:$0xf]
        %v580 = vld [vmem:[%s477 + $0x24] sm:$0xf]
        %v581 = vld [vmem:[%s477 + $0x28] sm:$0xf]
        %v582 = vld [vmem:[%s477 + $0x2c] sm:$0xf]
        %v583 = vld [vmem:[%s477 + $0x30] sm:$0xf]
        %v584 = vld [vmem:[%s477 + $0x34] sm:$0xf]
        %v585 = vld [vmem:[%s477 + $0x38] sm:$0xf]
        %v586 = vld [vmem:[%s477 + $0x3c] sm:$0xf]
        %v587 = vunpack.c.l.bf16 %v571
        %v588 = vunpack.c.l.bf16 %v572
        %v589 = vunpack.c.l.bf16 %v573
        %v590 = vunpack.c.l.bf16 %v574
        %v591 = vunpack.c.l.bf16 %v575
        %v592 = vunpack.c.l.bf16 %v576
        %v593 = vunpack.c.l.bf16 %v577
        %v594 = vunpack.c.l.bf16 %v578
        %v595 = vunpack.c.l.bf16 %v579
        %v596 = vunpack.c.l.bf16 %v580
        %v597 = vunpack.c.l.bf16 %v581
        %v598 = vunpack.c.l.bf16 %v582
        %v599 = vunpack.c.l.bf16 %v583
        %v600 = vunpack.c.l.bf16 %v584
        %v601 = vunpack.c.l.bf16 %v585
        %v602 = vunpack.c.l.bf16 %v586
        %v603 = vld [vmem:[#allocation7] sm:$0xff]
        %v604 = vld [vmem:[#allocation7 + $0x8] sm:$0xff]
        %v605 = vld [vmem:[#allocation7 + $0x10] sm:$0xff]
        %v606 = vld [vmem:[#allocation7 + $0x18] sm:$0xff]
        %v607 = vld [vmem:[#allocation7 + $0x20] sm:$0xff]
        %v608 = vld [vmem:[#allocation7 + $0x28] sm:$0xff]
        %v609 = vld [vmem:[#allocation7 + $0x30] sm:$0xff]
        %v610 = vld [vmem:[#allocation7 + $0x38] sm:$0xff]
        %v611 = vld [vmem:[#allocation7 + $0x40] sm:$0xff]
        %v612 = vld [vmem:[#allocation7 + $0x48] sm:$0xff]
        %v613 = vld [vmem:[#allocation7 + $0x50] sm:$0xff]
        %v614 = vld [vmem:[#allocation7 + $0x58] sm:$0xff]
        %v615 = vld [vmem:[#allocation7 + $0x60] sm:$0xff]
        %v616 = vld [vmem:[#allocation7 + $0x68] sm:$0xff]
        %v617 = vld [vmem:[#allocation7 + $0x70] sm:$0xff]
        %v618 = vld [vmem:[#allocation7 + $0x78] sm:$0xff]
        %v619 = vld [vmem:[#allocation7 + $0x80] sm:$0xff]
        %v620 = vld [vmem:[#allocation7 + $0x88] sm:$0xff]
        %v621 = vld [vmem:[#allocation7 + $0x90] sm:$0xff]
        %v622 = vld [vmem:[#allocation7 + $0x98] sm:$0xff]
        %v623 = vld [vmem:[#allocation7 + $0xa0] sm:$0xff]
        %v624 = vld [vmem:[#allocation7 + $0xa8] sm:$0xff]
        %v625 = vld [vmem:[#allocation7 + $0xb0] sm:$0xff]
        %v626 = vld [vmem:[#allocation7 + $0xb8] sm:$0xff]
        %v627 = vld [vmem:[#allocation7 + $0xc0] sm:$0xff]
        %v628 = vld [vmem:[#allocation7 + $0xc8] sm:$0xff]
        %v629 = vld [vmem:[#allocation7 + $0xd0] sm:$0xff]
        %v630 = vld [vmem:[#allocation7 + $0xd8] sm:$0xff]
        %v631 = vld [vmem:[#allocation7 + $0xe0] sm:$0xff]
        %v632 = vld [vmem:[#allocation7 + $0xe8] sm:$0xff]
        %v633 = vld [vmem:[#allocation7 + $0xf0] sm:$0xff]
        %v634 = vld [vmem:[#allocation7 + $0xf8] sm:$0xff]
        %v635 = vld [vmem:[%s3] sm:$0x3]
        %v637 = vlaneseq
        %v638 = vshrl.u32 %v637, 7
        %v639 = vsub.s32 0, %v638
        %v640 = vrot.slane %v635, %v639
        %v641 = vlaneseq
        %v642 = vshrl.u32 %v641, 7
        %v643 = vsub.s32 1, %v642
        %v644 = vrot.slane %v635, %v643
        %v663 = vunpack.c.l.b16 %v555
        %v664 = vunpack.c.h.b16 %v555
        %v665 = vunpack.c.l.b16 %v556
        %v666 = vunpack.c.h.b16 %v556
        %v667 = vunpack.c.l.b16 %v557
        %v668 = vunpack.c.h.b16 %v557
        %v669 = vunpack.c.l.b16 %v558
        %v670 = vunpack.c.h.b16 %v558
        %v671 = vunpack.c.l.b16 %v559
        %v672 = vunpack.c.h.b16 %v559
        %v673 = vunpack.c.l.b16 %v560
        %v674 = vunpack.c.h.b16 %v560
        %v675 = vunpack.c.l.b16 %v561
        %v676 = vunpack.c.h.b16 %v561
        %v677 = vunpack.c.l.b16 %v562
        %v678 = vunpack.c.h.b16 %v562
        %v679 = vunpack.c.l.b16 %v563
        %v680 = vunpack.c.h.b16 %v563
        %v681 = vunpack.c.l.b16 %v564
        %v682 = vunpack.c.h.b16 %v564
        %v683 = vunpack.c.l.b16 %v565
        %v684 = vunpack.c.h.b16 %v565
        %v685 = vunpack.c.l.b16 %v566
        %v686 = vunpack.c.h.b16 %v566
        %v687 = vunpack.c.l.b16 %v567
        %v688 = vunpack.c.h.b16 %v567
        %v689 = vunpack.c.l.b16 %v568
        %v690 = vunpack.c.h.b16 %v568
        %v691 = vunpack.c.l.b16 %v569
        %v692 = vunpack.c.h.b16 %v569
        %v693 = vunpack.c.l.b16 %v570
        %v694 = vunpack.c.h.b16 %v570
        %v695 = vpack.c.b16 %v665, %v663
        %v696 = vpack.c.b16 %v666, %v664
        %v697 = vpack.c.b16 %v669, %v667
        %v698 = vpack.c.b16 %v670, %v668
        %v699 = vpack.c.b16 %v673, %v671
        %v700 = vpack.c.b16 %v674, %v672
        %v701 = vpack.c.b16 %v677, %v675
        %v702 = vpack.c.b16 %v678, %v676
        %v703 = vpack.c.b16 %v681, %v679
        %v704 = vpack.c.b16 %v682, %v680
        %v705 = vpack.c.b16 %v685, %v683
        %v706 = vpack.c.b16 %v686, %v684
        %v707 = vpack.c.b16 %v689, %v687
        %v708 = vpack.c.b16 %v690, %v688
        %v709 = vpack.c.b16 %v693, %v691
        %v710 = vpack.c.b16 %v694, %v692
        %v759 = vunpack.c.l.b16 %v603
        %v760 = vunpack.c.h.b16 %v603
        %v761 = vunpack.c.l.b16 %v604
        %v762 = vunpack.c.h.b16 %v604
        %v763 = vunpack.c.l.b16 %v605
        %v764 = vunpack.c.h.b16 %v605
        %v765 = vunpack.c.l.b16 %v606
        %v766 = vunpack.c.h.b16 %v606
        %v767 = vunpack.c.l.b16 %v607
        %v768 = vunpack.c.h.b16 %v607
        %v769 = vunpack.c.l.b16 %v608
        %v770 = vunpack.c.h.b16 %v608
        %v771 = vunpack.c.l.b16 %v609
        %v772 = vunpack.c.h.b16 %v609
        %v773 = vunpack.c.l.b16 %v610
        %v774 = vunpack.c.h.b16 %v610
        %v775 = vunpack.c.l.b16 %v611
        %v776 = vunpack.c.h.b16 %v611
        %v777 = vunpack.c.l.b16 %v612
        %v778 = vunpack.c.h.b16 %v612
        %v779 = vunpack.c.l.b16 %v613
        %v780 = vunpack.c.h.b16 %v613
        %v781 = vunpack.c.l.b16 %v614
        %v782 = vunpack.c.h.b16 %v614
        %v783 = vunpack.c.l.b16 %v615
        %v784 = vunpack.c.h.b16 %v615
        %v785 = vunpack.c.l.b16 %v616
        %v786 = vunpack.c.h.b16 %v616
        %v787 = vunpack.c.l.b16 %v617
        %v788 = vunpack.c.h.b16 %v617
        %v789 = vunpack.c.l.b16 %v618
        %v790 = vunpack.c.h.b16 %v618
        %v791 = vunpack.c.l.b16 %v619
        %v792 = vunpack.c.h.b16 %v619
        %v793 = vunpack.c.l.b16 %v620
        %v794 = vunpack.c.h.b16 %v620
        %v795 = vunpack.c.l.b16 %v621
        %v796 = vunpack.c.h.b16 %v621
        %v797 = vunpack.c.l.b16 %v622
        %v798 = vunpack.c.h.b16 %v622
        %v799 = vunpack.c.l.b16 %v623
        %v800 = vunpack.c.h.b16 %v623
        %v801 = vunpack.c.l.b16 %v624
        %v802 = vunpack.c.h.b16 %v624
        %v803 = vunpack.c.l.b16 %v625
        %v804 = vunpack.c.h.b16 %v625
        %v805 = vunpack.c.l.b16 %v626
        %v806 = vunpack.c.h.b16 %v626
        %v807 = vunpack.c.l.b16 %v627
        %v808 = vunpack.c.h.b16 %v627
        %v809 = vunpack.c.l.b16 %v628
        %v810 = vunpack.c.h.b16 %v628
        %v811 = vunpack.c.l.b16 %v629
        %v812 = vunpack.c.h.b16 %v629
        %v813 = vunpack.c.l.b16 %v630
        %v814 = vunpack.c.h.b16 %v630
        %v815 = vunpack.c.l.b16 %v631
        %v816 = vunpack.c.h.b16 %v631
        %v817 = vunpack.c.l.b16 %v632
        %v818 = vunpack.c.h.b16 %v632
        %v819 = vunpack.c.l.b16 %v633
        %v820 = vunpack.c.h.b16 %v633
        %v821 = vunpack.c.l.b16 %v634
        %v822 = vunpack.c.h.b16 %v634
        %v823 = vpack.c.b16 %v761, %v759
        %v824 = vpack.c.b16 %v762, %v760
        %v825 = vpack.c.b16 %v765, %v763
        %v826 = vpack.c.b16 %v766, %v764
        %v827 = vpack.c.b16 %v769, %v767
        %v828 = vpack.c.b16 %v770, %v768
        %v829 = vpack.c.b16 %v773, %v771
        %v830 = vpack.c.b16 %v774, %v772
        %v831 = vpack.c.b16 %v777, %v775
        %v832 = vpack.c.b16 %v778, %v776
        %v833 = vpack.c.b16 %v781, %v779
        %v834 = vpack.c.b16 %v782, %v780
        %v835 = vpack.c.b16 %v785, %v783
        %v836 = vpack.c.b16 %v786, %v784
        %v837 = vpack.c.b16 %v789, %v787
        %v838 = vpack.c.b16 %v790, %v788
        %v839 = vpack.c.b16 %v793, %v791
        %v840 = vpack.c.b16 %v794, %v792
        %v841 = vpack.c.b16 %v797, %v795
        %v842 = vpack.c.b16 %v798, %v796
        %v843 = vpack.c.b16 %v801, %v799
        %v844 = vpack.c.b16 %v802, %v800
        %v845 = vpack.c.b16 %v805, %v803
        %v846 = vpack.c.b16 %v806, %v804
        %v847 = vpack.c.b16 %v809, %v807
        %v848 = vpack.c.b16 %v810, %v808
        %v849 = vpack.c.b16 %v813, %v811
        %v850 = vpack.c.b16 %v814, %v812
        %v851 = vpack.c.b16 %v817, %v815
        %v852 = vpack.c.b16 %v818, %v816
        %v853 = vpack.c.b16 %v821, %v819
        %v854 = vpack.c.b16 %v822, %v820
        %887 = vmatprep.subr.bf16.mxu0 %v838
        %888 = vmatpush1.bf16.msra.mxu0 %v837
        %889 = vmatprep.subr.bf16.mxu0 %v836
        %890 = vmatpush1.bf16.msra.mxu0 %v835
        %891 = vmatprep.subr.bf16.mxu0 %v834
        %892 = vmatpush1.bf16.msra.mxu0 %v833
        %893 = vmatprep.subr.bf16.mxu0 %v832
        %894 = vmatpush1.bf16.msra.mxu0 %v831
        %895 = vmatprep.subr.bf16.mxu0 %v830
        %896 = vmatpush1.bf16.msra.mxu0 %v829
        %897 = vmatprep.subr.bf16.mxu0 %v828
        %898 = vmatpush1.bf16.msra.mxu0 %v827
        %899 = vmatprep.subr.bf16.mxu0 %v826
        %900 = vmatpush1.bf16.msra.mxu0 %v825
        %901 = vmatprep.subr.bf16.mxu0 %v824
        %902 = vmatpush1.bf16.msra.mxu0 %v823
        %903 = vmatprep.subr.bf16.mxu0 %v854
        %904 = vmatpush2.bf16.msra.mxu0 %v853
        %905 = vmatprep.subr.bf16.mxu0 %v852
        %906 = vmatpush2.bf16.msra.mxu0 %v851
        %907 = vmatprep.subr.bf16.mxu0 %v850
        %908 = vmatpush2.bf16.msra.mxu0 %v849
        %909 = vmatprep.subr.bf16.mxu0 %v848
        %910 = vmatpush2.bf16.msra.mxu0 %v847
        %911 = vmatprep.subr.bf16.mxu0 %v846
        %912 = vmatpush2.bf16.msra.mxu0 %v845
        %913 = vmatprep.subr.bf16.mxu0 %v844
        %914 = vmatpush2.bf16.msra.mxu0 %v843
        %915 = vmatprep.subr.bf16.mxu0 %v842
        %916 = vmatpush2.bf16.msra.mxu0 %v841
        %917 = vmatprep.subr.bf16.mxu0 %v840
        %918 = vmatpush2.bf16.msra.mxu0 %v839
        %919 = vmatprep.mubr.bf16.mxu0 %v696
        %920 = vmatmul.mubr.bf16.gmra.mxu0 %v695
        %v921 = vpop.f32.mrf.mxu0
        %v922 = vadd.f32 %v640, %v921
        %v923 = vpop.f32.mrf.mxu0
        %v924 = vadd.f32 %v644, %v923
        %v925 = vpop.f32.mrf.mxu0
        %v926 = vadd.f32 %v640, %v925
        %v927 = vpop.f32.mrf.mxu0
        %v928 = vadd.f32 %v644, %v927
        %929 = vmatprep.mubr.bf16.mxu0 %v698
        %930 = vmatmul.mubr.bf16.gmra.mxu0 %v697
        %v931 = vpop.f32.mrf.mxu0
        %v932 = vadd.f32 %v640, %v931
        %v933 = vpop.f32.mrf.mxu0
        %v934 = vadd.f32 %v644, %v933
        %v935 = vpop.f32.mrf.mxu0
        %v936 = vadd.f32 %v640, %v935
        %v937 = vpop.f32.mrf.mxu0
        %v938 = vadd.f32 %v644, %v937
        %939 = vmatprep.mubr.bf16.mxu0 %v700
        %940 = vmatmul.mubr.bf16.gmra.mxu0 %v699
        %v941 = vpop.f32.mrf.mxu0
        %v942 = vadd.f32 %v640, %v941
        %v943 = vpop.f32.mrf.mxu0
        %v944 = vadd.f32 %v644, %v943
        %v945 = vpop.f32.mrf.mxu0
        %v946 = vadd.f32 %v640, %v945
        %v947 = vpop.f32.mrf.mxu0
        %v948 = vadd.f32 %v644, %v947
        %949 = vmatprep.mubr.bf16.mxu0 %v702
        %950 = vmatmul.mubr.bf16.gmra.mxu0 %v701
        %v951 = vpop.f32.mrf.mxu0
        %v952 = vadd.f32 %v640, %v951
        %v953 = vpop.f32.mrf.mxu0
        %v954 = vadd.f32 %v644, %v953
        %v955 = vpop.f32.mrf.mxu0
        %v956 = vadd.f32 %v640, %v955
        %v957 = vpop.f32.mrf.mxu0
        %v958 = vadd.f32 %v644, %v957
        %959 = vmatprep.mubr.bf16.mxu0 %v704
        %960 = vmatmul.mubr.bf16.gmra.mxu0 %v703
        %v961 = vpop.f32.mrf.mxu0
        %v962 = vadd.f32 %v640, %v961
        %v963 = vpop.f32.mrf.mxu0
        %v964 = vadd.f32 %v644, %v963
        %v965 = vpop.f32.mrf.mxu0
        %v966 = vadd.f32 %v640, %v965
        %v967 = vpop.f32.mrf.mxu0
        %v968 = vadd.f32 %v644, %v967
        %969 = vmatprep.mubr.bf16.mxu0 %v706
        %970 = vmatmul.mubr.bf16.gmra.mxu0 %v705
        %v971 = vpop.f32.mrf.mxu0
        %v972 = vadd.f32 %v640, %v971
        %v973 = vpop.f32.mrf.mxu0
        %v974 = vadd.f32 %v644, %v973
        %v975 = vpop.f32.mrf.mxu0
        %v976 = vadd.f32 %v640, %v975
        %v977 = vpop.f32.mrf.mxu0
        %v978 = vadd.f32 %v644, %v977
        %979 = vmatprep.mubr.bf16.mxu0 %v708
        %980 = vmatmul.mubr.bf16.gmra.mxu0 %v707
        %v981 = vpop.f32.mrf.mxu0
        %v982 = vadd.f32 %v640, %v981
        %v983 = vpop.f32.mrf.mxu0
        %v984 = vadd.f32 %v644, %v983
        %v985 = vpop.f32.mrf.mxu0
        %v986 = vadd.f32 %v640, %v985
        %v987 = vpop.f32.mrf.mxu0
        %v988 = vadd.f32 %v644, %v987
        %989 = vmatprep.mubr.bf16.mxu0 %v710
        %990 = vmatmul.mubr.bf16.gmra.mxu0 %v709
        %v991 = vpop.f32.mrf.mxu0
        %v992 = vadd.f32 %v640, %v991
        %v993 = vpop.f32.mrf.mxu0
        %v994 = vadd.f32 %v644, %v993
        %v995 = vpop.f32.mrf.mxu0
        %v996 = vadd.f32 %v640, %v995
        %v997 = vpop.f32.mrf.mxu0
        %v998 = vadd.f32 %v644, %v997
        %999 = vdwg.mxu0
        %v1000 = vmax.f32 %v922, 0.0
        %v1001 = vmax.f32 %v924, 0.0
        %v1002 = vmax.f32 %v926, 0.0
        %v1003 = vmax.f32 %v928, 0.0
        %v1004 = vmax.f32 %v932, 0.0
        %v1005 = vmax.f32 %v934, 0.0
        %v1006 = vmax.f32 %v936, 0.0
        %v1007 = vmax.f32 %v938, 0.0
        %v1008 = vmax.f32 %v942, 0.0
        %v1009 = vmax.f32 %v944, 0.0
        %v1010 = vmax.f32 %v946, 0.0
        %v1011 = vmax.f32 %v948, 0.0
        %v1012 = vmax.f32 %v952, 0.0
        %v1013 = vmax.f32 %v954, 0.0
        %v1014 = vmax.f32 %v956, 0.0
        %v1015 = vmax.f32 %v958, 0.0
        %v1016 = vmax.f32 %v962, 0.0
        %v1017 = vmax.f32 %v964, 0.0
        %v1018 = vmax.f32 %v966, 0.0
        %v1019 = vmax.f32 %v968, 0.0
        %v1020 = vmax.f32 %v972, 0.0
        %v1021 = vmax.f32 %v974, 0.0
        %v1022 = vmax.f32 %v976, 0.0
        %v1023 = vmax.f32 %v978, 0.0
        %v1024 = vmax.f32 %v982, 0.0
        %v1025 = vmax.f32 %v984, 0.0
        %v1026 = vmax.f32 %v986, 0.0
        %v1027 = vmax.f32 %v988, 0.0
        %v1028 = vmax.f32 %v992, 0.0
        %v1029 = vmax.f32 %v994, 0.0
        %v1030 = vmax.f32 %v996, 0.0
        %v1031 = vmax.f32 %v998, 0.0
        %v1032 = vand.u32 2147483647, %v922
        %v1033 = vand.u32 2147483647, %v924
        %v1034 = vand.u32 2147483647, %v926
        %v1035 = vand.u32 2147483647, %v928
        %v1036 = vand.u32 2147483647, %v932
        %v1037 = vand.u32 2147483647, %v934
        %v1038 = vand.u32 2147483647, %v936
        %v1039 = vand.u32 2147483647, %v938
        %v1040 = vand.u32 2147483647, %v942
        %v1041 = vand.u32 2147483647, %v944
        %v1042 = vand.u32 2147483647, %v946
        %v1043 = vand.u32 2147483647, %v948
        %v1044 = vand.u32 2147483647, %v952
        %v1045 = vand.u32 2147483647, %v954
        %v1046 = vand.u32 2147483647, %v956
        %v1047 = vand.u32 2147483647, %v958
        %v1048 = vand.u32 2147483647, %v962
        %v1049 = vand.u32 2147483647, %v964
        %v1050 = vand.u32 2147483647, %v966
        %v1051 = vand.u32 2147483647, %v968
        %v1052 = vand.u32 2147483647, %v972
        %v1053 = vand.u32 2147483647, %v974
        %v1054 = vand.u32 2147483647, %v976
        %v1055 = vand.u32 2147483647, %v978
        %v1056 = vand.u32 2147483647, %v982
        %v1057 = vand.u32 2147483647, %v984
        %v1058 = vand.u32 2147483647, %v986
        %v1059 = vand.u32 2147483647, %v988
        %v1060 = vand.u32 2147483647, %v992
        %v1061 = vand.u32 2147483647, %v994
        %v1062 = vand.u32 2147483647, %v996
        %v1063 = vand.u32 2147483647, %v998
        %v1064 = vsub.f32 0.0, %v1032
        %v1065 = vsub.f32 0.0, %v1033
        %v1066 = vsub.f32 0.0, %v1034
        %v1067 = vsub.f32 0.0, %v1035
        %v1068 = vsub.f32 0.0, %v1036
        %v1069 = vsub.f32 0.0, %v1037
        %v1070 = vsub.f32 0.0, %v1038
        %v1071 = vsub.f32 0.0, %v1039
        %v1072 = vsub.f32 0.0, %v1040
        %v1073 = vsub.f32 0.0, %v1041
        %v1074 = vsub.f32 0.0, %v1042
        %v1075 = vsub.f32 0.0, %v1043
        %v1076 = vsub.f32 0.0, %v1044
        %v1077 = vsub.f32 0.0, %v1045
        %v1078 = vsub.f32 0.0, %v1046
        %v1079 = vsub.f32 0.0, %v1047
        %v1080 = vsub.f32 0.0, %v1048
        %v1081 = vsub.f32 0.0, %v1049
        %v1082 = vsub.f32 0.0, %v1050
        %v1083 = vsub.f32 0.0, %v1051
        %v1084 = vsub.f32 0.0, %v1052
        %v1085 = vsub.f32 0.0, %v1053
        %v1086 = vsub.f32 0.0, %v1054
        %v1087 = vsub.f32 0.0, %v1055
        %v1088 = vsub.f32 0.0, %v1056
        %v1089 = vsub.f32 0.0, %v1057
        %v1090 = vsub.f32 0.0, %v1058
        %v1091 = vsub.f32 0.0, %v1059
        %v1092 = vsub.f32 0.0, %v1060
        %v1093 = vsub.f32 0.0, %v1061
        %v1094 = vsub.f32 0.0, %v1062
        %v1095 = vsub.f32 0.0, %v1063
        %v1096 = vmul.f32 %v1064, 1.442695
        %v1097 = vpow.pop %v1096
        %v1098 = vmul.f32 %v1065, 1.442695
        %v1099 = vpow.pop %v1098
        %v1100 = vmul.f32 %v1066, 1.442695
        %v1101 = vpow.pop %v1100
        %v1102 = vmul.f32 %v1067, 1.442695
        %v1103 = vpow.pop %v1102
        %v1104 = vmul.f32 %v1068, 1.442695
        %v1105 = vpow.pop %v1104
        %v1106 = vmul.f32 %v1069, 1.442695
        %v1107 = vpow.pop %v1106
        %v1108 = vmul.f32 %v1070, 1.442695
        %v1109 = vpow.pop %v1108
        %v1110 = vmul.f32 %v1071, 1.442695
        %v1111 = vpow.pop %v1110
        %v1112 = vmul.f32 %v1072, 1.442695
        %v1113 = vpow.pop %v1112
        %v1114 = vmul.f32 %v1073, 1.442695
        %v1115 = vpow.pop %v1114
        %v1116 = vmul.f32 %v1074, 1.442695
        %v1117 = vpow.pop %v1116
        %v1118 = vmul.f32 %v1075, 1.442695
        %v1119 = vpow.pop %v1118
        %v1120 = vmul.f32 %v1076, 1.442695
        %v1121 = vpow.pop %v1120
        %v1122 = vmul.f32 %v1077, 1.442695
        %v1123 = vpow.pop %v1122
        %v1124 = vmul.f32 %v1078, 1.442695
        %v1125 = vpow.pop %v1124
        %v1126 = vmul.f32 %v1079, 1.442695
        %v1127 = vpow.pop %v1126
        %v1128 = vmul.f32 %v1080, 1.442695
        %v1129 = vpow.pop %v1128
        %v1130 = vmul.f32 %v1081, 1.442695
        %v1131 = vpow.pop %v1130
        %v1132 = vmul.f32 %v1082, 1.442695
        %v1133 = vpow.pop %v1132
        %v1134 = vmul.f32 %v1083, 1.442695
        %v1135 = vpow.pop %v1134
        %v1136 = vmul.f32 %v1084, 1.442695
        %v1137 = vpow.pop %v1136
        %v1138 = vmul.f32 %v1085, 1.442695
        %v1139 = vpow.pop %v1138
        %v1140 = vmul.f32 %v1086, 1.442695
        %v1141 = vpow.pop %v1140
        %v1142 = vmul.f32 %v1087, 1.442695
        %v1143 = vpow.pop %v1142
        %v1144 = vmul.f32 %v1088, 1.442695
        %v1145 = vpow.pop %v1144
        %v1146 = vmul.f32 %v1089, 1.442695
        %v1147 = vpow.pop %v1146
        %v1148 = vmul.f32 %v1090, 1.442695
        %v1149 = vpow.pop %v1148
        %v1150 = vmul.f32 %v1091, 1.442695
        %v1151 = vpow.pop %v1150
        %v1152 = vmul.f32 %v1092, 1.442695
        %v1153 = vpow.pop %v1152
        %v1154 = vmul.f32 %v1093, 1.442695
        %v1155 = vpow.pop %v1154
        %v1156 = vmul.f32 %v1094, 1.442695
        %v1157 = vpow.pop %v1156
        %v1158 = vmul.f32 %v1095, 1.442695
        %v1159 = vpow.pop %v1158
        %v1160 = vadd.f32 %v1097, 1.0
        %v1161 = vlog2.pop %v1160
        %v1162 = vmul.f32 %v1161, 0.6931472
        %v1163 = vmul.f32 -0.5, %v1097
        %v1164 = vadd.f32 %v1163, 1.0
        %v1165 = vmul.f32 %v1164, %v1097
        %v1166 = vand.u32 2147483647, %v1097
        %vm1167 = vcmp.lt.f32.partialorder %v1166, 0.0004427343
        %v1168 = vsel %vm1167, %v1165, %v1162
        %v1169 = vadd.f32 %v1099, 1.0
        %v1170 = vlog2.pop %v1169
        %v1171 = vmul.f32 %v1170, 0.6931472
        %v1172 = vmul.f32 -0.5, %v1099
        %v1173 = vadd.f32 %v1172, 1.0
        %v1174 = vmul.f32 %v1173, %v1099
        %v1175 = vand.u32 2147483647, %v1099
        %vm1176 = vcmp.lt.f32.partialorder %v1175, 0.0004427343
        %v1177 = vsel %vm1176, %v1174, %v1171
        %v1178 = vadd.f32 %v1101, 1.0
        %v1179 = vlog2.pop %v1178
        %v1180 = vmul.f32 %v1179, 0.6931472
        %v1181 = vmul.f32 -0.5, %v1101
        %v1182 = vadd.f32 %v1181, 1.0
        %v1183 = vmul.f32 %v1182, %v1101
        %v1184 = vand.u32 2147483647, %v1101
        %vm1185 = vcmp.lt.f32.partialorder %v1184, 0.0004427343
        %v1186 = vsel %vm1185, %v1183, %v1180
        %v1187 = vadd.f32 %v1103, 1.0
        %v1188 = vlog2.pop %v1187
        %v1189 = vmul.f32 %v1188, 0.6931472
        %v1190 = vmul.f32 -0.5, %v1103
        %v1191 = vadd.f32 %v1190, 1.0
        %v1192 = vmul.f32 %v1191, %v1103
        %v1193 = vand.u32 2147483647, %v1103
        %vm1194 = vcmp.lt.f32.partialorder %v1193, 0.0004427343
        %v1195 = vsel %vm1194, %v1192, %v1189
        %v1196 = vadd.f32 %v1105, 1.0
        %v1197 = vlog2.pop %v1196
        %v1198 = vmul.f32 %v1197, 0.6931472
        %v1199 = vmul.f32 -0.5, %v1105
        %v1200 = vadd.f32 %v1199, 1.0
        %v1201 = vmul.f32 %v1200, %v1105
        %v1202 = vand.u32 2147483647, %v1105
        %vm1203 = vcmp.lt.f32.partialorder %v1202, 0.0004427343
        %v1204 = vsel %vm1203, %v1201, %v1198
        %v1205 = vadd.f32 %v1107, 1.0
        %v1206 = vlog2.pop %v1205
        %v1207 = vmul.f32 %v1206, 0.6931472
        %v1208 = vmul.f32 -0.5, %v1107
        %v1209 = vadd.f32 %v1208, 1.0
        %v1210 = vmul.f32 %v1209, %v1107
        %v1211 = vand.u32 2147483647, %v1107
        %vm1212 = vcmp.lt.f32.partialorder %v1211, 0.0004427343
        %v1213 = vsel %vm1212, %v1210, %v1207
        %v1214 = vadd.f32 %v1109, 1.0
        %v1215 = vlog2.pop %v1214
        %v1216 = vmul.f32 %v1215, 0.6931472
        %v1217 = vmul.f32 -0.5, %v1109
        %v1218 = vadd.f32 %v1217, 1.0
        %v1219 = vmul.f32 %v1218, %v1109
        %v1220 = vand.u32 2147483647, %v1109
        %vm1221 = vcmp.lt.f32.partialorder %v1220, 0.0004427343
        %v1222 = vsel %vm1221, %v1219, %v1216
        %v1223 = vadd.f32 %v1111, 1.0
        %v1224 = vlog2.pop %v1223
        %v1225 = vmul.f32 %v1224, 0.6931472
        %v1226 = vmul.f32 -0.5, %v1111
        %v1227 = vadd.f32 %v1226, 1.0
        %v1228 = vmul.f32 %v1227, %v1111
        %v1229 = vand.u32 2147483647, %v1111
        %vm1230 = vcmp.lt.f32.partialorder %v1229, 0.0004427343
        %v1231 = vsel %vm1230, %v1228, %v1225
        %v1232 = vadd.f32 %v1113, 1.0
        %v1233 = vlog2.pop %v1232
        %v1234 = vmul.f32 %v1233, 0.6931472
        %v1235 = vmul.f32 -0.5, %v1113
        %v1236 = vadd.f32 %v1235, 1.0
        %v1237 = vmul.f32 %v1236, %v1113
        %v1238 = vand.u32 2147483647, %v1113
        %vm1239 = vcmp.lt.f32.partialorder %v1238, 0.0004427343
        %v1240 = vsel %vm1239, %v1237, %v1234
        %v1241 = vadd.f32 %v1115, 1.0
        %v1242 = vlog2.pop %v1241
        %v1243 = vmul.f32 %v1242, 0.6931472
        %v1244 = vmul.f32 -0.5, %v1115
        %v1245 = vadd.f32 %v1244, 1.0
        %v1246 = vmul.f32 %v1245, %v1115
        %v1247 = vand.u32 2147483647, %v1115
        %vm1248 = vcmp.lt.f32.partialorder %v1247, 0.0004427343
        %v1249 = vsel %vm1248, %v1246, %v1243
        %v1250 = vadd.f32 %v1117, 1.0
        %v1251 = vlog2.pop %v1250
        %v1252 = vmul.f32 %v1251, 0.6931472
        %v1253 = vmul.f32 -0.5, %v1117
        %v1254 = vadd.f32 %v1253, 1.0
        %v1255 = vmul.f32 %v1254, %v1117
        %v1256 = vand.u32 2147483647, %v1117
        %vm1257 = vcmp.lt.f32.partialorder %v1256, 0.0004427343
        %v1258 = vsel %vm1257, %v1255, %v1252
        %v1259 = vadd.f32 %v1119, 1.0
        %v1260 = vlog2.pop %v1259
        %v1261 = vmul.f32 %v1260, 0.6931472
        %v1262 = vmul.f32 -0.5, %v1119
        %v1263 = vadd.f32 %v1262, 1.0
        %v1264 = vmul.f32 %v1263, %v1119
        %v1265 = vand.u32 2147483647, %v1119
        %vm1266 = vcmp.lt.f32.partialorder %v1265, 0.0004427343
        %v1267 = vsel %vm1266, %v1264, %v1261
        %v1268 = vadd.f32 %v1121, 1.0
        %v1269 = vlog2.pop %v1268
        %v1270 = vmul.f32 %v1269, 0.6931472
        %v1271 = vmul.f32 -0.5, %v1121
        %v1272 = vadd.f32 %v1271, 1.0
        %v1273 = vmul.f32 %v1272, %v1121
        %v1274 = vand.u32 2147483647, %v1121
        %vm1275 = vcmp.lt.f32.partialorder %v1274, 0.0004427343
        %v1276 = vsel %vm1275, %v1273, %v1270
        %v1277 = vadd.f32 %v1123, 1.0
        %v1278 = vlog2.pop %v1277
        %v1279 = vmul.f32 %v1278, 0.6931472
        %v1280 = vmul.f32 -0.5, %v1123
        %v1281 = vadd.f32 %v1280, 1.0
        %v1282 = vmul.f32 %v1281, %v1123
        %v1283 = vand.u32 2147483647, %v1123
        %vm1284 = vcmp.lt.f32.partialorder %v1283, 0.0004427343
        %v1285 = vsel %vm1284, %v1282, %v1279
        %v1286 = vadd.f32 %v1125, 1.0
        %v1287 = vlog2.pop %v1286
        %v1288 = vmul.f32 %v1287, 0.6931472
        %v1289 = vmul.f32 -0.5, %v1125
        %v1290 = vadd.f32 %v1289, 1.0
        %v1291 = vmul.f32 %v1290, %v1125
        %v1292 = vand.u32 2147483647, %v1125
        %vm1293 = vcmp.lt.f32.partialorder %v1292, 0.0004427343
        %v1294 = vsel %vm1293, %v1291, %v1288
        %v1295 = vadd.f32 %v1127, 1.0
        %v1296 = vlog2.pop %v1295
        %v1297 = vmul.f32 %v1296, 0.6931472
        %v1298 = vmul.f32 -0.5, %v1127
        %v1299 = vadd.f32 %v1298, 1.0
        %v1300 = vmul.f32 %v1299, %v1127
        %v1301 = vand.u32 2147483647, %v1127
        %vm1302 = vcmp.lt.f32.partialorder %v1301, 0.0004427343
        %v1303 = vsel %vm1302, %v1300, %v1297
        %v1304 = vadd.f32 %v1129, 1.0
        %v1305 = vlog2.pop %v1304
        %v1306 = vmul.f32 %v1305, 0.6931472
        %v1307 = vmul.f32 -0.5, %v1129
        %v1308 = vadd.f32 %v1307, 1.0
        %v1309 = vmul.f32 %v1308, %v1129
        %v1310 = vand.u32 2147483647, %v1129
        %vm1311 = vcmp.lt.f32.partialorder %v1310, 0.0004427343
        %v1312 = vsel %vm1311, %v1309, %v1306
        %v1313 = vadd.f32 %v1131, 1.0
        %v1314 = vlog2.pop %v1313
        %v1315 = vmul.f32 %v1314, 0.6931472
        %v1316 = vmul.f32 -0.5, %v1131
        %v1317 = vadd.f32 %v1316, 1.0
        %v1318 = vmul.f32 %v1317, %v1131
        %v1319 = vand.u32 2147483647, %v1131
        %vm1320 = vcmp.lt.f32.partialorder %v1319, 0.0004427343
        %v1321 = vsel %vm1320, %v1318, %v1315
        %v1322 = vadd.f32 %v1133, 1.0
        %v1323 = vlog2.pop %v1322
        %v1324 = vmul.f32 %v1323, 0.6931472
        %v1325 = vmul.f32 -0.5, %v1133
        %v1326 = vadd.f32 %v1325, 1.0
        %v1327 = vmul.f32 %v1326, %v1133
        %v1328 = vand.u32 2147483647, %v1133
        %vm1329 = vcmp.lt.f32.partialorder %v1328, 0.0004427343
        %v1330 = vsel %vm1329, %v1327, %v1324
        %v1331 = vadd.f32 %v1135, 1.0
        %v1332 = vlog2.pop %v1331
        %v1333 = vmul.f32 %v1332, 0.6931472
        %v1334 = vmul.f32 -0.5, %v1135
        %v1335 = vadd.f32 %v1334, 1.0
        %v1336 = vmul.f32 %v1335, %v1135
        %v1337 = vand.u32 2147483647, %v1135
        %vm1338 = vcmp.lt.f32.partialorder %v1337, 0.0004427343
        %v1339 = vsel %vm1338, %v1336, %v1333
        %v1340 = vadd.f32 %v1137, 1.0
        %v1341 = vlog2.pop %v1340
        %v1342 = vmul.f32 %v1341, 0.6931472
        %v1343 = vmul.f32 -0.5, %v1137
        %v1344 = vadd.f32 %v1343, 1.0
        %v1345 = vmul.f32 %v1344, %v1137
        %v1346 = vand.u32 2147483647, %v1137
        %vm1347 = vcmp.lt.f32.partialorder %v1346, 0.0004427343
        %v1348 = vsel %vm1347, %v1345, %v1342
        %v1349 = vadd.f32 %v1139, 1.0
        %v1350 = vlog2.pop %v1349
        %v1351 = vmul.f32 %v1350, 0.6931472
        %v1352 = vmul.f32 -0.5, %v1139
        %v1353 = vadd.f32 %v1352, 1.0
        %v1354 = vmul.f32 %v1353, %v1139
        %v1355 = vand.u32 2147483647, %v1139
        %vm1356 = vcmp.lt.f32.partialorder %v1355, 0.0004427343
        %v1357 = vsel %vm1356, %v1354, %v1351
        %v1358 = vadd.f32 %v1141, 1.0
        %v1359 = vlog2.pop %v1358
        %v1360 = vmul.f32 %v1359, 0.6931472
        %v1361 = vmul.f32 -0.5, %v1141
        %v1362 = vadd.f32 %v1361, 1.0
        %v1363 = vmul.f32 %v1362, %v1141
        %v1364 = vand.u32 2147483647, %v1141
        %vm1365 = vcmp.lt.f32.partialorder %v1364, 0.0004427343
        %v1366 = vsel %vm1365, %v1363, %v1360
        %v1367 = vadd.f32 %v1143, 1.0
        %v1368 = vlog2.pop %v1367
        %v1369 = vmul.f32 %v1368, 0.6931472
        %v1370 = vmul.f32 -0.5, %v1143
        %v1371 = vadd.f32 %v1370, 1.0
        %v1372 = vmul.f32 %v1371, %v1143
        %v1373 = vand.u32 2147483647, %v1143
        %vm1374 = vcmp.lt.f32.partialorder %v1373, 0.0004427343
        %v1375 = vsel %vm1374, %v1372, %v1369
        %v1376 = vadd.f32 %v1145, 1.0
        %v1377 = vlog2.pop %v1376
        %v1378 = vmul.f32 %v1377, 0.6931472
        %v1379 = vmul.f32 -0.5, %v1145
        %v1380 = vadd.f32 %v1379, 1.0
        %v1381 = vmul.f32 %v1380, %v1145
        %v1382 = vand.u32 2147483647, %v1145
        %vm1383 = vcmp.lt.f32.partialorder %v1382, 0.0004427343
        %v1384 = vsel %vm1383, %v1381, %v1378
        %v1385 = vadd.f32 %v1147, 1.0
        %v1386 = vlog2.pop %v1385
        %v1387 = vmul.f32 %v1386, 0.6931472
        %v1388 = vmul.f32 -0.5, %v1147
        %v1389 = vadd.f32 %v1388, 1.0
        %v1390 = vmul.f32 %v1389, %v1147
        %v1391 = vand.u32 2147483647, %v1147
        %vm1392 = vcmp.lt.f32.partialorder %v1391, 0.0004427343
        %v1393 = vsel %vm1392, %v1390, %v1387
        %v1394 = vadd.f32 %v1149, 1.0
        %v1395 = vlog2.pop %v1394
        %v1396 = vmul.f32 %v1395, 0.6931472
        %v1397 = vmul.f32 -0.5, %v1149
        %v1398 = vadd.f32 %v1397, 1.0
        %v1399 = vmul.f32 %v1398, %v1149
        %v1400 = vand.u32 2147483647, %v1149
        %vm1401 = vcmp.lt.f32.partialorder %v1400, 0.0004427343
        %v1402 = vsel %vm1401, %v1399, %v1396
        %v1403 = vadd.f32 %v1151, 1.0
        %v1404 = vlog2.pop %v1403
        %v1405 = vmul.f32 %v1404, 0.6931472
        %v1406 = vmul.f32 -0.5, %v1151
        %v1407 = vadd.f32 %v1406, 1.0
        %v1408 = vmul.f32 %v1407, %v1151
        %v1409 = vand.u32 2147483647, %v1151
        %vm1410 = vcmp.lt.f32.partialorder %v1409, 0.0004427343
        %v1411 = vsel %vm1410, %v1408, %v1405
        %v1412 = vadd.f32 %v1153, 1.0
        %v1413 = vlog2.pop %v1412
        %v1414 = vmul.f32 %v1413, 0.6931472
        %v1415 = vmul.f32 -0.5, %v1153
        %v1416 = vadd.f32 %v1415, 1.0
        %v1417 = vmul.f32 %v1416, %v1153
        %v1418 = vand.u32 2147483647, %v1153
        %vm1419 = vcmp.lt.f32.partialorder %v1418, 0.0004427343
        %v1420 = vsel %vm1419, %v1417, %v1414
        %v1421 = vadd.f32 %v1155, 1.0
        %v1422 = vlog2.pop %v1421
        %v1423 = vmul.f32 %v1422, 0.6931472
        %v1424 = vmul.f32 -0.5, %v1155
        %v1425 = vadd.f32 %v1424, 1.0
        %v1426 = vmul.f32 %v1425, %v1155
        %v1427 = vand.u32 2147483647, %v1155
        %vm1428 = vcmp.lt.f32.partialorder %v1427, 0.0004427343
        %v1429 = vsel %vm1428, %v1426, %v1423
        %v1430 = vadd.f32 %v1157, 1.0
        %v1431 = vlog2.pop %v1430
        %v1432 = vmul.f32 %v1431, 0.6931472
        %v1433 = vmul.f32 -0.5, %v1157
        %v1434 = vadd.f32 %v1433, 1.0
        %v1435 = vmul.f32 %v1434, %v1157
        %v1436 = vand.u32 2147483647, %v1157
        %vm1437 = vcmp.lt.f32.partialorder %v1436, 0.0004427343
        %v1438 = vsel %vm1437, %v1435, %v1432
        %v1439 = vadd.f32 %v1159, 1.0
        %v1440 = vlog2.pop %v1439
        %v1441 = vmul.f32 %v1440, 0.6931472
        %v1442 = vmul.f32 -0.5, %v1159
        %v1443 = vadd.f32 %v1442, 1.0
        %v1444 = vmul.f32 %v1443, %v1159
        %v1445 = vand.u32 2147483647, %v1159
        %vm1446 = vcmp.lt.f32.partialorder %v1445, 0.0004427343
        %v1447 = vsel %vm1446, %v1444, %v1441
        %v1448 = vadd.f32 %v1000, %v1168
        %v1449 = vadd.f32 %v1001, %v1177
        %v1450 = vadd.f32 %v1002, %v1186
        %v1451 = vadd.f32 %v1003, %v1195
        %v1452 = vadd.f32 %v1004, %v1204
        %v1453 = vadd.f32 %v1005, %v1213
        %v1454 = vadd.f32 %v1006, %v1222
        %v1455 = vadd.f32 %v1007, %v1231
        %v1456 = vadd.f32 %v1008, %v1240
        %v1457 = vadd.f32 %v1009, %v1249
        %v1458 = vadd.f32 %v1010, %v1258
        %v1459 = vadd.f32 %v1011, %v1267
        %v1460 = vadd.f32 %v1012, %v1276
        %v1461 = vadd.f32 %v1013, %v1285
        %v1462 = vadd.f32 %v1014, %v1294
        %v1463 = vadd.f32 %v1015, %v1303
        %v1464 = vadd.f32 %v1016, %v1312
        %v1465 = vadd.f32 %v1017, %v1321
        %v1466 = vadd.f32 %v1018, %v1330
        %v1467 = vadd.f32 %v1019, %v1339
        %v1468 = vadd.f32 %v1020, %v1348
        %v1469 = vadd.f32 %v1021, %v1357
        %v1470 = vadd.f32 %v1022, %v1366
        %v1471 = vadd.f32 %v1023, %v1375
        %v1472 = vadd.f32 %v1024, %v1384
        %v1473 = vadd.f32 %v1025, %v1393
        %v1474 = vadd.f32 %v1026, %v1402
        %v1475 = vadd.f32 %v1027, %v1411
        %v1476 = vadd.f32 %v1028, %v1420
        %v1477 = vadd.f32 %v1029, %v1429
        %v1478 = vadd.f32 %v1030, %v1438
        %v1479 = vadd.f32 %v1031, %v1447
        %v1480 = vpack.c.bf16 %v1450, %v1448
        %v1481 = vpack.c.bf16 %v1451, %v1449
        %v1482 = vpack.c.bf16 %v1454, %v1452
        %v1483 = vpack.c.bf16 %v1455, %v1453
        %v1484 = vpack.c.bf16 %v1458, %v1456
        %v1485 = vpack.c.bf16 %v1459, %v1457
        %v1486 = vpack.c.bf16 %v1462, %v1460
        %v1487 = vpack.c.bf16 %v1463, %v1461
        %v1488 = vpack.c.bf16 %v1466, %v1464
        %v1489 = vpack.c.bf16 %v1467, %v1465
        %v1490 = vpack.c.bf16 %v1470, %v1468
        %v1491 = vpack.c.bf16 %v1471, %v1469
        %v1492 = vpack.c.bf16 %v1474, %v1472
        %v1493 = vpack.c.bf16 %v1475, %v1473
        %v1494 = vpack.c.bf16 %v1478, %v1476
        %v1495 = vpack.c.bf16 %v1479, %v1477
        %v1496 = vld [vmem:[#allocation8] sm:$0xff]
        %v1497 = vld [vmem:[#allocation8 + $0x8] sm:$0xff]
        %v1498 = vld [vmem:[#allocation8 + $0x10] sm:$0xff]
        %v1499 = vld [vmem:[#allocation8 + $0x18] sm:$0xff]
        %v1500 = vld [vmem:[#allocation8 + $0x20] sm:$0xff]
        %v1501 = vld [vmem:[#allocation8 + $0x28] sm:$0xff]
        %v1502 = vld [vmem:[#allocation8 + $0x30] sm:$0xff]
        %v1503 = vld [vmem:[#allocation8 + $0x38] sm:$0xff]
        %v1504 = vld [vmem:[#allocation8 + $0x40] sm:$0xff]
        %v1505 = vld [vmem:[#allocation8 + $0x48] sm:$0xff]
        %v1506 = vld [vmem:[#allocation8 + $0x50] sm:$0xff]
        %v1507 = vld [vmem:[#allocation8 + $0x58] sm:$0xff]
        %v1508 = vld [vmem:[#allocation8 + $0x60] sm:$0xff]
        %v1509 = vld [vmem:[#allocation8 + $0x68] sm:$0xff]
        %v1510 = vld [vmem:[#allocation8 + $0x70] sm:$0xff]
        %v1511 = vld [vmem:[#allocation8 + $0x78] sm:$0xff]
        %v1512 = vld [vmem:[#allocation8 + $0x80] sm:$0xff]
        %v1513 = vld [vmem:[#allocation8 + $0x88] sm:$0xff]
        %v1514 = vld [vmem:[#allocation8 + $0x90] sm:$0xff]
        %v1515 = vld [vmem:[#allocation8 + $0x98] sm:$0xff]
        %v1516 = vld [vmem:[#allocation8 + $0xa0] sm:$0xff]
        %v1517 = vld [vmem:[#allocation8 + $0xa8] sm:$0xff]
        %v1518 = vld [vmem:[#allocation8 + $0xb0] sm:$0xff]
        %v1519 = vld [vmem:[#allocation8 + $0xb8] sm:$0xff]
        %v1520 = vld [vmem:[#allocation8 + $0xc0] sm:$0xff]
        %v1521 = vld [vmem:[#allocation8 + $0xc8] sm:$0xff]
        %v1522 = vld [vmem:[#allocation8 + $0xd0] sm:$0xff]
        %v1523 = vld [vmem:[#allocation8 + $0xd8] sm:$0xff]
        %v1524 = vld [vmem:[#allocation8 + $0xe0] sm:$0xff]
        %v1525 = vld [vmem:[#allocation8 + $0xe8] sm:$0xff]
        %v1526 = vld [vmem:[#allocation8 + $0xf0] sm:$0xff]
        %v1527 = vld [vmem:[#allocation8 + $0xf8] sm:$0xff]
        %v1528 = vld [vmem:[%s5] sm:$0x3]
        %v1530 = vlaneseq
        %v1531 = vshrl.u32 %v1530, 7
        %v1532 = vsub.s32 0, %v1531
        %v1533 = vrot.slane %v1528, %v1532
        %v1534 = vlaneseq
        %v1535 = vshrl.u32 %v1534, 7
        %v1536 = vsub.s32 1, %v1535
        %v1537 = vrot.slane %v1528, %v1536
        %v1572 = vunpack.c.l.b16 %v1496
        %v1573 = vunpack.c.h.b16 %v1496
        %v1574 = vunpack.c.l.b16 %v1497
        %v1575 = vunpack.c.h.b16 %v1497
        %v1576 = vunpack.c.l.b16 %v1498
        %v1577 = vunpack.c.h.b16 %v1498
        %v1578 = vunpack.c.l.b16 %v1499
        %v1579 = vunpack.c.h.b16 %v1499
        %v1580 = vunpack.c.l.b16 %v1500
        %v1581 = vunpack.c.h.b16 %v1500
        %v1582 = vunpack.c.l.b16 %v1501
        %v1583 = vunpack.c.h.b16 %v1501
        %v1584 = vunpack.c.l.b16 %v1502
        %v1585 = vunpack.c.h.b16 %v1502
        %v1586 = vunpack.c.l.b16 %v1503
        %v1587 = vunpack.c.h.b16 %v1503
        %v1588 = vunpack.c.l.b16 %v1504
        %v1589 = vunpack.c.h.b16 %v1504
        %v1590 = vunpack.c.l.b16 %v1505
        %v1591 = vunpack.c.h.b16 %v1505
        %v1592 = vunpack.c.l.b16 %v1506
        %v1593 = vunpack.c.h.b16 %v1506
        %v1594 = vunpack.c.l.b16 %v1507
        %v1595 = vunpack.c.h.b16 %v1507
        %v1596 = vunpack.c.l.b16 %v1508
        %v1597 = vunpack.c.h.b16 %v1508
        %v1598 = vunpack.c.l.b16 %v1509
        %v1599 = vunpack.c.h.b16 %v1509
        %v1600 = vunpack.c.l.b16 %v1510
        %v1601 = vunpack.c.h.b16 %v1510
        %v1602 = vunpack.c.l.b16 %v1511
        %v1603 = vunpack.c.h.b16 %v1511
        %v1604 = vunpack.c.l.b16 %v1512
        %v1605 = vunpack.c.h.b16 %v1512
        %v1606 = vunpack.c.l.b16 %v1513
        %v1607 = vunpack.c.h.b16 %v1513
        %v1608 = vunpack.c.l.b16 %v1514
        %v1609 = vunpack.c.h.b16 %v1514
        %v1610 = vunpack.c.l.b16 %v1515
        %v1611 = vunpack.c.h.b16 %v1515
        %v1612 = vunpack.c.l.b16 %v1516
        %v1613 = vunpack.c.h.b16 %v1516
        %v1614 = vunpack.c.l.b16 %v1517
        %v1615 = vunpack.c.h.b16 %v1517
        %v1616 = vunpack.c.l.b16 %v1518
        %v1617 = vunpack.c.h.b16 %v1518
        %v1618 = vunpack.c.l.b16 %v1519
        %v1619 = vunpack.c.h.b16 %v1519
        %v1620 = vunpack.c.l.b16 %v1520
        %v1621 = vunpack.c.h.b16 %v1520
        %v1622 = vunpack.c.l.b16 %v1521
        %v1623 = vunpack.c.h.b16 %v1521
        %v1624 = vunpack.c.l.b16 %v1522
        %v1625 = vunpack.c.h.b16 %v1522
        %v1626 = vunpack.c.l.b16 %v1523
        %v1627 = vunpack.c.h.b16 %v1523
        %v1628 = vunpack.c.l.b16 %v1524
        %v1629 = vunpack.c.h.b16 %v1524
        %v1630 = vunpack.c.l.b16 %v1525
        %v1631 = vunpack.c.h.b16 %v1525
        %v1632 = vunpack.c.l.b16 %v1526
        %v1633 = vunpack.c.h.b16 %v1526
        %v1634 = vunpack.c.l.b16 %v1527
        %v1635 = vunpack.c.h.b16 %v1527
        %v1636 = vpack.c.b16 %v1574, %v1572
        %v1637 = vpack.c.b16 %v1575, %v1573
        %v1638 = vpack.c.b16 %v1578, %v1576
        %v1639 = vpack.c.b16 %v1579, %v1577
        %v1640 = vpack.c.b16 %v1582, %v1580
        %v1641 = vpack.c.b16 %v1583, %v1581
        %v1642 = vpack.c.b16 %v1586, %v1584
        %v1643 = vpack.c.b16 %v1587, %v1585
        %v1644 = vpack.c.b16 %v1590, %v1588
        %v1645 = vpack.c.b16 %v1591, %v1589
        %v1646 = vpack.c.b16 %v1594, %v1592
        %v1647 = vpack.c.b16 %v1595, %v1593
        %v1648 = vpack.c.b16 %v1598, %v1596
        %v1649 = vpack.c.b16 %v1599, %v1597
        %v1650 = vpack.c.b16 %v1602, %v1600
        %v1651 = vpack.c.b16 %v1603, %v1601
        %v1652 = vpack.c.b16 %v1606, %v1604
        %v1653 = vpack.c.b16 %v1607, %v1605
        %v1654 = vpack.c.b16 %v1610, %v1608
        %v1655 = vpack.c.b16 %v1611, %v1609
        %v1656 = vpack.c.b16 %v1614, %v1612
        %v1657 = vpack.c.b16 %v1615, %v1613
        %v1658 = vpack.c.b16 %v1618, %v1616
        %v1659 = vpack.c.b16 %v1619, %v1617
        %v1660 = vpack.c.b16 %v1622, %v1620
        %v1661 = vpack.c.b16 %v1623, %v1621
        %v1662 = vpack.c.b16 %v1626, %v1624
        %v1663 = vpack.c.b16 %v1627, %v1625
        %v1664 = vpack.c.b16 %v1630, %v1628
        %v1665 = vpack.c.b16 %v1631, %v1629
        %v1666 = vpack.c.b16 %v1634, %v1632
        %v1667 = vpack.c.b16 %v1635, %v1633
        %1700 = vmatprep.subr.bf16.mxu0 %v1651
        %1701 = vmatpush1.bf16.msra.mxu0 %v1650
        %1702 = vmatprep.subr.bf16.mxu0 %v1649
        %1703 = vmatpush1.bf16.msra.mxu0 %v1648
        %1704 = vmatprep.subr.bf16.mxu0 %v1647
        %1705 = vmatpush1.bf16.msra.mxu0 %v1646
        %1706 = vmatprep.subr.bf16.mxu0 %v1645
        %1707 = vmatpush1.bf16.msra.mxu0 %v1644
        %1708 = vmatprep.subr.bf16.mxu0 %v1643
        %1709 = vmatpush1.bf16.msra.mxu0 %v1642
        %1710 = vmatprep.subr.bf16.mxu0 %v1641
        %1711 = vmatpush1.bf16.msra.mxu0 %v1640
        %1712 = vmatprep.subr.bf16.mxu0 %v1639
        %1713 = vmatpush1.bf16.msra.mxu0 %v1638
        %1714 = vmatprep.subr.bf16.mxu0 %v1637
        %1715 = vmatpush1.bf16.msra.mxu0 %v1636
        %1716 = vmatprep.subr.bf16.mxu0 %v1667
        %1717 = vmatpush2.bf16.msra.mxu0 %v1666
        %1718 = vmatprep.subr.bf16.mxu0 %v1665
        %1719 = vmatpush2.bf16.msra.mxu0 %v1664
        %1720 = vmatprep.subr.bf16.mxu0 %v1663
        %1721 = vmatpush2.bf16.msra.mxu0 %v1662
        %1722 = vmatprep.subr.bf16.mxu0 %v1661
        %1723 = vmatpush2.bf16.msra.mxu0 %v1660
        %1724 = vmatprep.subr.bf16.mxu0 %v1659
        %1725 = vmatpush2.bf16.msra.mxu0 %v1658
        %1726 = vmatprep.subr.bf16.mxu0 %v1657
        %1727 = vmatpush2.bf16.msra.mxu0 %v1656
        %1728 = vmatprep.subr.bf16.mxu0 %v1655
        %1729 = vmatpush2.bf16.msra.mxu0 %v1654
        %1730 = vmatprep.subr.bf16.mxu0 %v1653
        %1731 = vmatpush2.bf16.msra.mxu0 %v1652
        %1732 = vmatprep.mubr.bf16.mxu0 %v1481
        %1733 = vmatmul.mubr.bf16.gmra.mxu0 %v1480
        %v1734 = vpop.f32.mrf.mxu0
        %v1735 = vadd.f32 %v1533, %v1734
        %v1736 = vpop.f32.mrf.mxu0
        %v1737 = vadd.f32 %v1537, %v1736
        %v1738 = vpop.f32.mrf.mxu0
        %v1739 = vadd.f32 %v1533, %v1738
        %v1740 = vpop.f32.mrf.mxu0
        %v1741 = vadd.f32 %v1537, %v1740
        %1742 = vmatprep.mubr.bf16.mxu0 %v1483
        %1743 = vmatmul.mubr.bf16.gmra.mxu0 %v1482
        %v1744 = vpop.f32.mrf.mxu0
        %v1745 = vadd.f32 %v1533, %v1744
        %v1746 = vpop.f32.mrf.mxu0
        %v1747 = vadd.f32 %v1537, %v1746
        %v1748 = vpop.f32.mrf.mxu0
        %v1749 = vadd.f32 %v1533, %v1748
        %v1750 = vpop.f32.mrf.mxu0
        %v1751 = vadd.f32 %v1537, %v1750
        %1752 = vmatprep.mubr.bf16.mxu0 %v1485
        %1753 = vmatmul.mubr.bf16.gmra.mxu0 %v1484
        %v1754 = vpop.f32.mrf.mxu0
        %v1755 = vadd.f32 %v1533, %v1754
        %v1756 = vpop.f32.mrf.mxu0
        %v1757 = vadd.f32 %v1537, %v1756
        %v1758 = vpop.f32.mrf.mxu0
        %v1759 = vadd.f32 %v1533, %v1758
        %v1760 = vpop.f32.mrf.mxu0
        %v1761 = vadd.f32 %v1537, %v1760
        %1762 = vmatprep.mubr.bf16.mxu0 %v1487
        %1763 = vmatmul.mubr.bf16.gmra.mxu0 %v1486
        %v1764 = vpop.f32.mrf.mxu0
        %v1765 = vadd.f32 %v1533, %v1764
        %v1766 = vpop.f32.mrf.mxu0
        %v1767 = vadd.f32 %v1537, %v1766
        %v1768 = vpop.f32.mrf.mxu0
        %v1769 = vadd.f32 %v1533, %v1768
        %v1770 = vpop.f32.mrf.mxu0
        %v1771 = vadd.f32 %v1537, %v1770
        %1772 = vmatprep.mubr.bf16.mxu0 %v1489
        %1773 = vmatmul.mubr.bf16.gmra.mxu0 %v1488
        %v1774 = vpop.f32.mrf.mxu0
        %v1775 = vadd.f32 %v1533, %v1774
        %v1776 = vpop.f32.mrf.mxu0
        %v1777 = vadd.f32 %v1537, %v1776
        %v1778 = vpop.f32.mrf.mxu0
        %v1779 = vadd.f32 %v1533, %v1778
        %v1780 = vpop.f32.mrf.mxu0
        %v1781 = vadd.f32 %v1537, %v1780
        %1782 = vmatprep.mubr.bf16.mxu0 %v1491
        %1783 = vmatmul.mubr.bf16.gmra.mxu0 %v1490
        %v1784 = vpop.f32.mrf.mxu0
        %v1785 = vadd.f32 %v1533, %v1784
        %v1786 = vpop.f32.mrf.mxu0
        %v1787 = vadd.f32 %v1537, %v1786
        %v1788 = vpop.f32.mrf.mxu0
        %v1789 = vadd.f32 %v1533, %v1788
        %v1790 = vpop.f32.mrf.mxu0
        %v1791 = vadd.f32 %v1537, %v1790
        %1792 = vmatprep.mubr.bf16.mxu0 %v1493
        %1793 = vmatmul.mubr.bf16.gmra.mxu0 %v1492
        %v1794 = vpop.f32.mrf.mxu0
        %v1795 = vadd.f32 %v1533, %v1794
        %v1796 = vpop.f32.mrf.mxu0
        %v1797 = vadd.f32 %v1537, %v1796
        %v1798 = vpop.f32.mrf.mxu0
        %v1799 = vadd.f32 %v1533, %v1798
        %v1800 = vpop.f32.mrf.mxu0
        %v1801 = vadd.f32 %v1537, %v1800
        %1802 = vmatprep.mubr.bf16.mxu0 %v1495
        %1803 = vmatmul.mubr.bf16.gmra.mxu0 %v1494
        %v1804 = vpop.f32.mrf.mxu0
        %v1805 = vadd.f32 %v1533, %v1804
        %v1806 = vpop.f32.mrf.mxu0
        %v1807 = vadd.f32 %v1537, %v1806
        %v1808 = vpop.f32.mrf.mxu0
        %v1809 = vadd.f32 %v1533, %v1808
        %v1810 = vpop.f32.mrf.mxu0
        %v1811 = vadd.f32 %v1537, %v1810
        %1812 = vdwg.mxu0
        %v1813 = vmul.f32 %v1737, 0.5
        %v1814 = vmul.f32 %v1741, 0.5
        %v1815 = vmul.f32 %v1747, 0.5
        %v1816 = vmul.f32 %v1751, 0.5
        %v1817 = vmul.f32 %v1757, 0.5
        %v1818 = vmul.f32 %v1761, 0.5
        %v1819 = vmul.f32 %v1767, 0.5
        %v1820 = vmul.f32 %v1771, 0.5
        %v1821 = vmul.f32 %v1777, 0.5
        %v1822 = vmul.f32 %v1781, 0.5
        %v1823 = vmul.f32 %v1787, 0.5
        %v1824 = vmul.f32 %v1791, 0.5
        %v1825 = vmul.f32 %v1797, 0.5
        %v1826 = vmul.f32 %v1801, 0.5
        %v1827 = vmul.f32 %v1807, 0.5
        %v1828 = vmul.f32 %v1811, 0.5
        %v1829 = vmul.f32 %v1813, 1.442695
        %v1830 = vpow.pop %v1829
        %v1831 = vmul.f32 %v1814, 1.442695
        %v1832 = vpow.pop %v1831
        %v1833 = vmul.f32 %v1815, 1.442695
        %v1834 = vpow.pop %v1833
        %v1835 = vmul.f32 %v1816, 1.442695
        %v1836 = vpow.pop %v1835
        %v1837 = vmul.f32 %v1817, 1.442695
        %v1838 = vpow.pop %v1837
        %v1839 = vmul.f32 %v1818, 1.442695
        %v1840 = vpow.pop %v1839
        %v1841 = vmul.f32 %v1819, 1.442695
        %v1842 = vpow.pop %v1841
        %v1843 = vmul.f32 %v1820, 1.442695
        %v1844 = vpow.pop %v1843
        %v1845 = vmul.f32 %v1821, 1.442695
        %v1846 = vpow.pop %v1845
        %v1847 = vmul.f32 %v1822, 1.442695
        %v1848 = vpow.pop %v1847
        %v1849 = vmul.f32 %v1823, 1.442695
        %v1850 = vpow.pop %v1849
        %v1851 = vmul.f32 %v1824, 1.442695
        %v1852 = vpow.pop %v1851
        %v1853 = vmul.f32 %v1825, 1.442695
        %v1854 = vpow.pop %v1853
        %v1855 = vmul.f32 %v1826, 1.442695
        %v1856 = vpow.pop %v1855
        %v1857 = vmul.f32 %v1827, 1.442695
        %v1858 = vpow.pop %v1857
        %v1859 = vmul.f32 %v1828, 1.442695
        %v1860 = vpow.pop %v1859
        %v1861 = vmul.f32 %v587, %v1830
        %v1862 = vmul.f32 %v588, %v1832
        %v1863 = vmul.f32 %v589, %v1834
        %v1864 = vmul.f32 %v590, %v1836
        %v1865 = vmul.f32 %v591, %v1838
        %v1866 = vmul.f32 %v592, %v1840
        %v1867 = vmul.f32 %v593, %v1842
        %v1868 = vmul.f32 %v594, %v1844
        %v1869 = vmul.f32 %v595, %v1846
        %v1870 = vmul.f32 %v596, %v1848
        %v1871 = vmul.f32 %v597, %v1850
        %v1872 = vmul.f32 %v598, %v1852
        %v1873 = vmul.f32 %v599, %v1854
        %v1874 = vmul.f32 %v600, %v1856
        %v1875 = vmul.f32 %v601, %v1858
        %v1876 = vmul.f32 %v602, %v1860
        %v1877 = vadd.f32 %v1735, %v1861
        %v1878 = vadd.f32 %v1739, %v1862
        %v1879 = vadd.f32 %v1745, %v1863
        %v1880 = vadd.f32 %v1749, %v1864
        %v1881 = vadd.f32 %v1755, %v1865
        %v1882 = vadd.f32 %v1759, %v1866
        %v1883 = vadd.f32 %v1765, %v1867
        %v1884 = vadd.f32 %v1769, %v1868
        %v1885 = vadd.f32 %v1775, %v1869
        %v1886 = vadd.f32 %v1779, %v1870
        %v1887 = vadd.f32 %v1785, %v1871
        %v1888 = vadd.f32 %v1789, %v1872
        %v1889 = vadd.f32 %v1795, %v1873
        %v1890 = vadd.f32 %v1799, %v1874
        %v1891 = vadd.f32 %v1805, %v1875
        %v1892 = vadd.f32 %v1809, %v1876
        %v1893 = vpack.c.bf16 %v1878, %v1877
        %v1894 = vpack.c.bf16 %v1880, %v1879
        %v1895 = vpack.c.bf16 %v1882, %v1881
        %v1896 = vpack.c.bf16 %v1884, %v1883
        %v1897 = vpack.c.bf16 %v1886, %v1885
        %v1898 = vpack.c.bf16 %v1888, %v1887
        %v1899 = vpack.c.bf16 %v1890, %v1889
        %v1900 = vpack.c.bf16 %v1892, %v1891
        %v1901 = vld [vmem:[#allocation10] sm:$0xff]
        %v1902 = vld [vmem:[#allocation10 + $0x8] sm:$0xff]
        %v1903 = vld [vmem:[#allocation10 + $0x10] sm:$0xff]
        %v1904 = vld [vmem:[#allocation10 + $0x18] sm:$0xff]
        %v1905 = vld [vmem:[#allocation10 + $0x20] sm:$0xff]
        %v1906 = vld [vmem:[#allocation10 + $0x28] sm:$0xff]
        %v1907 = vld [vmem:[#allocation10 + $0x30] sm:$0xff]
        %v1908 = vld [vmem:[#allocation10 + $0x38] sm:$0xff]
        %v1909 = vld [vmem:[#allocation10 + $0x40] sm:$0xff]
        %v1910 = vld [vmem:[#allocation10 + $0x48] sm:$0xff]
        %v1911 = vld [vmem:[#allocation10 + $0x50] sm:$0xff]
        %v1912 = vld [vmem:[#allocation10 + $0x58] sm:$0xff]
        %v1913 = vld [vmem:[#allocation10 + $0x60] sm:$0xff]
        %v1914 = vld [vmem:[#allocation10 + $0x68] sm:$0xff]
        %v1915 = vld [vmem:[#allocation10 + $0x70] sm:$0xff]
        %v1916 = vld [vmem:[#allocation10 + $0x78] sm:$0xff]
        %v1917 = vld [vmem:[%s7] sm:$0x3]
        %v1919 = vlaneseq
        %v1920 = vshrl.u32 %v1919, 7
        %v1921 = vsub.s32 0, %v1920
        %v1922 = vrot.slane %v1917, %v1921
        %v1923 = vlaneseq
        %v1924 = vshrl.u32 %v1923, 7
        %v1925 = vsub.s32 1, %v1924
        %v1926 = vrot.slane %v1917, %v1925
        %v1945 = vunpack.c.l.b16 %v1901
        %v1946 = vunpack.c.h.b16 %v1901
        %v1947 = vunpack.c.l.b16 %v1902
        %v1948 = vunpack.c.h.b16 %v1902
        %v1949 = vunpack.c.l.b16 %v1903
        %v1950 = vunpack.c.h.b16 %v1903
        %v1951 = vunpack.c.l.b16 %v1904
        %v1952 = vunpack.c.h.b16 %v1904
        %v1953 = vunpack.c.l.b16 %v1905
        %v1954 = vunpack.c.h.b16 %v1905
        %v1955 = vunpack.c.l.b16 %v1906
        %v1956 = vunpack.c.h.b16 %v1906
        %v1957 = vunpack.c.l.b16 %v1907
        %v1958 = vunpack.c.h.b16 %v1907
        %v1959 = vunpack.c.l.b16 %v1908
        %v1960 = vunpack.c.h.b16 %v1908
        %v1961 = vunpack.c.l.b16 %v1909
        %v1962 = vunpack.c.h.b16 %v1909
        %v1963 = vunpack.c.l.b16 %v1910
        %v1964 = vunpack.c.h.b16 %v1910
        %v1965 = vunpack.c.l.b16 %v1911
        %v1966 = vunpack.c.h.b16 %v1911
        %v1967 = vunpack.c.l.b16 %v1912
        %v1968 = vunpack.c.h.b16 %v1912
        %v1969 = vunpack.c.l.b16 %v1913
        %v1970 = vunpack.c.h.b16 %v1913
        %v1971 = vunpack.c.l.b16 %v1914
        %v1972 = vunpack.c.h.b16 %v1914
        %v1973 = vunpack.c.l.b16 %v1915
        %v1974 = vunpack.c.h.b16 %v1915
        %v1975 = vunpack.c.l.b16 %v1916
        %v1976 = vunpack.c.h.b16 %v1916
        %v1977 = vpack.c.b16 %v1947, %v1945
        %v1978 = vpack.c.b16 %v1948, %v1946
        %v1979 = vpack.c.b16 %v1951, %v1949
        %v1980 = vpack.c.b16 %v1952, %v1950
        %v1981 = vpack.c.b16 %v1955, %v1953
        %v1982 = vpack.c.b16 %v1956, %v1954
        %v1983 = vpack.c.b16 %v1959, %v1957
        %v1984 = vpack.c.b16 %v1960, %v1958
        %v1985 = vpack.c.b16 %v1963, %v1961
        %v1986 = vpack.c.b16 %v1964, %v1962
        %v1987 = vpack.c.b16 %v1967, %v1965
        %v1988 = vpack.c.b16 %v1968, %v1966
        %v1989 = vpack.c.b16 %v1971, %v1969
        %v1990 = vpack.c.b16 %v1972, %v1970
        %v1991 = vpack.c.b16 %v1975, %v1973
        %v1992 = vpack.c.b16 %v1976, %v1974
        %2009 = vmatprep.subr.bf16.mxu0 %v1992
        %2010 = vmatpush1.bf16.msra.mxu0 %v1991
        %2011 = vmatprep.subr.bf16.mxu0 %v1990
        %2012 = vmatpush1.bf16.msra.mxu0 %v1989
        %2013 = vmatprep.subr.bf16.mxu0 %v1988
        %2014 = vmatpush1.bf16.msra.mxu0 %v1987
        %2015 = vmatprep.subr.bf16.mxu0 %v1986
        %2016 = vmatpush1.bf16.msra.mxu0 %v1985
        %2017 = vmatprep.subr.bf16.mxu0 %v1984
        %2018 = vmatpush1.bf16.msra.mxu0 %v1983
        %2019 = vmatprep.subr.bf16.mxu0 %v1982
        %2020 = vmatpush1.bf16.msra.mxu0 %v1981
        %2021 = vmatprep.subr.bf16.mxu0 %v1980
        %2022 = vmatpush1.bf16.msra.mxu0 %v1979
        %2023 = vmatprep.subr.bf16.mxu0 %v1978
        %2024 = vmatpush1.bf16.msra.mxu0 %v1977
        %2025 = vmatprep.subr.bf16.mxu0 0
        %2026 = vmatpush2.bf16.msra.mxu0 0
        %2027 = vmatprep.subr.bf16.mxu0 0
        %2028 = vmatpush2.bf16.msra.mxu0 0
        %2029 = vmatprep.subr.bf16.mxu0 0
        %2030 = vmatpush2.bf16.msra.mxu0 0
        %2031 = vmatprep.subr.bf16.mxu0 0
        %2032 = vmatpush2.bf16.msra.mxu0 0
        %2033 = vmatprep.subr.bf16.mxu0 0
        %2034 = vmatpush2.bf16.msra.mxu0 0
        %2035 = vmatprep.subr.bf16.mxu0 0
        %2036 = vmatpush2.bf16.msra.mxu0 0
        %2037 = vmatprep.subr.bf16.mxu0 0
        %2038 = vmatpush2.bf16.msra.mxu0 0
        %2039 = vmatprep.subr.bf16.mxu0 0
        %2040 = vmatpush2.bf16.msra.mxu0 0
        %2041 = vmatprep.mubr.bf16.mxu0 0
        %2042 = vmatmul.mubr.bf16.gmra.mxu0 %v1893
        %v2043 = vpop.f32.mrf.mxu0
        %v2044 = vadd.f32 %v1922, %v2043
        %v2045 = vpop.f32.mrf.mxu0
        %v2046 = vadd.f32 %v1926, %v2045
        %v2047 = vpop.f32.mrf.mxu0
        %v2048 = vadd.f32 %v1922, %v2047
        %v2049 = vpop.f32.mrf.mxu0
        %v2050 = vadd.f32 %v1926, %v2049
        %2051 = vmatprep.mubr.bf16.mxu0 0
        %2052 = vmatmul.mubr.bf16.gmra.mxu0 %v1894
        %v2053 = vpop.f32.mrf.mxu0
        %v2054 = vadd.f32 %v1922, %v2053
        %v2055 = vpop.f32.mrf.mxu0
        %v2056 = vadd.f32 %v1926, %v2055
        %v2057 = vpop.f32.mrf.mxu0
        %v2058 = vadd.f32 %v1922, %v2057
        %v2059 = vpop.f32.mrf.mxu0
        %v2060 = vadd.f32 %v1926, %v2059
        %2061 = vmatprep.mubr.bf16.mxu0 0
        %2062 = vmatmul.mubr.bf16.gmra.mxu0 %v1895
        %v2063 = vpop.f32.mrf.mxu0
        %v2064 = vadd.f32 %v1922, %v2063
        %v2065 = vpop.f32.mrf.mxu0
        %v2066 = vadd.f32 %v1926, %v2065
        %v2067 = vpop.f32.mrf.mxu0
        %v2068 = vadd.f32 %v1922, %v2067
        %v2069 = vpop.f32.mrf.mxu0
        %v2070 = vadd.f32 %v1926, %v2069
        %2071 = vmatprep.mubr.bf16.mxu0 0
        %2072 = vmatmul.mubr.bf16.gmra.mxu0 %v1896
        %v2073 = vpop.f32.mrf.mxu0
        %v2074 = vadd.f32 %v1922, %v2073
        %v2075 = vpop.f32.mrf.mxu0
        %v2076 = vadd.f32 %v1926, %v2075
        %v2077 = vpop.f32.mrf.mxu0
        %v2078 = vadd.f32 %v1922, %v2077
        %v2079 = vpop.f32.mrf.mxu0
        %v2080 = vadd.f32 %v1926, %v2079
        %2081 = vmatprep.mubr.bf16.mxu0 0
        %2082 = vmatmul.mubr.bf16.gmra.mxu0 %v1897
        %v2083 = vpop.f32.mrf.mxu0
        %v2084 = vadd.f32 %v1922, %v2083
        %v2085 = vpop.f32.mrf.mxu0
        %v2086 = vadd.f32 %v1926, %v2085
        %v2087 = vpop.f32.mrf.mxu0
        %v2088 = vadd.f32 %v1922, %v2087
        %v2089 = vpop.f32.mrf.mxu0
        %v2090 = vadd.f32 %v1926, %v2089
        %2091 = vmatprep.mubr.bf16.mxu0 0
        %2092 = vmatmul.mubr.bf16.gmra.mxu0 %v1898
        %v2093 = vpop.f32.mrf.mxu0
        %v2094 = vadd.f32 %v1922, %v2093
        %v2095 = vpop.f32.mrf.mxu0
        %v2096 = vadd.f32 %v1926, %v2095
        %v2097 = vpop.f32.mrf.mxu0
        %v2098 = vadd.f32 %v1922, %v2097
        %v2099 = vpop.f32.mrf.mxu0
        %v2100 = vadd.f32 %v1926, %v2099
        %2101 = vmatprep.mubr.bf16.mxu0 0
        %2102 = vmatmul.mubr.bf16.gmra.mxu0 %v1899
        %v2103 = vpop.f32.mrf.mxu0
        %v2104 = vadd.f32 %v1922, %v2103
        %v2105 = vpop.f32.mrf.mxu0
        %v2106 = vadd.f32 %v1926, %v2105
        %v2107 = vpop.f32.mrf.mxu0
        %v2108 = vadd.f32 %v1922, %v2107
        %v2109 = vpop.f32.mrf.mxu0
        %v2110 = vadd.f32 %v1926, %v2109
        %2111 = vmatprep.mubr.bf16.mxu0 0
        %2112 = vmatmul.mubr.bf16.gmra.mxu0 %v1900
        %v2113 = vpop.f32.mrf.mxu0
        %v2114 = vadd.f32 %v1922, %v2113
        %v2115 = vpop.f32.mrf.mxu0
        %v2116 = vadd.f32 %v1926, %v2115
        %v2117 = vpop.f32.mrf.mxu0
        %v2118 = vadd.f32 %v1922, %v2117
        %v2119 = vpop.f32.mrf.mxu0
        %v2120 = vadd.f32 %v1926, %v2119
        %2121 = vdwg.mxu0
        %v2122 = vmax.f32 %v2044, 0.0
        %v2123 = vmax.f32 %v2046, 0.0
        %v2124 = vmax.f32 %v2048, 0.0
        %v2125 = vmax.f32 %v2050, 0.0
        %v2126 = vmax.f32 %v2054, 0.0
        %v2127 = vmax.f32 %v2056, 0.0
        %v2128 = vmax.f32 %v2058, 0.0
        %v2129 = vmax.f32 %v2060, 0.0
        %v2130 = vmax.f32 %v2064, 0.0
        %v2131 = vmax.f32 %v2066, 0.0
        %v2132 = vmax.f32 %v2068, 0.0
        %v2133 = vmax.f32 %v2070, 0.0
        %v2134 = vmax.f32 %v2074, 0.0
        %v2135 = vmax.f32 %v2076, 0.0
        %v2136 = vmax.f32 %v2078, 0.0
        %v2137 = vmax.f32 %v2080, 0.0
        %v2138 = vmax.f32 %v2084, 0.0
        %v2139 = vmax.f32 %v2086, 0.0
        %v2140 = vmax.f32 %v2088, 0.0
        %v2141 = vmax.f32 %v2090, 0.0
        %v2142 = vmax.f32 %v2094, 0.0
        %v2143 = vmax.f32 %v2096, 0.0
        %v2144 = vmax.f32 %v2098, 0.0
        %v2145 = vmax.f32 %v2100, 0.0
        %v2146 = vmax.f32 %v2104, 0.0
        %v2147 = vmax.f32 %v2106, 0.0
        %v2148 = vmax.f32 %v2108, 0.0
        %v2149 = vmax.f32 %v2110, 0.0
        %v2150 = vmax.f32 %v2114, 0.0
        %v2151 = vmax.f32 %v2116, 0.0
        %v2152 = vmax.f32 %v2118, 0.0
        %v2153 = vmax.f32 %v2120, 0.0
        %v2154 = vand.u32 2147483647, %v2044
        %v2155 = vand.u32 2147483647, %v2046
        %v2156 = vand.u32 2147483647, %v2048
        %v2157 = vand.u32 2147483647, %v2050
        %v2158 = vand.u32 2147483647, %v2054
        %v2159 = vand.u32 2147483647, %v2056
        %v2160 = vand.u32 2147483647, %v2058
        %v2161 = vand.u32 2147483647, %v2060
        %v2162 = vand.u32 2147483647, %v2064
        %v2163 = vand.u32 2147483647, %v2066
        %v2164 = vand.u32 2147483647, %v2068
        %v2165 = vand.u32 2147483647, %v2070
        %v2166 = vand.u32 2147483647, %v2074
        %v2167 = vand.u32 2147483647, %v2076
        %v2168 = vand.u32 2147483647, %v2078
        %v2169 = vand.u32 2147483647, %v2080
        %v2170 = vand.u32 2147483647, %v2084
        %v2171 = vand.u32 2147483647, %v2086
        %v2172 = vand.u32 2147483647, %v2088
        %v2173 = vand.u32 2147483647, %v2090
        %v2174 = vand.u32 2147483647, %v2094
        %v2175 = vand.u32 2147483647, %v2096
        %v2176 = vand.u32 2147483647, %v2098
        %v2177 = vand.u32 2147483647, %v2100
        %v2178 = vand.u32 2147483647, %v2104
        %v2179 = vand.u32 2147483647, %v2106
        %v2180 = vand.u32 2147483647, %v2108
        %v2181 = vand.u32 2147483647, %v2110
        %v2182 = vand.u32 2147483647, %v2114
        %v2183 = vand.u32 2147483647, %v2116
        %v2184 = vand.u32 2147483647, %v2118
        %v2185 = vand.u32 2147483647, %v2120
        %v2186 = vsub.f32 0.0, %v2154
        %v2187 = vsub.f32 0.0, %v2155
        %v2188 = vsub.f32 0.0, %v2156
        %v2189 = vsub.f32 0.0, %v2157
        %v2190 = vsub.f32 0.0, %v2158
        %v2191 = vsub.f32 0.0, %v2159
        %v2192 = vsub.f32 0.0, %v2160
        %v2193 = vsub.f32 0.0, %v2161
        %v2194 = vsub.f32 0.0, %v2162
        %v2195 = vsub.f32 0.0, %v2163
        %v2196 = vsub.f32 0.0, %v2164
        %v2197 = vsub.f32 0.0, %v2165
        %v2198 = vsub.f32 0.0, %v2166
        %v2199 = vsub.f32 0.0, %v2167
        %v2200 = vsub.f32 0.0, %v2168
        %v2201 = vsub.f32 0.0, %v2169
        %v2202 = vsub.f32 0.0, %v2170
        %v2203 = vsub.f32 0.0, %v2171
        %v2204 = vsub.f32 0.0, %v2172
        %v2205 = vsub.f32 0.0, %v2173
        %v2206 = vsub.f32 0.0, %v2174
        %v2207 = vsub.f32 0.0, %v2175
        %v2208 = vsub.f32 0.0, %v2176
        %v2209 = vsub.f32 0.0, %v2177
        %v2210 = vsub.f32 0.0, %v2178
        %v2211 = vsub.f32 0.0, %v2179
        %v2212 = vsub.f32 0.0, %v2180
        %v2213 = vsub.f32 0.0, %v2181
        %v2214 = vsub.f32 0.0, %v2182
        %v2215 = vsub.f32 0.0, %v2183
        %v2216 = vsub.f32 0.0, %v2184
        %v2217 = vsub.f32 0.0, %v2185
        %v2218 = vmul.f32 %v2186, 1.442695
        %v2219 = vpow.pop %v2218
        %v2220 = vmul.f32 %v2187, 1.442695
        %v2221 = vpow.pop %v2220
        %v2222 = vmul.f32 %v2188, 1.442695
        %v2223 = vpow.pop %v2222
        %v2224 = vmul.f32 %v2189, 1.442695
        %v2225 = vpow.pop %v2224
        %v2226 = vmul.f32 %v2190, 1.442695
        %v2227 = vpow.pop %v2226
        %v2228 = vmul.f32 %v2191, 1.442695
        %v2229 = vpow.pop %v2228
        %v2230 = vmul.f32 %v2192, 1.442695
        %v2231 = vpow.pop %v2230
        %v2232 = vmul.f32 %v2193, 1.442695
        %v2233 = vpow.pop %v2232
        %v2234 = vmul.f32 %v2194, 1.442695
        %v2235 = vpow.pop %v2234
        %v2236 = vmul.f32 %v2195, 1.442695
        %v2237 = vpow.pop %v2236
        %v2238 = vmul.f32 %v2196, 1.442695
        %v2239 = vpow.pop %v2238
        %v2240 = vmul.f32 %v2197, 1.442695
        %v2241 = vpow.pop %v2240
        %v2242 = vmul.f32 %v2198, 1.442695
        %v2243 = vpow.pop %v2242
        %v2244 = vmul.f32 %v2199, 1.442695
        %v2245 = vpow.pop %v2244
        %v2246 = vmul.f32 %v2200, 1.442695
        %v2247 = vpow.pop %v2246
        %v2248 = vmul.f32 %v2201, 1.442695
        %v2249 = vpow.pop %v2248
        %v2250 = vmul.f32 %v2202, 1.442695
        %v2251 = vpow.pop %v2250
        %v2252 = vmul.f32 %v2203, 1.442695
        %v2253 = vpow.pop %v2252
        %v2254 = vmul.f32 %v2204, 1.442695
        %v2255 = vpow.pop %v2254
        %v2256 = vmul.f32 %v2205, 1.442695
        %v2257 = vpow.pop %v2256
        %v2258 = vmul.f32 %v2206, 1.442695
        %v2259 = vpow.pop %v2258
        %v2260 = vmul.f32 %v2207, 1.442695
        %v2261 = vpow.pop %v2260
        %v2262 = vmul.f32 %v2208, 1.442695
        %v2263 = vpow.pop %v2262
        %v2264 = vmul.f32 %v2209, 1.442695
        %v2265 = vpow.pop %v2264
        %v2266 = vmul.f32 %v2210, 1.442695
        %v2267 = vpow.pop %v2266
        %v2268 = vmul.f32 %v2211, 1.442695
        %v2269 = vpow.pop %v2268
        %v2270 = vmul.f32 %v2212, 1.442695
        %v2271 = vpow.pop %v2270
        %v2272 = vmul.f32 %v2213, 1.442695
        %v2273 = vpow.pop %v2272
        %v2274 = vmul.f32 %v2214, 1.442695
        %v2275 = vpow.pop %v2274
        %v2276 = vmul.f32 %v2215, 1.442695
        %v2277 = vpow.pop %v2276
        %v2278 = vmul.f32 %v2216, 1.442695
        %v2279 = vpow.pop %v2278
        %v2280 = vmul.f32 %v2217, 1.442695
        %v2281 = vpow.pop %v2280
        %v2282 = vadd.f32 %v2219, 1.0
        %v2283 = vlog2.pop %v2282
        %v2284 = vmul.f32 %v2283, 0.6931472
        %v2285 = vmul.f32 -0.5, %v2219
        %v2286 = vadd.f32 %v2285, 1.0
        %v2287 = vmul.f32 %v2286, %v2219
        %v2288 = vand.u32 2147483647, %v2219
        %vm2289 = vcmp.lt.f32.partialorder %v2288, 0.0004427343
        %v2290 = vsel %vm2289, %v2287, %v2284
        %v2291 = vadd.f32 %v2221, 1.0
        %v2292 = vlog2.pop %v2291
        %v2293 = vmul.f32 %v2292, 0.6931472
        %v2294 = vmul.f32 -0.5, %v2221
        %v2295 = vadd.f32 %v2294, 1.0
        %v2296 = vmul.f32 %v2295, %v2221
        %v2297 = vand.u32 2147483647, %v2221
        %vm2298 = vcmp.lt.f32.partialorder %v2297, 0.0004427343
        %v2299 = vsel %vm2298, %v2296, %v2293
        %v2300 = vadd.f32 %v2223, 1.0
        %v2301 = vlog2.pop %v2300
        %v2302 = vmul.f32 %v2301, 0.6931472
        %v2303 = vmul.f32 -0.5, %v2223
        %v2304 = vadd.f32 %v2303, 1.0
        %v2305 = vmul.f32 %v2304, %v2223
        %v2306 = vand.u32 2147483647, %v2223
        %vm2307 = vcmp.lt.f32.partialorder %v2306, 0.0004427343
        %v2308 = vsel %vm2307, %v2305, %v2302
        %v2309 = vadd.f32 %v2225, 1.0
        %v2310 = vlog2.pop %v2309
        %v2311 = vmul.f32 %v2310, 0.6931472
        %v2312 = vmul.f32 -0.5, %v2225
        %v2313 = vadd.f32 %v2312, 1.0
        %v2314 = vmul.f32 %v2313, %v2225
        %v2315 = vand.u32 2147483647, %v2225
        %vm2316 = vcmp.lt.f32.partialorder %v2315, 0.0004427343
        %v2317 = vsel %vm2316, %v2314, %v2311
        %v2318 = vadd.f32 %v2227, 1.0
        %v2319 = vlog2.pop %v2318
        %v2320 = vmul.f32 %v2319, 0.6931472
        %v2321 = vmul.f32 -0.5, %v2227
        %v2322 = vadd.f32 %v2321, 1.0
        %v2323 = vmul.f32 %v2322, %v2227
        %v2324 = vand.u32 2147483647, %v2227
        %vm2325 = vcmp.lt.f32.partialorder %v2324, 0.0004427343
        %v2326 = vsel %vm2325, %v2323, %v2320
        %v2327 = vadd.f32 %v2229, 1.0
        %v2328 = vlog2.pop %v2327
        %v2329 = vmul.f32 %v2328, 0.6931472
        %v2330 = vmul.f32 -0.5, %v2229
        %v2331 = vadd.f32 %v2330, 1.0
        %v2332 = vmul.f32 %v2331, %v2229
        %v2333 = vand.u32 2147483647, %v2229
        %vm2334 = vcmp.lt.f32.partialorder %v2333, 0.0004427343
        %v2335 = vsel %vm2334, %v2332, %v2329
        %v2336 = vadd.f32 %v2231, 1.0
        %v2337 = vlog2.pop %v2336
        %v2338 = vmul.f32 %v2337, 0.6931472
        %v2339 = vmul.f32 -0.5, %v2231
        %v2340 = vadd.f32 %v2339, 1.0
        %v2341 = vmul.f32 %v2340, %v2231
        %v2342 = vand.u32 2147483647, %v2231
        %vm2343 = vcmp.lt.f32.partialorder %v2342, 0.0004427343
        %v2344 = vsel %vm2343, %v2341, %v2338
        %v2345 = vadd.f32 %v2233, 1.0
        %v2346 = vlog2.pop %v2345
        %v2347 = vmul.f32 %v2346, 0.6931472
        %v2348 = vmul.f32 -0.5, %v2233
        %v2349 = vadd.f32 %v2348, 1.0
        %v2350 = vmul.f32 %v2349, %v2233
        %v2351 = vand.u32 2147483647, %v2233
        %vm2352 = vcmp.lt.f32.partialorder %v2351, 0.0004427343
        %v2353 = vsel %vm2352, %v2350, %v2347
        %v2354 = vadd.f32 %v2235, 1.0
        %v2355 = vlog2.pop %v2354
        %v2356 = vmul.f32 %v2355, 0.6931472
        %v2357 = vmul.f32 -0.5, %v2235
        %v2358 = vadd.f32 %v2357, 1.0
        %v2359 = vmul.f32 %v2358, %v2235
        %v2360 = vand.u32 2147483647, %v2235
        %vm2361 = vcmp.lt.f32.partialorder %v2360, 0.0004427343
        %v2362 = vsel %vm2361, %v2359, %v2356
        %v2363 = vadd.f32 %v2237, 1.0
        %v2364 = vlog2.pop %v2363
        %v2365 = vmul.f32 %v2364, 0.6931472
        %v2366 = vmul.f32 -0.5, %v2237
        %v2367 = vadd.f32 %v2366, 1.0
        %v2368 = vmul.f32 %v2367, %v2237
        %v2369 = vand.u32 2147483647, %v2237
        %vm2370 = vcmp.lt.f32.partialorder %v2369, 0.0004427343
        %v2371 = vsel %vm2370, %v2368, %v2365
        %v2372 = vadd.f32 %v2239, 1.0
        %v2373 = vlog2.pop %v2372
        %v2374 = vmul.f32 %v2373, 0.6931472
        %v2375 = vmul.f32 -0.5, %v2239
        %v2376 = vadd.f32 %v2375, 1.0
        %v2377 = vmul.f32 %v2376, %v2239
        %v2378 = vand.u32 2147483647, %v2239
        %vm2379 = vcmp.lt.f32.partialorder %v2378, 0.0004427343
        %v2380 = vsel %vm2379, %v2377, %v2374
        %v2381 = vadd.f32 %v2241, 1.0
        %v2382 = vlog2.pop %v2381
        %v2383 = vmul.f32 %v2382, 0.6931472
        %v2384 = vmul.f32 -0.5, %v2241
        %v2385 = vadd.f32 %v2384, 1.0
        %v2386 = vmul.f32 %v2385, %v2241
        %v2387 = vand.u32 2147483647, %v2241
        %vm2388 = vcmp.lt.f32.partialorder %v2387, 0.0004427343
        %v2389 = vsel %vm2388, %v2386, %v2383
        %v2390 = vadd.f32 %v2243, 1.0
        %v2391 = vlog2.pop %v2390
        %v2392 = vmul.f32 %v2391, 0.6931472
        %v2393 = vmul.f32 -0.5, %v2243
        %v2394 = vadd.f32 %v2393, 1.0
        %v2395 = vmul.f32 %v2394, %v2243
        %v2396 = vand.u32 2147483647, %v2243
        %vm2397 = vcmp.lt.f32.partialorder %v2396, 0.0004427343
        %v2398 = vsel %vm2397, %v2395, %v2392
        %v2399 = vadd.f32 %v2245, 1.0
        %v2400 = vlog2.pop %v2399
        %v2401 = vmul.f32 %v2400, 0.6931472
        %v2402 = vmul.f32 -0.5, %v2245
        %v2403 = vadd.f32 %v2402, 1.0
        %v2404 = vmul.f32 %v2403, %v2245
        %v2405 = vand.u32 2147483647, %v2245
        %vm2406 = vcmp.lt.f32.partialorder %v2405, 0.0004427343
        %v2407 = vsel %vm2406, %v2404, %v2401
        %v2408 = vadd.f32 %v2247, 1.0
        %v2409 = vlog2.pop %v2408
        %v2410 = vmul.f32 %v2409, 0.6931472
        %v2411 = vmul.f32 -0.5, %v2247
        %v2412 = vadd.f32 %v2411, 1.0
        %v2413 = vmul.f32 %v2412, %v2247
        %v2414 = vand.u32 2147483647, %v2247
        %vm2415 = vcmp.lt.f32.partialorder %v2414, 0.0004427343
        %v2416 = vsel %vm2415, %v2413, %v2410
        %v2417 = vadd.f32 %v2249, 1.0
        %v2418 = vlog2.pop %v2417
        %v2419 = vmul.f32 %v2418, 0.6931472
        %v2420 = vmul.f32 -0.5, %v2249
        %v2421 = vadd.f32 %v2420, 1.0
        %v2422 = vmul.f32 %v2421, %v2249
        %v2423 = vand.u32 2147483647, %v2249
        %vm2424 = vcmp.lt.f32.partialorder %v2423, 0.0004427343
        %v2425 = vsel %vm2424, %v2422, %v2419
        %v2426 = vadd.f32 %v2251, 1.0
        %v2427 = vlog2.pop %v2426
        %v2428 = vmul.f32 %v2427, 0.6931472
        %v2429 = vmul.f32 -0.5, %v2251
        %v2430 = vadd.f32 %v2429, 1.0
        %v2431 = vmul.f32 %v2430, %v2251
        %v2432 = vand.u32 2147483647, %v2251
        %vm2433 = vcmp.lt.f32.partialorder %v2432, 0.0004427343
        %v2434 = vsel %vm2433, %v2431, %v2428
        %v2435 = vadd.f32 %v2253, 1.0
        %v2436 = vlog2.pop %v2435
        %v2437 = vmul.f32 %v2436, 0.6931472
        %v2438 = vmul.f32 -0.5, %v2253
        %v2439 = vadd.f32 %v2438, 1.0
        %v2440 = vmul.f32 %v2439, %v2253
        %v2441 = vand.u32 2147483647, %v2253
        %vm2442 = vcmp.lt.f32.partialorder %v2441, 0.0004427343
        %v2443 = vsel %vm2442, %v2440, %v2437
        %v2444 = vadd.f32 %v2255, 1.0
        %v2445 = vlog2.pop %v2444
        %v2446 = vmul.f32 %v2445, 0.6931472
        %v2447 = vmul.f32 -0.5, %v2255
        %v2448 = vadd.f32 %v2447, 1.0
        %v2449 = vmul.f32 %v2448, %v2255
        %v2450 = vand.u32 2147483647, %v2255
        %vm2451 = vcmp.lt.f32.partialorder %v2450, 0.0004427343
        %v2452 = vsel %vm2451, %v2449, %v2446
        %v2453 = vadd.f32 %v2257, 1.0
        %v2454 = vlog2.pop %v2453
        %v2455 = vmul.f32 %v2454, 0.6931472
        %v2456 = vmul.f32 -0.5, %v2257
        %v2457 = vadd.f32 %v2456, 1.0
        %v2458 = vmul.f32 %v2457, %v2257
        %v2459 = vand.u32 2147483647, %v2257
        %vm2460 = vcmp.lt.f32.partialorder %v2459, 0.0004427343
        %v2461 = vsel %vm2460, %v2458, %v2455
        %v2462 = vadd.f32 %v2259, 1.0
        %v2463 = vlog2.pop %v2462
        %v2464 = vmul.f32 %v2463, 0.6931472
        %v2465 = vmul.f32 -0.5, %v2259
        %v2466 = vadd.f32 %v2465, 1.0
        %v2467 = vmul.f32 %v2466, %v2259
        %v2468 = vand.u32 2147483647, %v2259
        %vm2469 = vcmp.lt.f32.partialorder %v2468, 0.0004427343
        %v2470 = vsel %vm2469, %v2467, %v2464
        %v2471 = vadd.f32 %v2261, 1.0
        %v2472 = vlog2.pop %v2471
        %v2473 = vmul.f32 %v2472, 0.6931472
        %v2474 = vmul.f32 -0.5, %v2261
        %v2475 = vadd.f32 %v2474, 1.0
        %v2476 = vmul.f32 %v2475, %v2261
        %v2477 = vand.u32 2147483647, %v2261
        %vm2478 = vcmp.lt.f32.partialorder %v2477, 0.0004427343
        %v2479 = vsel %vm2478, %v2476, %v2473
        %v2480 = vadd.f32 %v2263, 1.0
        %v2481 = vlog2.pop %v2480
        %v2482 = vmul.f32 %v2481, 0.6931472
        %v2483 = vmul.f32 -0.5, %v2263
        %v2484 = vadd.f32 %v2483, 1.0
        %v2485 = vmul.f32 %v2484, %v2263
        %v2486 = vand.u32 2147483647, %v2263
        %vm2487 = vcmp.lt.f32.partialorder %v2486, 0.0004427343
        %v2488 = vsel %vm2487, %v2485, %v2482
        %v2489 = vadd.f32 %v2265, 1.0
        %v2490 = vlog2.pop %v2489
        %v2491 = vmul.f32 %v2490, 0.6931472
        %v2492 = vmul.f32 -0.5, %v2265
        %v2493 = vadd.f32 %v2492, 1.0
        %v2494 = vmul.f32 %v2493, %v2265
        %v2495 = vand.u32 2147483647, %v2265
        %vm2496 = vcmp.lt.f32.partialorder %v2495, 0.0004427343
        %v2497 = vsel %vm2496, %v2494, %v2491
        %v2498 = vadd.f32 %v2267, 1.0
        %v2499 = vlog2.pop %v2498
        %v2500 = vmul.f32 %v2499, 0.6931472
        %v2501 = vmul.f32 -0.5, %v2267
        %v2502 = vadd.f32 %v2501, 1.0
        %v2503 = vmul.f32 %v2502, %v2267
        %v2504 = vand.u32 2147483647, %v2267
        %vm2505 = vcmp.lt.f32.partialorder %v2504, 0.0004427343
        %v2506 = vsel %vm2505, %v2503, %v2500
        %v2507 = vadd.f32 %v2269, 1.0
        %v2508 = vlog2.pop %v2507
        %v2509 = vmul.f32 %v2508, 0.6931472
        %v2510 = vmul.f32 -0.5, %v2269
        %v2511 = vadd.f32 %v2510, 1.0
        %v2512 = vmul.f32 %v2511, %v2269
        %v2513 = vand.u32 2147483647, %v2269
        %vm2514 = vcmp.lt.f32.partialorder %v2513, 0.0004427343
        %v2515 = vsel %vm2514, %v2512, %v2509
        %v2516 = vadd.f32 %v2271, 1.0
        %v2517 = vlog2.pop %v2516
        %v2518 = vmul.f32 %v2517, 0.6931472
        %v2519 = vmul.f32 -0.5, %v2271
        %v2520 = vadd.f32 %v2519, 1.0
        %v2521 = vmul.f32 %v2520, %v2271
        %v2522 = vand.u32 2147483647, %v2271
        %vm2523 = vcmp.lt.f32.partialorder %v2522, 0.0004427343
        %v2524 = vsel %vm2523, %v2521, %v2518
        %v2525 = vadd.f32 %v2273, 1.0
        %v2526 = vlog2.pop %v2525
        %v2527 = vmul.f32 %v2526, 0.6931472
        %v2528 = vmul.f32 -0.5, %v2273
        %v2529 = vadd.f32 %v2528, 1.0
        %v2530 = vmul.f32 %v2529, %v2273
        %v2531 = vand.u32 2147483647, %v2273
        %vm2532 = vcmp.lt.f32.partialorder %v2531, 0.0004427343
        %v2533 = vsel %vm2532, %v2530, %v2527
        %v2534 = vadd.f32 %v2275, 1.0
        %v2535 = vlog2.pop %v2534
        %v2536 = vmul.f32 %v2535, 0.6931472
        %v2537 = vmul.f32 -0.5, %v2275
        %v2538 = vadd.f32 %v2537, 1.0
        %v2539 = vmul.f32 %v2538, %v2275
        %v2540 = vand.u32 2147483647, %v2275
        %vm2541 = vcmp.lt.f32.partialorder %v2540, 0.0004427343
        %v2542 = vsel %vm2541, %v2539, %v2536
        %v2543 = vadd.f32 %v2277, 1.0
        %v2544 = vlog2.pop %v2543
        %v2545 = vmul.f32 %v2544, 0.6931472
        %v2546 = vmul.f32 -0.5, %v2277
        %v2547 = vadd.f32 %v2546, 1.0
        %v2548 = vmul.f32 %v2547, %v2277
        %v2549 = vand.u32 2147483647, %v2277
        %vm2550 = vcmp.lt.f32.partialorder %v2549, 0.0004427343
        %v2551 = vsel %vm2550, %v2548, %v2545
        %v2552 = vadd.f32 %v2279, 1.0
        %v2553 = vlog2.pop %v2552
        %v2554 = vmul.f32 %v2553, 0.6931472
        %v2555 = vmul.f32 -0.5, %v2279
        %v2556 = vadd.f32 %v2555, 1.0
        %v2557 = vmul.f32 %v2556, %v2279
        %v2558 = vand.u32 2147483647, %v2279
        %vm2559 = vcmp.lt.f32.partialorder %v2558, 0.0004427343
        %v2560 = vsel %vm2559, %v2557, %v2554
        %v2561 = vadd.f32 %v2281, 1.0
        %v2562 = vlog2.pop %v2561
        %v2563 = vmul.f32 %v2562, 0.6931472
        %v2564 = vmul.f32 -0.5, %v2281
        %v2565 = vadd.f32 %v2564, 1.0
        %v2566 = vmul.f32 %v2565, %v2281
        %v2567 = vand.u32 2147483647, %v2281
        %vm2568 = vcmp.lt.f32.partialorder %v2567, 0.0004427343
        %v2569 = vsel %vm2568, %v2566, %v2563
        %v2570 = vadd.f32 %v2122, %v2290
        %v2571 = vadd.f32 %v2123, %v2299
        %v2572 = vadd.f32 %v2124, %v2308
        %v2573 = vadd.f32 %v2125, %v2317
        %v2574 = vadd.f32 %v2126, %v2326
        %v2575 = vadd.f32 %v2127, %v2335
        %v2576 = vadd.f32 %v2128, %v2344
        %v2577 = vadd.f32 %v2129, %v2353
        %v2578 = vadd.f32 %v2130, %v2362
        %v2579 = vadd.f32 %v2131, %v2371
        %v2580 = vadd.f32 %v2132, %v2380
        %v2581 = vadd.f32 %v2133, %v2389
        %v2582 = vadd.f32 %v2134, %v2398
        %v2583 = vadd.f32 %v2135, %v2407
        %v2584 = vadd.f32 %v2136, %v2416
        %v2585 = vadd.f32 %v2137, %v2425
        %v2586 = vadd.f32 %v2138, %v2434
        %v2587 = vadd.f32 %v2139, %v2443
        %v2588 = vadd.f32 %v2140, %v2452
        %v2589 = vadd.f32 %v2141, %v2461
        %v2590 = vadd.f32 %v2142, %v2470
        %v2591 = vadd.f32 %v2143, %v2479
        %v2592 = vadd.f32 %v2144, %v2488
        %v2593 = vadd.f32 %v2145, %v2497
        %v2594 = vadd.f32 %v2146, %v2506
        %v2595 = vadd.f32 %v2147, %v2515
        %v2596 = vadd.f32 %v2148, %v2524
        %v2597 = vadd.f32 %v2149, %v2533
        %v2598 = vadd.f32 %v2150, %v2542
        %v2599 = vadd.f32 %v2151, %v2551
        %v2600 = vadd.f32 %v2152, %v2560
        %v2601 = vadd.f32 %v2153, %v2569
        %v2602 = vpack.c.bf16 %v2572, %v2570
        %v2603 = vpack.c.bf16 %v2573, %v2571
        %v2604 = vpack.c.bf16 %v2576, %v2574
        %v2605 = vpack.c.bf16 %v2577, %v2575
        %v2606 = vpack.c.bf16 %v2580, %v2578
        %v2607 = vpack.c.bf16 %v2581, %v2579
        %v2608 = vpack.c.bf16 %v2584, %v2582
        %v2609 = vpack.c.bf16 %v2585, %v2583
        %v2610 = vpack.c.bf16 %v2588, %v2586
        %v2611 = vpack.c.bf16 %v2589, %v2587
        %v2612 = vpack.c.bf16 %v2592, %v2590
        %v2613 = vpack.c.bf16 %v2593, %v2591
        %v2614 = vpack.c.bf16 %v2596, %v2594
        %v2615 = vpack.c.bf16 %v2597, %v2595
        %v2616 = vpack.c.bf16 %v2600, %v2598
        %v2617 = vpack.c.bf16 %v2601, %v2599
        %v2618 = vld [vmem:[#allocation11] sm:$0xff]
        %v2619 = vld [vmem:[#allocation11 + $0x8] sm:$0xff]
        %v2620 = vld [vmem:[#allocation11 + $0x10] sm:$0xff]
        %v2621 = vld [vmem:[#allocation11 + $0x18] sm:$0xff]
        %v2622 = vld [vmem:[#allocation11 + $0x20] sm:$0xff]
        %v2623 = vld [vmem:[#allocation11 + $0x28] sm:$0xff]
        %v2624 = vld [vmem:[#allocation11 + $0x30] sm:$0xff]
        %v2625 = vld [vmem:[#allocation11 + $0x38] sm:$0xff]
        %v2626 = vld [vmem:[#allocation11 + $0x40] sm:$0xff]
        %v2627 = vld [vmem:[#allocation11 + $0x48] sm:$0xff]
        %v2628 = vld [vmem:[#allocation11 + $0x50] sm:$0xff]
        %v2629 = vld [vmem:[#allocation11 + $0x58] sm:$0xff]
        %v2630 = vld [vmem:[#allocation11 + $0x60] sm:$0xff]
        %v2631 = vld [vmem:[#allocation11 + $0x68] sm:$0xff]
        %v2632 = vld [vmem:[#allocation11 + $0x70] sm:$0xff]
        %v2633 = vld [vmem:[#allocation11 + $0x78] sm:$0xff]
        %v2634 = vld [vmem:[#allocation11 + $0x80] sm:$0xff]
        %v2635 = vld [vmem:[#allocation11 + $0x88] sm:$0xff]
        %v2636 = vld [vmem:[#allocation11 + $0x90] sm:$0xff]
        %v2637 = vld [vmem:[#allocation11 + $0x98] sm:$0xff]
        %v2638 = vld [vmem:[#allocation11 + $0xa0] sm:$0xff]
        %v2639 = vld [vmem:[#allocation11 + $0xa8] sm:$0xff]
        %v2640 = vld [vmem:[#allocation11 + $0xb0] sm:$0xff]
        %v2641 = vld [vmem:[#allocation11 + $0xb8] sm:$0xff]
        %v2642 = vld [vmem:[#allocation11 + $0xc0] sm:$0xff]
        %v2643 = vld [vmem:[#allocation11 + $0xc8] sm:$0xff]
        %v2644 = vld [vmem:[#allocation11 + $0xd0] sm:$0xff]
        %v2645 = vld [vmem:[#allocation11 + $0xd8] sm:$0xff]
        %v2646 = vld [vmem:[#allocation11 + $0xe0] sm:$0xff]
        %v2647 = vld [vmem:[#allocation11 + $0xe8] sm:$0xff]
        %v2648 = vld [vmem:[#allocation11 + $0xf0] sm:$0xff]
        %v2649 = vld [vmem:[#allocation11 + $0xf8] sm:$0xff]
        %v2650 = vld [vmem:[%s9] sm:$0x3]
        %v2652 = vlaneseq
        %v2653 = vshrl.u32 %v2652, 7
        %v2654 = vsub.s32 0, %v2653
        %v2655 = vrot.slane %v2650, %v2654
        %v2656 = vlaneseq
        %v2657 = vshrl.u32 %v2656, 7
        %v2658 = vsub.s32 1, %v2657
        %v2659 = vrot.slane %v2650, %v2658
        %v2694 = vunpack.c.l.b16 %v2618
        %v2695 = vunpack.c.h.b16 %v2618
        %v2696 = vunpack.c.l.b16 %v2619
        %v2697 = vunpack.c.h.b16 %v2619
        %v2698 = vunpack.c.l.b16 %v2620
        %v2699 = vunpack.c.h.b16 %v2620
        %v2700 = vunpack.c.l.b16 %v2621
        %v2701 = vunpack.c.h.b16 %v2621
        %v2702 = vunpack.c.l.b16 %v2622
        %v2703 = vunpack.c.h.b16 %v2622
        %v2704 = vunpack.c.l.b16 %v2623
        %v2705 = vunpack.c.h.b16 %v2623
        %v2706 = vunpack.c.l.b16 %v2624
        %v2707 = vunpack.c.h.b16 %v2624
        %v2708 = vunpack.c.l.b16 %v2625
        %v2709 = vunpack.c.h.b16 %v2625
        %v2710 = vunpack.c.l.b16 %v2626
        %v2711 = vunpack.c.h.b16 %v2626
        %v2712 = vunpack.c.l.b16 %v2627
        %v2713 = vunpack.c.h.b16 %v2627
        %v2714 = vunpack.c.l.b16 %v2628
        %v2715 = vunpack.c.h.b16 %v2628
        %v2716 = vunpack.c.l.b16 %v2629
        %v2717 = vunpack.c.h.b16 %v2629
        %v2718 = vunpack.c.l.b16 %v2630
        %v2719 = vunpack.c.h.b16 %v2630
        %v2720 = vunpack.c.l.b16 %v2631
        %v2721 = vunpack.c.h.b16 %v2631
        %v2722 = vunpack.c.l.b16 %v2632
        %v2723 = vunpack.c.h.b16 %v2632
        %v2724 = vunpack.c.l.b16 %v2633
        %v2725 = vunpack.c.h.b16 %v2633
        %v2726 = vunpack.c.l.b16 %v2634
        %v2727 = vunpack.c.h.b16 %v2634
        %v2728 = vunpack.c.l.b16 %v2635
        %v2729 = vunpack.c.h.b16 %v2635
        %v2730 = vunpack.c.l.b16 %v2636
        %v2731 = vunpack.c.h.b16 %v2636
        %v2732 = vunpack.c.l.b16 %v2637
        %v2733 = vunpack.c.h.b16 %v2637
        %v2734 = vunpack.c.l.b16 %v2638
        %v2735 = vunpack.c.h.b16 %v2638
        %v2736 = vunpack.c.l.b16 %v2639
        %v2737 = vunpack.c.h.b16 %v2639
        %v2738 = vunpack.c.l.b16 %v2640
        %v2739 = vunpack.c.h.b16 %v2640
        %v2740 = vunpack.c.l.b16 %v2641
        %v2741 = vunpack.c.h.b16 %v2641
        %v2742 = vunpack.c.l.b16 %v2642
        %v2743 = vunpack.c.h.b16 %v2642
        %v2744 = vunpack.c.l.b16 %v2643
        %v2745 = vunpack.c.h.b16 %v2643
        %v2746 = vunpack.c.l.b16 %v2644
        %v2747 = vunpack.c.h.b16 %v2644
        %v2748 = vunpack.c.l.b16 %v2645
        %v2749 = vunpack.c.h.b16 %v2645
        %v2750 = vunpack.c.l.b16 %v2646
        %v2751 = vunpack.c.h.b16 %v2646
        %v2752 = vunpack.c.l.b16 %v2647
        %v2753 = vunpack.c.h.b16 %v2647
        %v2754 = vunpack.c.l.b16 %v2648
        %v2755 = vunpack.c.h.b16 %v2648
        %v2756 = vunpack.c.l.b16 %v2649
        %v2757 = vunpack.c.h.b16 %v2649
        %v2758 = vpack.c.b16 %v2696, %v2694
        %v2759 = vpack.c.b16 %v2697, %v2695
        %v2760 = vpack.c.b16 %v2700, %v2698
        %v2761 = vpack.c.b16 %v2701, %v2699
        %v2762 = vpack.c.b16 %v2704, %v2702
        %v2763 = vpack.c.b16 %v2705, %v2703
        %v2764 = vpack.c.b16 %v2708, %v2706
        %v2765 = vpack.c.b16 %v2709, %v2707
        %v2766 = vpack.c.b16 %v2712, %v2710
        %v2767 = vpack.c.b16 %v2713, %v2711
        %v2768 = vpack.c.b16 %v2716, %v2714
        %v2769 = vpack.c.b16 %v2717, %v2715
        %v2770 = vpack.c.b16 %v2720, %v2718
        %v2771 = vpack.c.b16 %v2721, %v2719
        %v2772 = vpack.c.b16 %v2724, %v2722
        %v2773 = vpack.c.b16 %v2725, %v2723
        %v2774 = vpack.c.b16 %v2728, %v2726
        %v2775 = vpack.c.b16 %v2729, %v2727
        %v2776 = vpack.c.b16 %v2732, %v2730
        %v2777 = vpack.c.b16 %v2733, %v2731
        %v2778 = vpack.c.b16 %v2736, %v2734
        %v2779 = vpack.c.b16 %v2737, %v2735
        %v2780 = vpack.c.b16 %v2740, %v2738
        %v2781 = vpack.c.b16 %v2741, %v2739
        %v2782 = vpack.c.b16 %v2744, %v2742
        %v2783 = vpack.c.b16 %v2745, %v2743
        %v2784 = vpack.c.b16 %v2748, %v2746
        %v2785 = vpack.c.b16 %v2749, %v2747
        %v2786 = vpack.c.b16 %v2752, %v2750
        %v2787 = vpack.c.b16 %v2753, %v2751
        %v2788 = vpack.c.b16 %v2756, %v2754
        %v2789 = vpack.c.b16 %v2757, %v2755
        %2822 = vmatprep.subr.bf16.mxu0 %v2773
        %2823 = vmatpush1.bf16.msra.mxu0 %v2772
        %2824 = vmatprep.subr.bf16.mxu0 %v2771
        %2825 = vmatpush1.bf16.msra.mxu0 %v2770
        %2826 = vmatprep.subr.bf16.mxu0 %v2769
        %2827 = vmatpush1.bf16.msra.mxu0 %v2768
        %2828 = vmatprep.subr.bf16.mxu0 %v2767
        %2829 = vmatpush1.bf16.msra.mxu0 %v2766
        %2830 = vmatprep.subr.bf16.mxu0 %v2765
        %2831 = vmatpush1.bf16.msra.mxu0 %v2764
        %2832 = vmatprep.subr.bf16.mxu0 %v2763
        %2833 = vmatpush1.bf16.msra.mxu0 %v2762
        %2834 = vmatprep.subr.bf16.mxu0 %v2761
        %2835 = vmatpush1.bf16.msra.mxu0 %v2760
        %2836 = vmatprep.subr.bf16.mxu0 %v2759
        %2837 = vmatpush1.bf16.msra.mxu0 %v2758
        %2838 = vmatprep.subr.bf16.mxu0 %v2789
        %2839 = vmatpush2.bf16.msra.mxu0 %v2788
        %2840 = vmatprep.subr.bf16.mxu0 %v2787
        %2841 = vmatpush2.bf16.msra.mxu0 %v2786
        %2842 = vmatprep.subr.bf16.mxu0 %v2785
        %2843 = vmatpush2.bf16.msra.mxu0 %v2784
        %2844 = vmatprep.subr.bf16.mxu0 %v2783
        %2845 = vmatpush2.bf16.msra.mxu0 %v2782
        %2846 = vmatprep.subr.bf16.mxu0 %v2781
        %2847 = vmatpush2.bf16.msra.mxu0 %v2780
        %2848 = vmatprep.subr.bf16.mxu0 %v2779
        %2849 = vmatpush2.bf16.msra.mxu0 %v2778
        %2850 = vmatprep.subr.bf16.mxu0 %v2777
        %2851 = vmatpush2.bf16.msra.mxu0 %v2776
        %2852 = vmatprep.subr.bf16.mxu0 %v2775
        %2853 = vmatpush2.bf16.msra.mxu0 %v2774
        %2854 = vmatprep.mubr.bf16.mxu0 %v2603
        %2855 = vmatmul.mubr.bf16.gmra.mxu0 %v2602
        %v2856 = vpop.f32.mrf.mxu0
        %v2857 = vadd.f32 %v2655, %v2856
        %v2858 = vpop.f32.mrf.mxu0
        %v2859 = vadd.f32 %v2659, %v2858
        %v2860 = vpop.f32.mrf.mxu0
        %v2861 = vadd.f32 %v2655, %v2860
        %v2862 = vpop.f32.mrf.mxu0
        %v2863 = vadd.f32 %v2659, %v2862
        %2864 = vmatprep.mubr.bf16.mxu0 %v2605
        %2865 = vmatmul.mubr.bf16.gmra.mxu0 %v2604
        %v2866 = vpop.f32.mrf.mxu0
        %v2867 = vadd.f32 %v2655, %v2866
        %v2868 = vpop.f32.mrf.mxu0
        %v2869 = vadd.f32 %v2659, %v2868
        %v2870 = vpop.f32.mrf.mxu0
        %v2871 = vadd.f32 %v2655, %v2870
        %v2872 = vpop.f32.mrf.mxu0
        %v2873 = vadd.f32 %v2659, %v2872
        %2874 = vmatprep.mubr.bf16.mxu0 %v2607
        %2875 = vmatmul.mubr.bf16.gmra.mxu0 %v2606
        %v2876 = vpop.f32.mrf.mxu0
        %v2877 = vadd.f32 %v2655, %v2876
        %v2878 = vpop.f32.mrf.mxu0
        %v2879 = vadd.f32 %v2659, %v2878
        %v2880 = vpop.f32.mrf.mxu0
        %v2881 = vadd.f32 %v2655, %v2880
        %v2882 = vpop.f32.mrf.mxu0
        %v2883 = vadd.f32 %v2659, %v2882
        %2884 = vmatprep.mubr.bf16.mxu0 %v2609
        %2885 = vmatmul.mubr.bf16.gmra.mxu0 %v2608
        %v2886 = vpop.f32.mrf.mxu0
        %v2887 = vadd.f32 %v2655, %v2886
        %v2888 = vpop.f32.mrf.mxu0
        %v2889 = vadd.f32 %v2659, %v2888
        %v2890 = vpop.f32.mrf.mxu0
        %v2891 = vadd.f32 %v2655, %v2890
        %v2892 = vpop.f32.mrf.mxu0
        %v2893 = vadd.f32 %v2659, %v2892
        %2894 = vmatprep.mubr.bf16.mxu0 %v2611
        %2895 = vmatmul.mubr.bf16.gmra.mxu0 %v2610
        %v2896 = vpop.f32.mrf.mxu0
        %v2897 = vadd.f32 %v2655, %v2896
        %v2898 = vpop.f32.mrf.mxu0
        %v2899 = vadd.f32 %v2659, %v2898
        %v2900 = vpop.f32.mrf.mxu0
        %v2901 = vadd.f32 %v2655, %v2900
        %v2902 = vpop.f32.mrf.mxu0
        %v2903 = vadd.f32 %v2659, %v2902
        %2904 = vmatprep.mubr.bf16.mxu0 %v2613
        %2905 = vmatmul.mubr.bf16.gmra.mxu0 %v2612
        %v2906 = vpop.f32.mrf.mxu0
        %v2907 = vadd.f32 %v2655, %v2906
        %v2908 = vpop.f32.mrf.mxu0
        %v2909 = vadd.f32 %v2659, %v2908
        %v2910 = vpop.f32.mrf.mxu0
        %v2911 = vadd.f32 %v2655, %v2910
        %v2912 = vpop.f32.mrf.mxu0
        %v2913 = vadd.f32 %v2659, %v2912
        %2914 = vmatprep.mubr.bf16.mxu0 %v2615
        %2915 = vmatmul.mubr.bf16.gmra.mxu0 %v2614
        %v2916 = vpop.f32.mrf.mxu0
        %v2917 = vadd.f32 %v2655, %v2916
        %v2918 = vpop.f32.mrf.mxu0
        %v2919 = vadd.f32 %v2659, %v2918
        %v2920 = vpop.f32.mrf.mxu0
        %v2921 = vadd.f32 %v2655, %v2920
        %v2922 = vpop.f32.mrf.mxu0
        %v2923 = vadd.f32 %v2659, %v2922
        %2924 = vmatprep.mubr.bf16.mxu0 %v2617
        %2925 = vmatmul.mubr.bf16.gmra.mxu0 %v2616
        %v2926 = vpop.f32.mrf.mxu0
        %v2927 = vadd.f32 %v2655, %v2926
        %v2928 = vpop.f32.mrf.mxu0
        %v2929 = vadd.f32 %v2659, %v2928
        %v2930 = vpop.f32.mrf.mxu0
        %v2931 = vadd.f32 %v2655, %v2930
        %v2932 = vpop.f32.mrf.mxu0
        %v2933 = vadd.f32 %v2659, %v2932
        %2934 = vdwg.mxu0
        %v2935 = vsub.f32 0.0, %v2857
        %v2936 = vsub.f32 0.0, %v2859
        %v2937 = vsub.f32 0.0, %v2861
        %v2938 = vsub.f32 0.0, %v2863
        %v2939 = vsub.f32 0.0, %v2867
        %v2940 = vsub.f32 0.0, %v2869
        %v2941 = vsub.f32 0.0, %v2871
        %v2942 = vsub.f32 0.0, %v2873
        %v2943 = vsub.f32 0.0, %v2877
        %v2944 = vsub.f32 0.0, %v2879
        %v2945 = vsub.f32 0.0, %v2881
        %v2946 = vsub.f32 0.0, %v2883
        %v2947 = vsub.f32 0.0, %v2887
        %v2948 = vsub.f32 0.0, %v2889
        %v2949 = vsub.f32 0.0, %v2891
        %v2950 = vsub.f32 0.0, %v2893
        %v2951 = vsub.f32 0.0, %v2897
        %v2952 = vsub.f32 0.0, %v2899
        %v2953 = vsub.f32 0.0, %v2901
        %v2954 = vsub.f32 0.0, %v2903
        %v2955 = vsub.f32 0.0, %v2907
        %v2956 = vsub.f32 0.0, %v2909
        %v2957 = vsub.f32 0.0, %v2911
        %v2958 = vsub.f32 0.0, %v2913
        %v2959 = vsub.f32 0.0, %v2917
        %v2960 = vsub.f32 0.0, %v2919
        %v2961 = vsub.f32 0.0, %v2921
        %v2962 = vsub.f32 0.0, %v2923
        %v2963 = vsub.f32 0.0, %v2927
        %v2964 = vsub.f32 0.0, %v2929
        %v2965 = vsub.f32 0.0, %v2931
        %v2966 = vsub.f32 0.0, %v2933
        %v2967 = vmul.f32 %v2935, 1.442695
        %v2968 = vpow.pop %v2967
        %v2969 = vmul.f32 %v2936, 1.442695
        %v2970 = vpow.pop %v2969
        %v2971 = vmul.f32 %v2937, 1.442695
        %v2972 = vpow.pop %v2971
        %v2973 = vmul.f32 %v2938, 1.442695
        %v2974 = vpow.pop %v2973
        %v2975 = vmul.f32 %v2939, 1.442695
        %v2976 = vpow.pop %v2975
        %v2977 = vmul.f32 %v2940, 1.442695
        %v2978 = vpow.pop %v2977
        %v2979 = vmul.f32 %v2941, 1.442695
        %v2980 = vpow.pop %v2979
        %v2981 = vmul.f32 %v2942, 1.442695
        %v2982 = vpow.pop %v2981
        %v2983 = vmul.f32 %v2943, 1.442695
        %v2984 = vpow.pop %v2983
        %v2985 = vmul.f32 %v2944, 1.442695
        %v2986 = vpow.pop %v2985
        %v2987 = vmul.f32 %v2945, 1.442695
        %v2988 = vpow.pop %v2987
        %v2989 = vmul.f32 %v2946, 1.442695
        %v2990 = vpow.pop %v2989
        %v2991 = vmul.f32 %v2947, 1.442695
        %v2992 = vpow.pop %v2991
        %v2993 = vmul.f32 %v2948, 1.442695
        %v2994 = vpow.pop %v2993
        %v2995 = vmul.f32 %v2949, 1.442695
        %v2996 = vpow.pop %v2995
        %v2997 = vmul.f32 %v2950, 1.442695
        %v2998 = vpow.pop %v2997
        %v2999 = vmul.f32 %v2951, 1.442695
        %v3000 = vpow.pop %v2999
        %v3001 = vmul.f32 %v2952, 1.442695
        %v3002 = vpow.pop %v3001
        %v3003 = vmul.f32 %v2953, 1.442695
        %v3004 = vpow.pop %v3003
        %v3005 = vmul.f32 %v2954, 1.442695
        %v3006 = vpow.pop %v3005
        %v3007 = vmul.f32 %v2955, 1.442695
        %v3008 = vpow.pop %v3007
        %v3009 = vmul.f32 %v2956, 1.442695
        %v3010 = vpow.pop %v3009
        %v3011 = vmul.f32 %v2957, 1.442695
        %v3012 = vpow.pop %v3011
        %v3013 = vmul.f32 %v2958, 1.442695
        %v3014 = vpow.pop %v3013
        %v3015 = vmul.f32 %v2959, 1.442695
        %v3016 = vpow.pop %v3015
        %v3017 = vmul.f32 %v2960, 1.442695
        %v3018 = vpow.pop %v3017
        %v3019 = vmul.f32 %v2961, 1.442695
        %v3020 = vpow.pop %v3019
        %v3021 = vmul.f32 %v2962, 1.442695
        %v3022 = vpow.pop %v3021
        %v3023 = vmul.f32 %v2963, 1.442695
        %v3024 = vpow.pop %v3023
        %v3025 = vmul.f32 %v2964, 1.442695
        %v3026 = vpow.pop %v3025
        %v3027 = vmul.f32 %v2965, 1.442695
        %v3028 = vpow.pop %v3027
        %v3029 = vmul.f32 %v2966, 1.442695
        %v3030 = vpow.pop %v3029
        %v3031 = vadd.f32 %v2968, 1.0
        %v3032 = vadd.f32 %v2970, 1.0
        %v3033 = vadd.f32 %v2972, 1.0
        %v3034 = vadd.f32 %v2974, 1.0
        %v3035 = vadd.f32 %v2976, 1.0
        %v3036 = vadd.f32 %v2978, 1.0
        %v3037 = vadd.f32 %v2980, 1.0
        %v3038 = vadd.f32 %v2982, 1.0
        %v3039 = vadd.f32 %v2984, 1.0
        %v3040 = vadd.f32 %v2986, 1.0
        %v3041 = vadd.f32 %v2988, 1.0
        %v3042 = vadd.f32 %v2990, 1.0
        %v3043 = vadd.f32 %v2992, 1.0
        %v3044 = vadd.f32 %v2994, 1.0
        %v3045 = vadd.f32 %v2996, 1.0
        %v3046 = vadd.f32 %v2998, 1.0
        %v3047 = vadd.f32 %v3000, 1.0
        %v3048 = vadd.f32 %v3002, 1.0
        %v3049 = vadd.f32 %v3004, 1.0
        %v3050 = vadd.f32 %v3006, 1.0
        %v3051 = vadd.f32 %v3008, 1.0
        %v3052 = vadd.f32 %v3010, 1.0
        %v3053 = vadd.f32 %v3012, 1.0
        %v3054 = vadd.f32 %v3014, 1.0
        %v3055 = vadd.f32 %v3016, 1.0
        %v3056 = vadd.f32 %v3018, 1.0
        %v3057 = vadd.f32 %v3020, 1.0
        %v3058 = vadd.f32 %v3022, 1.0
        %v3059 = vadd.f32 %v3024, 1.0
        %v3060 = vadd.f32 %v3026, 1.0
        %v3061 = vadd.f32 %v3028, 1.0
        %v3062 = vadd.f32 %v3030, 1.0
        %v3063 = vrcp.pop %v3031
        %v3064 = vmul.f32 1.0, %v3063
        %v3065 = vrcp.pop %v3032
        %v3066 = vmul.f32 1.0, %v3065
        %v3067 = vrcp.pop %v3033
        %v3068 = vmul.f32 1.0, %v3067
        %v3069 = vrcp.pop %v3034
        %v3070 = vmul.f32 1.0, %v3069
        %v3071 = vrcp.pop %v3035
        %v3072 = vmul.f32 1.0, %v3071
        %v3073 = vrcp.pop %v3036
        %v3074 = vmul.f32 1.0, %v3073
        %v3075 = vrcp.pop %v3037
        %v3076 = vmul.f32 1.0, %v3075
        %v3077 = vrcp.pop %v3038
        %v3078 = vmul.f32 1.0, %v3077
        %v3079 = vrcp.pop %v3039
        %v3080 = vmul.f32 1.0, %v3079
        %v3081 = vrcp.pop %v3040
        %v3082 = vmul.f32 1.0, %v3081
        %v3083 = vrcp.pop %v3041
        %v3084 = vmul.f32 1.0, %v3083
        %v3085 = vrcp.pop %v3042
        %v3086 = vmul.f32 1.0, %v3085
        %v3087 = vrcp.pop %v3043
        %v3088 = vmul.f32 1.0, %v3087
        %v3089 = vrcp.pop %v3044
        %v3090 = vmul.f32 1.0, %v3089
        %v3091 = vrcp.pop %v3045
        %v3092 = vmul.f32 1.0, %v3091
        %v3093 = vrcp.pop %v3046
        %v3094 = vmul.f32 1.0, %v3093
        %v3095 = vrcp.pop %v3047
        %v3096 = vmul.f32 1.0, %v3095
        %v3097 = vrcp.pop %v3048
        %v3098 = vmul.f32 1.0, %v3097
        %v3099 = vrcp.pop %v3049
        %v3100 = vmul.f32 1.0, %v3099
        %v3101 = vrcp.pop %v3050
        %v3102 = vmul.f32 1.0, %v3101
        %v3103 = vrcp.pop %v3051
        %v3104 = vmul.f32 1.0, %v3103
        %v3105 = vrcp.pop %v3052
        %v3106 = vmul.f32 1.0, %v3105
        %v3107 = vrcp.pop %v3053
        %v3108 = vmul.f32 1.0, %v3107
        %v3109 = vrcp.pop %v3054
        %v3110 = vmul.f32 1.0, %v3109
        %v3111 = vrcp.pop %v3055
        %v3112 = vmul.f32 1.0, %v3111
        %v3113 = vrcp.pop %v3056
        %v3114 = vmul.f32 1.0, %v3113
        %v3115 = vrcp.pop %v3057
        %v3116 = vmul.f32 1.0, %v3115
        %v3117 = vrcp.pop %v3058
        %v3118 = vmul.f32 1.0, %v3117
        %v3119 = vrcp.pop %v3059
        %v3120 = vmul.f32 1.0, %v3119
        %v3121 = vrcp.pop %v3060
        %v3122 = vmul.f32 1.0, %v3121
        %v3123 = vrcp.pop %v3061
        %v3124 = vmul.f32 1.0, %v3123
        %v3125 = vrcp.pop %v3062
        %v3126 = vmul.f32 1.0, %v3125
        %v3127 = vpack.c.bf16 %v3068, %v3064
        %v3128 = vpack.c.bf16 %v3070, %v3066
        %v3129 = vpack.c.bf16 %v3076, %v3072
        %v3130 = vpack.c.bf16 %v3078, %v3074
        %v3131 = vpack.c.bf16 %v3084, %v3080
        %v3132 = vpack.c.bf16 %v3086, %v3082
        %v3133 = vpack.c.bf16 %v3092, %v3088
        %v3134 = vpack.c.bf16 %v3094, %v3090
        %v3135 = vpack.c.bf16 %v3100, %v3096
        %v3136 = vpack.c.bf16 %v3102, %v3098
        %v3137 = vpack.c.bf16 %v3108, %v3104
        %v3138 = vpack.c.bf16 %v3110, %v3106
        %v3139 = vpack.c.bf16 %v3116, %v3112
        %v3140 = vpack.c.bf16 %v3118, %v3114
        %v3141 = vpack.c.bf16 %v3124, %v3120
        %v3142 = vpack.c.bf16 %v3126, %v3122
        %v3159 = vunpack.c.l.b16 %v3127
        %v3160 = vunpack.c.l.b16 %v3128
        %v3161 = vunpack.c.h.b16 %v3127
        %v3162 = vunpack.c.h.b16 %v3128
        %v3163 = vunpack.c.l.b16 %v3129
        %v3164 = vunpack.c.l.b16 %v3130
        %v3165 = vunpack.c.h.b16 %v3129
        %v3166 = vunpack.c.h.b16 %v3130
        %v3167 = vunpack.c.l.b16 %v3131
        %v3168 = vunpack.c.l.b16 %v3132
        %v3169 = vunpack.c.h.b16 %v3131
        %v3170 = vunpack.c.h.b16 %v3132
        %v3171 = vunpack.c.l.b16 %v3133
        %v3172 = vunpack.c.l.b16 %v3134
        %v3173 = vunpack.c.h.b16 %v3133
        %v3174 = vunpack.c.h.b16 %v3134
        %v3175 = vunpack.c.l.b16 %v3135
        %v3176 = vunpack.c.l.b16 %v3136
        %v3177 = vunpack.c.h.b16 %v3135
        %v3178 = vunpack.c.h.b16 %v3136
        %v3179 = vunpack.c.l.b16 %v3137
        %v3180 = vunpack.c.l.b16 %v3138
        %v3181 = vunpack.c.h.b16 %v3137
        %v3182 = vunpack.c.h.b16 %v3138
        %v3183 = vunpack.c.l.b16 %v3139
        %v3184 = vunpack.c.l.b16 %v3140
        %v3185 = vunpack.c.h.b16 %v3139
        %v3186 = vunpack.c.h.b16 %v3140
        %v3187 = vunpack.c.l.b16 %v3141
        %v3188 = vunpack.c.l.b16 %v3142
        %v3189 = vunpack.c.h.b16 %v3141
        %v3190 = vunpack.c.h.b16 %v3142
        %v3191 = vpack.c.b16 %v3160, %v3159
        %v3192 = vpack.c.b16 %v3162, %v3161
        %v3193 = vpack.c.b16 %v3164, %v3163
        %v3194 = vpack.c.b16 %v3166, %v3165
        %v3195 = vpack.c.b16 %v3168, %v3167
        %v3196 = vpack.c.b16 %v3170, %v3169
        %v3197 = vpack.c.b16 %v3172, %v3171
        %v3198 = vpack.c.b16 %v3174, %v3173
        %v3199 = vpack.c.b16 %v3176, %v3175
        %v3200 = vpack.c.b16 %v3178, %v3177
        %v3201 = vpack.c.b16 %v3180, %v3179
        %v3202 = vpack.c.b16 %v3182, %v3181
        %v3203 = vpack.c.b16 %v3184, %v3183
        %v3204 = vpack.c.b16 %v3186, %v3185
        %v3205 = vpack.c.b16 %v3188, %v3187
        %v3206 = vpack.c.b16 %v3190, %v3189
        %3223 = vst [vmem:[%s534] sm:$0xff] %v3191
        %3224 = vst [vmem:[%s534 + $0x8] sm:$0xff] %v3192
        %3225 = vst [vmem:[%s534 + $0x10] sm:$0xff] %v3193
        %3226 = vst [vmem:[%s534 + $0x18] sm:$0xff] %v3194
        %3227 = vst [vmem:[%s534 + $0x20] sm:$0xff] %v3195
        %3228 = vst [vmem:[%s534 + $0x28] sm:$0xff] %v3196
        %3229 = vst [vmem:[%s534 + $0x30] sm:$0xff] %v3197
        %3230 = vst [vmem:[%s534 + $0x38] sm:$0xff] %v3198
        %3231 = vst [vmem:[%s534 + $0x40] sm:$0xff] %v3199
        %3232 = vst [vmem:[%s534 + $0x48] sm:$0xff] %v3200
        %3233 = vst [vmem:[%s534 + $0x50] sm:$0xff] %v3201
        %3234 = vst [vmem:[%s534 + $0x58] sm:$0xff] %v3202
        %3235 = vst [vmem:[%s534 + $0x60] sm:$0xff] %v3203
        %3236 = vst [vmem:[%s534 + $0x68] sm:$0xff] %v3204
        %3237 = vst [vmem:[%s534 + $0x70] sm:$0xff] %v3205
        %3238 = vst [vmem:[%s534 + $0x78] sm:$0xff] %v3206
        %3239 = vst [vmem:[%s541] sm:$0xff] %v1735
        %3240 = vst [vmem:[%s541 + $0x8] sm:$0xff] %v1739
        %3241 = vst [vmem:[%s541 + $0x10] sm:$0xff] %v1745
        %3242 = vst [vmem:[%s541 + $0x18] sm:$0xff] %v1749
        %3243 = vst [vmem:[%s541 + $0x20] sm:$0xff] %v1755
        %3244 = vst [vmem:[%s541 + $0x28] sm:$0xff] %v1759
        %3245 = vst [vmem:[%s541 + $0x30] sm:$0xff] %v1765
        %3246 = vst [vmem:[%s541 + $0x38] sm:$0xff] %v1769
        %3247 = vst [vmem:[%s541 + $0x40] sm:$0xff] %v1775
        %3248 = vst [vmem:[%s541 + $0x48] sm:$0xff] %v1779
        %3249 = vst [vmem:[%s541 + $0x50] sm:$0xff] %v1785
        %3250 = vst [vmem:[%s541 + $0x58] sm:$0xff] %v1789
        %3251 = vst [vmem:[%s541 + $0x60] sm:$0xff] %v1795
        %3252 = vst [vmem:[%s541 + $0x68] sm:$0xff] %v1799
        %3253 = vst [vmem:[%s541 + $0x70] sm:$0xff] %v1805
        %3254 = vst [vmem:[%s541 + $0x78] sm:$0xff] %v1809
        %3255 = vst [vmem:[%s548] sm:$0xff] %v1737
        %3256 = vst [vmem:[%s548 + $0x8] sm:$0xff] %v1741
        %3257 = vst [vmem:[%s548 + $0x10] sm:$0xff] %v1747
        %3258 = vst [vmem:[%s548 + $0x18] sm:$0xff] %v1751
        %3259 = vst [vmem:[%s548 + $0x20] sm:$0xff] %v1757
        %3260 = vst [vmem:[%s548 + $0x28] sm:$0xff] %v1761
        %3261 = vst [vmem:[%s548 + $0x30] sm:$0xff] %v1767
        %3262 = vst [vmem:[%s548 + $0x38] sm:$0xff] %v1771
        %3263 = vst [vmem:[%s548 + $0x40] sm:$0xff] %v1777
        %3264 = vst [vmem:[%s548 + $0x48] sm:$0xff] %v1781
        %3265 = vst [vmem:[%s548 + $0x50] sm:$0xff] %v1787
        %3266 = vst [vmem:[%s548 + $0x58] sm:$0xff] %v1791
        %3267 = vst [vmem:[%s548 + $0x60] sm:$0xff] %v1797
        %3268 = vst [vmem:[%s548 + $0x68] sm:$0xff] %v1801
        %3269 = vst [vmem:[%s548 + $0x70] sm:$0xff] %v1807
        %3270 = vst [vmem:[%s548 + $0x78] sm:$0xff] %v1811
        %s3271 = sand.u32 %s266, 1
        %s3272 = scalar_lea.sflag [#allocation4], %s3271
        %s3273 = sand.u32 %s266, 1
        %s3274 = smul.addr %s3273, 128
        %s3275 = scalar_lea.vmem [#allocation13], %s3274
        %s3276 = sand.u32 %s38, 1
        %s3277 = scalar_lea.sflag [#allocation15], %s3276
        %s3278 = sand.u32 %s292, 1
        %s3279 = smul.addr %s3278, 128
        %s3280 = scalar_lea.vmem [#allocation14], %s3279
        %s3281 = sand.u32 %s38, 1
        %s3282 = scalar_lea.sflag [#allocation15], %s3281
        %s3283 = sand.u32 %s318, 1
        %s3284 = smul.addr %s3283, 128
        %s3285 = scalar_lea.vmem [#allocation16], %s3284
        // Predicated region
        $region85: #{tpu_custom_call.1} parent=59 // pred_check
          %p3286 = pneg %p276
        $region86: #{tpu_custom_call.1} parent=59 // pred_check_branch
          %3288 = sbr.rel (%p3286) target = $region88
        $region87: #{tpu_custom_call.1} parent=59 // pred_region
          %s3289 = smul.u32 16, %s38
          %s3291 = ssub.s32 2048, 2048
          %3292 = vsyncadd %s3272, %s3291
          %s3293 = smul.addr %s3289, 2
          %s3294 = smul.addr %s3293, 64
          %s3295 = scalar_lea.hbm %s10, %s3294
          %s3296 = sshll.u32 %s3275, 4
          %s3297 = int_to_ptr.vmem [resolvable:$true] %s3296
          %3302 = dma.vmem_to_hbm [thread:$0]  %s3297, 2048, %s3295, %s3272, 128, 128, 8
        $region88: #{tpu_custom_call.1} parent=59 // pred_fallthru
          _
        // Predicated region
        $region89: #{tpu_custom_call.1} parent=59 // pred_check
          %p3303 = pneg %p302
        $region90: #{tpu_custom_call.1} parent=59 // pred_check_branch
          %3305 = sbr.rel (%p3303) target = $region92
        $region91: #{tpu_custom_call.1} parent=59 // pred_region
          %s3306 = smul.u32 16, %s38
          %s3308 = ssub.s32 2048, 2048
          %3309 = vsyncadd %s3277, %s3308
          %s3310 = smul.addr %s3306, 128
          %s3311 = scalar_lea.hbm %s11, %s3310
          %s3312 = sshll.u32 %s3280, 4
          %s3313 = int_to_ptr.vmem [resolvable:$true] %s3312
          %3318 = dma.vmem_to_hbm [thread:$0]  %s3313, 2048, %s3311, %s3277, 128, 128, 8
        $region92: #{tpu_custom_call.1} parent=59 // pred_fallthru
          _
        // Predicated region
        $region93: #{tpu_custom_call.1} parent=59 // pred_check
          %p3319 = pneg %p328
        $region94: #{tpu_custom_call.1} parent=59 // pred_check_branch
          %3321 = sbr.rel (%p3319) target = $region96
        $region95: #{tpu_custom_call.1} parent=59 // pred_region
          %s3322 = smul.u32 16, %s38
          %s3324 = ssub.s32 2048, 2048
          %3325 = vsyncadd %s3282, %s3324
          %s3326 = smul.addr %s3322, 128
          %s3327 = scalar_lea.hbm %s12, %s3326
          %s3328 = sshll.u32 %s3285, 4
          %s3329 = int_to_ptr.vmem [resolvable:$true] %s3328
          %3334 = dma.vmem_to_hbm [thread:$0]  %s3329, 2048, %s3327, %s3282, 128, 128, 8
        $region96: #{tpu_custom_call.1} parent=59 // pred_fallthru
          _
      $region60: #{tpu_custom_call.1} parent=5 // pred_fallthru
        _
      %p3335 = scmp.le.s32.totalorder 2, %s33
      // Predicated region
      $region97: #{tpu_custom_call.1} parent=5 // pred_check
        %p3336 = pneg %p3335
      $region98: #{tpu_custom_call.1} parent=5 // pred_check_branch
        %3338 = sbr.rel (%p3336) target = $region100
      $region99: #{tpu_custom_call.1} parent=5 // pred_region
        %s3339 = ssub.s32 %s33, 2
        // Predicated region
        $region101: #{tpu_custom_call.1} parent=99 // pred_check
          %p3340 = pneg %p282
        $region102: #{tpu_custom_call.1} parent=99 // pred_check_branch
          %3342 = sbr.rel (%p3340) target = $region104
        $region103: #{tpu_custom_call.1} parent=99 // pred_region
          %s3343 = sand.u32 %s267, 1
          %s3344 = scalar_lea.sflag [#allocation4], %s3343
          %s3345 = sand.u32 %s267, 1
          %s3346 = smul.addr %s3345, 128
          %s3347 = scalar_lea.vmem [#allocation13], %s3346
          %3348 = dma.done %s3344, 2048
        $region104: #{tpu_custom_call.1} parent=99 // pred_fallthru
          _
        // Predicated region
        $region105: #{tpu_custom_call.1} parent=99 // pred_check
          %p3349 = pneg %p308
        $region106: #{tpu_custom_call.1} parent=99 // pred_check_branch
          %3351 = sbr.rel (%p3349) target = $region108
        $region107: #{tpu_custom_call.1} parent=99 // pred_region
          %s3352 = sand.u32 %s39, 1
          %s3353 = scalar_lea.sflag [#allocation15], %s3352
          %s3354 = sand.u32 %s293, 1
          %s3355 = smul.addr %s3354, 128
          %s3356 = scalar_lea.vmem [#allocation14], %s3355
          %3357 = dma.done %s3353, 2048
        $region108: #{tpu_custom_call.1} parent=99 // pred_fallthru
          _
        // Predicated region
        $region109: #{tpu_custom_call.1} parent=99 // pred_check
          %p3358 = pneg %p334
        $region110: #{tpu_custom_call.1} parent=99 // pred_check_branch
          %3360 = sbr.rel (%p3358) target = $region112
        $region111: #{tpu_custom_call.1} parent=99 // pred_region
          %s3361 = sand.u32 %s39, 1
          %s3362 = scalar_lea.sflag [#allocation15], %s3361
          %s3363 = sand.u32 %s319, 1
          %s3364 = smul.addr %s3363, 128
          %s3365 = scalar_lea.vmem [#allocation16], %s3364
          %3366 = dma.done %s3362, 2048
        $region112: #{tpu_custom_call.1} parent=99 // pred_fallthru
          _
      $region100: #{tpu_custom_call.1} parent=5 // pred_fallthru
        _
    $region6: #{tpu_custom_call.1} parent=1 // loop_footer
      %s37 = sadd.s32 1, %s33
    $region7: #{tpu_custom_call.1} parent=1 // loop_footer_branch
      %32 = sbr.rel target = $region3
    $region8: #{tpu_custom_call.1} parent=1 // loop_exit
      _
    %3367 = vsyncpa [#allocation3], 1
    %s3368 = scalar_lea.sflag [#allocation3], 1
    %3369 = vsyncpa %s3368, 1
    %3370 = vsyncpa [#allocation6], 1
    %s3371 = scalar_lea.sflag [#allocation6], 1
    %3372 = vsyncpa %s3371, 1
    %3373 = vsyncpa [#allocation9], 1
    %3374 = vsyncpa [#allocation12], 1
    %3375 = vsyncpa [#allocation4], 1
    %s3376 = scalar_lea.sflag [#allocation4], 1
    %3377 = vsyncpa %s3376, 1
    %3378 = vsyncpa [#allocation15], 1
    %s3379 = scalar_lea.sflag [#allocation15], 1
    %3380 = vsyncpa %s3379, 1

</llo_original>
